<compile_context>
chip_gen: v6e
topology: v6e:2x2x1
jax: 0.10.0
libtpu: 0.0.40
codegen_flags: <defaults>
</compile_context>

<pallas_src>
import functools

import jax
import jax.numpy as jnp
from jax.experimental import pallas as pl
from jax.experimental.pallas import tpu as pltpu


# ----------------------------- Pallas kernels ------------------------------

def _conv_bn_stats_kernel(x_ref, w_ref, b_ref, in_scale_ref, in_shift_ref,
                          y_ref, sum_ref, sq_ref, pad_ref,
                          *, H, W, Cin, Cout, fuse_input_bnrelu):
    """One image per grid step: (optional BN+ReLU prologue) -> 3x3 conv -> stats.

    x_ref:        (1, H, W*Cin)       lane-dense input image (pre-BN if fused)
    w_ref:        (9, W*Cin, W*Cout)  block-diagonal weights, one per 3x3 tap
    b_ref:        (1, W*Cout)         conv bias tiled over W
    in_scale_ref: (1, W*Cin)          previous-stage BN scale, tiled (unused if not fused)
    in_shift_ref: (1, W*Cin)          previous-stage BN shift, tiled
    y_ref:        (1, H, W*Cout)      pre-BN conv output
    sum_ref:      (1, 1, W*Cout)      per-image partial sum of y
    sq_ref:       (1, 1, W*Cout)      per-image partial sum of y*y
    pad_ref:      VMEM scratch (H+2, (W+2)*Cin), zero padding for the conv
    """
    x = x_ref[0]                                                  # (H, W*Cin)
    if fuse_input_bnrelu:
        # Fused BN+ReLU of the previous stage (precomputed per-channel affine).
        x = jnp.maximum(x * in_scale_ref[...] + in_shift_ref[...], 0.0)

    # Zero-padded activations for conv padding=1, built entirely in VMEM.
    pad_ref[...] = jnp.zeros_like(pad_ref)
    pad_ref[pl.ds(1, H), pl.ds(Cin, W * Cin)] = x

    # 3x3 conv as 9 accumulated MXU matmuls over shifted views of the padded tile.
    acc = jnp.zeros((H, W * Cout), jnp.float32)
    for k in range(9):
        dy, dx = k // 3, k % 3
        patch = pad_ref[pl.ds(dy, H), pl.ds(dx * Cin, W * Cin)]   # (H, W*Cin)
        acc = acc + jnp.dot(patch, w_ref[k],
                            preferred_element_type=jnp.float32)  # (H, W*Cout)

    y = acc + b_ref[...]                                          # broadcast bias
    y_ref[0] = y.astype(y_ref.dtype)

    # BatchNorm statistics fused here (per-image partials; reduced in JAX).
    # NOTE: var = E[x^2]-E[x]^2 in f32; fine for these magnitudes (see wrapper note).
    sum_ref[0] = jnp.sum(y, axis=0, keepdims=True)
    sq_ref[0] = jnp.sum(y * y, axis=0, keepdims=True)


def _bn_relu_kernel(x_ref, scale_ref, shift_ref, o_ref):
    # Pure lane-wise affine + ReLU; scale/shift precomputed in the wrapper.
    o_ref[0] = jnp.maximum(x_ref[0] * scale_ref[...] + shift_ref[...], 0.0
                           ).astype(o_ref.dtype)


# ----------------------------- pallas_call wrappers -------------------------

def conv3x3_bn_stats(x, w_blocks, b_tiled, in_scale, in_shift,
                     *, H, W, Cin, Cout, fuse_input_bnrelu):
    N = x.shape[0]
    kernel = functools.partial(_conv_bn_stats_kernel, H=H, W=W, Cin=Cin, Cout=Cout,
                               fuse_input_bnrelu=fuse_input_bnrelu)
    return pl.pallas_call(
        kernel,
        out_shape=(jax.ShapeDtypeStruct((N, H, W * Cout), jnp.float32),
                   jax.ShapeDtypeStruct((N, 1, W * Cout), jnp.float32),
                   jax.ShapeDtypeStruct((N, 1, W * Cout), jnp.float32)),
        grid_spec=pltpu.PrefetchScalarGridSpec(
            num_scalar_prefetch=0,
            grid=(N,),
            in_specs=[
                pl.BlockSpec((1, H, W * Cin), lambda n: (n, 0, 0)),
                pl.BlockSpec((9, W * Cin, W * Cout), lambda n: (0, 0, 0)),
                pl.BlockSpec((1, W * Cout), lambda n: (0, 0)),
                pl.BlockSpec((1, W * Cin), lambda n: (0, 0)),
                pl.BlockSpec((1, W * Cin), lambda n: (0, 0)),
            ],
            out_specs=(
                pl.BlockSpec((1, H, W * Cout), lambda n: (n, 0, 0)),
                pl.BlockSpec((1, 1, W * Cout), lambda n: (n, 0, 0)),
                pl.BlockSpec((1, 1, W * Cout), lambda n: (n, 0, 0)),
            ),
            scratch_shapes=[pltpu.VMEM((H + 2, (W + 2) * Cin), jnp.float32)],
        ),
        compiler_params=pltpu.CompilerParams(dimension_semantics=("parallel",)),
    )(x, w_blocks, b_tiled, in_scale, in_shift)


def bn_relu_apply(y, scale_tiled, shift_tiled):
    N, H, WC = y.shape
    return pl.pallas_call(
        _bn_relu_kernel,
        out_shape=jax.ShapeDtypeStruct((N, H, WC), jnp.float32),
        grid_spec=pltpu.PrefetchScalarGridSpec(
            num_scalar_prefetch=0,
            grid=(N,),
            in_specs=[pl.BlockSpec((1, H, WC), lambda n: (n, 0, 0)),
                      pl.BlockSpec((1, WC), lambda n: (0, 0)),
                      pl.BlockSpec((1, WC), lambda n: (0, 0))],
            out_specs=pl.BlockSpec((1, H, WC), lambda n: (n, 0, 0)),
        ),
        compiler_params=pltpu.CompilerParams(dimension_semantics=("parallel",)),
    )(y, scale_tiled, shift_tiled)


# ----------------------------- glue (plain JAX) ------------------------------

def weight_to_blockdiag(w_oihw, W):
    """[Cout, Cin, 3, 3] -> (9, W*Cin, W*Cout) block-diagonal tap matrices."""
    Cout, Cin, _, _ = w_oihw.shape
    w_k = jnp.transpose(w_oihw, (2, 3, 1, 0)).reshape(9, Cin, Cout)  # k=dy*3+dx
    eye = jnp.eye(W, dtype=w_oihw.dtype)
    blocks = jnp.einsum('wv,kio->kwivo', eye, w_k)
    return blocks.reshape(9, W * Cin, W * Cout)


def bn_affine_from_partials(sum_p, sq_p, gamma, beta, count, W, C, eps):
    """Reduce per-image partial sums and fold into a per-channel affine."""
    s = sum_p.sum(axis=0).reshape(W, C).sum(axis=0)       # (C,)
    sq = sq_p.sum(axis=0).reshape(W, C).sum(axis=0)       # (C,)
    mean = s / count
    var = sq / count - mean * mean                        # biased (PyTorch BN fwd)
    scale = gamma * jax.lax.rsqrt(var + eps)
    shift = beta - mean * scale
    return scale, shift


def _tile_lane(v, W):
    return jnp.tile(v, W).reshape(1, W * v.shape[0])


def decoder_block(x_nchw, params, eps=1e-5):
    """Pallas implementation of DecoderBlock.forward (training-mode BN)."""
    N, Cin, H, W = x_nchw.shape
    Cout1 = params["w1"].shape[0]
    Cout2 = params["w2"].shape[0]
    M = N * H * W

    # NCHW -> lane-dense (N, H, W*Cin)
    x = jnp.transpose(x_nchw, (0, 2, 3, 1)).reshape(N, H, W * Cin)

    # ---- stage 1: conv1 + fused BN1 statistics ----
    w1b = weight_to_blockdiag(params["w1"], W)
    b1t = _tile_lane(params["b1"], W)
    dummy_scale = jnp.ones((1, W * Cin), jnp.float32)     # prologue disabled
    dummy_shift = jnp.zeros((1, W * Cin), jnp.float32)
    y1, s1, q1 = conv3x3_bn_stats(x, w1b, b1t, dummy_scale, dummy_shift,
                                  H=H, W=W, Cin=Cin, Cout=Cout1,
                                  fuse_input_bnrelu=False)
    scale1, shift1 = bn_affine_from_partials(s1, q1, params["g1"], params["beta1"],
                                             M, W, Cout1, eps)

    # ---- stage 2: BN1+ReLU fused into conv2 prologue + fused BN2 statistics ----
    w2b = weight_to_blockdiag(params["w2"], W)
    b2t = _tile_lane(params["b2"], W)
    y2, s2, q2 = conv3x3_bn_stats(y1, w2b, b2t,
                                  _tile_lane(scale1, W), _tile_lane(shift1, W),
                                  H=H, W=W, Cin=Cout1, Cout=Cout2,
                                  fuse_input_bnrelu=True)
    scale2, shift2 = bn_affine_from_partials(s2, q2, params["g2"], params["beta2"],
                                             M, W, Cout2, eps)

    # ---- final BN2 + ReLU (stats dependency prevents fusing further) ----
    out = bn_relu_apply(y2, _tile_lane(scale2, W), _tile_lane(shift2, W))

    out = out.reshape(N, H, W, Cout2)
    return jnp.transpose(out, (0, 3, 1, 2))               # NHWC -> NCHW


# ----------------------------- pure-JAX reference ----------------------------

def decoder_block_ref(x_nchw, params, eps=1e-5):
    def conv(x, w, b):
        y = jax.lax.conv_general_dilated(
            x, w, window_strides=(1, 1), padding=((1, 1), (1, 1)),
            dimension_numbers=("NCHW", "OIHW", "NCHW"))
        return y + b[None, :, None, None]

    def bn_relu_ref(x, g, bta):
        mean = x.mean(axis=(0, 2, 3), keepdims=True)
        var = x.var(axis=(0, 2, 3), keepdims=True)  # biased
        y = (x - mean) / jnp.sqrt(var + eps)
        y = y * g[None, :, None, None] + bta[None, :, None, None]
        return jnp.maximum(y, 0.0)

    y = bn_relu_ref(conv(x_nchw, params["w1"], params["b1"]),
                    params["g1"], params["beta1"])
    y = bn_relu_ref(conv(y, params["w2"], params["b2"]),
                    params["g2"], params["beta2"])
    return y


# ----------------------------- main ------------------------------------------

if __name__ == "__main__":
    N, Cin, Cout, H, W = 2, 4, 8, 16, 16

    key = jax.random.PRNGKey(0)
    k_x, k_w1, k_b1, k_w2, k_b2 = jax.random.split(key, 5)

    x = jax.random.normal(k_x, (N, Cin, H, W), jnp.float32)

    params = {
        "w1": jax.random.normal(k_w1, (Cout, Cin, 3, 3), jnp.float32) * 0.1,
        "b1": jax.random.normal(k_b1, (Cout,), jnp.float32) * 0.1,
        "g1": jnp.ones((Cout,), jnp.float32),      # BatchNorm default weight
        "beta1": jnp.zeros((Cout,), jnp.float32),  # BatchNorm default bias
        "w2": jax.random.normal(k_w2, (Cout, Cout, 3, 3), jnp.float32) * 0.1,
        "b2": jax.random.normal(k_b2, (Cout,), jnp.float32) * 0.1,
        "g2": jnp.ones((Cout,), jnp.float32),
        "beta2": jnp.zeros((Cout,), jnp.float32),
    }

    out = jax.jit(decoder_block)(x, params)
    out = jax.block_until_ready(out)

    ref = decoder_block_ref(x, params)
    assert out.shape == (N, Cout, H, W)
    assert jnp.max(jnp.abs(out - ref)) < 1e-4, "Pallas output mismatch vs reference"

    print("KERNEL_OK")
</pallas_src>

<mosaic_0001>
module attributes {stable_mosaic.version = 11 : i64} {
  func.func @_conv_bn_stats_kernel(%arg0: i32, %arg1: memref<1x16x64xf32, #tpu.memory_space<vmem>>, %arg2: memref<9x64x128xf32, #tpu.memory_space<vmem>>, %arg3: memref<1x128xf32, #tpu.memory_space<vmem>>, %arg4: memref<1x64xf32, #tpu.memory_space<vmem>>, %arg5: memref<1x64xf32, #tpu.memory_space<vmem>>, %arg6: memref<1x16x128xf32, #tpu.memory_space<vmem>>, %arg7: memref<1x1x128xf32, #tpu.memory_space<vmem>>, %arg8: memref<1x1x128xf32, #tpu.memory_space<vmem>>, %arg9: memref<18x72xf32, #tpu.memory_space<vmem>>) attributes {dimension_semantics = [#tpu.dimension_semantics<parallel>], iteration_bounds = array<i64: 2>, scalar_prefetch = 0 : i64, scratch_operands = 1 : i64, tpu.core_type = #tpu.core_type<tc>, window_params = [{transform_indices = @transform_0, window_bounds = array<i64: 1, 16, 64>}, {pipeline_mode = #tpu.pipeline_mode<synchronous>, transform_indices = @transform_1, window_bounds = array<i64: 9, 64, 128>}, {pipeline_mode = #tpu.pipeline_mode<synchronous>, transform_indices = @transform_2, window_bounds = array<i64: 1, 128>}, {pipeline_mode = #tpu.pipeline_mode<synchronous>, transform_indices = @transform_3, window_bounds = array<i64: 1, 64>}, {pipeline_mode = #tpu.pipeline_mode<synchronous>, transform_indices = @transform_4, window_bounds = array<i64: 1, 64>}, {transform_indices = @transform_5, window_bounds = array<i64: 1, 16, 128>}, {transform_indices = @transform_6, window_bounds = array<i64: 1, 1, 128>}, {transform_indices = @transform_7, window_bounds = array<i64: 1, 1, 128>}]} {
    %c0 = arith.constant 0 : index
    %c0_0 = arith.constant 0 : index
    %c0_1 = arith.constant 0 : index
    %0 = vector.load %arg1[%c0, %c0_0, %c0_1] : memref<1x16x64xf32, #tpu.memory_space<vmem>>, vector<1x16x64xf32>
    %1 = vector.shape_cast %0 : vector<1x16x64xf32> to vector<16x64xf32>
    %cst = arith.constant 0.000000e+00 : f32
    %2 = vector.broadcast %cst : f32 to vector<18x72xf32>
    %c0_2 = arith.constant 0 : index
    %c0_3 = arith.constant 0 : index
    %3 = vector.load %arg9[%c0_2, %c0_3] : memref<18x72xf32, #tpu.memory_space<vmem>>, vector<18x72xf32>
    tpu.vector_store %arg9[%c0_2, %c0_3], %2 {strides = array<i32>} : memref<18x72xf32, #tpu.memory_space<vmem>>, vector<18x72xf32>,
    %c1 = arith.constant 1 : index
    %c4 = arith.constant 4 : index
    %4 = vector.load %arg9[%c1, %c4] : memref<18x72xf32, #tpu.memory_space<vmem>>, vector<16x64xf32>
    tpu.vector_store %arg9[%c1, %c4], %1 {strides = array<i32>} : memref<18x72xf32, #tpu.memory_space<vmem>>, vector<16x64xf32>,
    %cst_4 = arith.constant 0.000000e+00 : f32
    %5 = vector.broadcast %cst_4 : f32 to vector<16x128xf32>
    %c0_5 = arith.constant 0 : index
    %c0_6 = arith.constant 0 : index
    %6 = vector.load %arg9[%c0_5, %c0_6] : memref<18x72xf32, #tpu.memory_space<vmem>>, vector<16x64xf32>
    %c0_7 = arith.constant 0 : index
    %c0_8 = arith.constant 0 : index
    %c0_9 = arith.constant 0 : index
    %7 = vector.load %arg2[%c0_7, %c0_8, %c0_9] : memref<9x64x128xf32, #tpu.memory_space<vmem>>, vector<1x64x128xf32>
    %8 = vector.shape_cast %7 : vector<1x64x128xf32> to vector<64x128xf32>
    %cst_10 = arith.constant dense<0.000000e+00> : vector<16x128xf32>
    %9 = tpu.matmul %6, %8, %cst_10 {dimension_numbers = #tpu.dot_dimension_numbers<[1], [0], [0], [1], [0, 0, 1, 1], [], []>} : vector<16x64xf32>, vector<64x128xf32>, vector<16x128xf32> -> vector<16x128xf32>
    %10 = arith.addf %5, %9 : vector<16x128xf32>
    %c0_11 = arith.constant 0 : index
    %c4_12 = arith.constant 4 : index
    %11 = vector.load %arg9[%c0_11, %c4_12] : memref<18x72xf32, #tpu.memory_space<vmem>>, vector<16x64xf32>
    %c1_13 = arith.constant 1 : index
    %c0_14 = arith.constant 0 : index
    %c0_15 = arith.constant 0 : index
    %12 = vector.load %arg2[%c1_13, %c0_14, %c0_15] : memref<9x64x128xf32, #tpu.memory_space<vmem>>, vector<1x64x128xf32>
    %13 = vector.shape_cast %12 : vector<1x64x128xf32> to vector<64x128xf32>
    %cst_16 = arith.constant dense<0.000000e+00> : vector<16x128xf32>
    %14 = tpu.matmul %11, %13, %cst_16 {dimension_numbers = #tpu.dot_dimension_numbers<[1], [0], [0], [1], [0, 0, 1, 1], [], []>} : vector<16x64xf32>, vector<64x128xf32>, vector<16x128xf32> -> vector<16x128xf32>
    %15 = arith.addf %10, %14 : vector<16x128xf32>
    %c0_17 = arith.constant 0 : index
    %c8 = arith.constant 8 : index
    %16 = vector.load %arg9[%c0_17, %c8] : memref<18x72xf32, #tpu.memory_space<vmem>>, vector<16x64xf32>
    %c2 = arith.constant 2 : index
    %c0_18 = arith.constant 0 : index
    %c0_19 = arith.constant 0 : index
    %17 = vector.load %arg2[%c2, %c0_18, %c0_19] : memref<9x64x128xf32, #tpu.memory_space<vmem>>, vector<1x64x128xf32>
    %18 = vector.shape_cast %17 : vector<1x64x128xf32> to vector<64x128xf32>
    %cst_20 = arith.constant dense<0.000000e+00> : vector<16x128xf32>
    %19 = tpu.matmul %16, %18, %cst_20 {dimension_numbers = #tpu.dot_dimension_numbers<[1], [0], [0], [1], [0, 0, 1, 1], [], []>} : vector<16x64xf32>, vector<64x128xf32>, vector<16x128xf32> -> vector<16x128xf32>
    %20 = arith.addf %15, %19 : vector<16x128xf32>
    %c1_21 = arith.constant 1 : index
    %c0_22 = arith.constant 0 : index
    %21 = vector.load %arg9[%c1_21, %c0_22] : memref<18x72xf32, #tpu.memory_space<vmem>>, vector<16x64xf32>
    %c3 = arith.constant 3 : index
    %c0_23 = arith.constant 0 : index
    %c0_24 = arith.constant 0 : index
    %22 = vector.load %arg2[%c3, %c0_23, %c0_24] : memref<9x64x128xf32, #tpu.memory_space<vmem>>, vector<1x64x128xf32>
    %23 = vector.shape_cast %22 : vector<1x64x128xf32> to vector<64x128xf32>
    %cst_25 = arith.constant dense<0.000000e+00> : vector<16x128xf32>
    %24 = tpu.matmul %21, %23, %cst_25 {dimension_numbers = #tpu.dot_dimension_numbers<[1], [0], [0], [1], [0, 0, 1, 1], [], []>} : vector<16x64xf32>, vector<64x128xf32>, vector<16x128xf32> -> vector<16x128xf32>
    %25 = arith.addf %20, %24 : vector<16x128xf32>
    %c1_26 = arith.constant 1 : index
    %c4_27 = arith.constant 4 : index
    %26 = vector.load %arg9[%c1_26, %c4_27] : memref<18x72xf32, #tpu.memory_space<vmem>>, vector<16x64xf32>
    %c4_28 = arith.constant 4 : index
    %c0_29 = arith.constant 0 : index
    %c0_30 = arith.constant 0 : index
    %27 = vector.load %arg2[%c4_28, %c0_29, %c0_30] : memref<9x64x128xf32, #tpu.memory_space<vmem>>, vector<1x64x128xf32>
    %28 = vector.shape_cast %27 : vector<1x64x128xf32> to vector<64x128xf32>
    %cst_31 = arith.constant dense<0.000000e+00> : vector<16x128xf32>
    %29 = tpu.matmul %26, %28, %cst_31 {dimension_numbers = #tpu.dot_dimension_numbers<[1], [0], [0], [1], [0, 0, 1, 1], [], []>} : vector<16x64xf32>, vector<64x128xf32>, vector<16x128xf32> -> vector<16x128xf32>
    %30 = arith.addf %25, %29 : vector<16x128xf32>
    %c1_32 = arith.constant 1 : index
    %c8_33 = arith.constant 8 : index
    %31 = vector.load %arg9[%c1_32, %c8_33] : memref<18x72xf32, #tpu.memory_space<vmem>>, vector<16x64xf32>
    %c5 = arith.constant 5 : index
    %c0_34 = arith.constant 0 : index
    %c0_35 = arith.constant 0 : index
    %32 = vector.load %arg2[%c5, %c0_34, %c0_35] : memref<9x64x128xf32, #tpu.memory_space<vmem>>, vector<1x64x128xf32>
    %33 = vector.shape_cast %32 : vector<1x64x128xf32> to vector<64x128xf32>
    %cst_36 = arith.constant dense<0.000000e+00> : vector<16x128xf32>
    %34 = tpu.matmul %31, %33, %cst_36 {dimension_numbers = #tpu.dot_dimension_numbers<[1], [0], [0], [1], [0, 0, 1, 1], [], []>} : vector<16x64xf32>, vector<64x128xf32>, vector<16x128xf32> -> vector<16x128xf32>
    %35 = arith.addf %30, %34 : vector<16x128xf32>
    %c2_37 = arith.constant 2 : index
    %c0_38 = arith.constant 0 : index
    %36 = vector.load %arg9[%c2_37, %c0_38] : memref<18x72xf32, #tpu.memory_space<vmem>>, vector<16x64xf32>
    %c6 = arith.constant 6 : index
    %c0_39 = arith.constant 0 : index
    %c0_40 = arith.constant 0 : index
    %37 = vector.load %arg2[%c6, %c0_39, %c0_40] : memref<9x64x128xf32, #tpu.memory_space<vmem>>, vector<1x64x128xf32>
    %38 = vector.shape_cast %37 : vector<1x64x128xf32> to vector<64x128xf32>
    %cst_41 = arith.constant dense<0.000000e+00> : vector<16x128xf32>
    %39 = tpu.matmul %36, %38, %cst_41 {dimension_numbers = #tpu.dot_dimension_numbers<[1], [0], [0], [1], [0, 0, 1, 1], [], []>} : vector<16x64xf32>, vector<64x128xf32>, vector<16x128xf32> -> vector<16x128xf32>
    %40 = arith.addf %35, %39 : vector<16x128xf32>
    %c2_42 = arith.constant 2 : index
    %c4_43 = arith.constant 4 : index
    %41 = vector.load %arg9[%c2_42, %c4_43] : memref<18x72xf32, #tpu.memory_space<vmem>>, vector<16x64xf32>
    %c7 = arith.constant 7 : index
    %c0_44 = arith.constant 0 : index
    %c0_45 = arith.constant 0 : index
    %42 = vector.load %arg2[%c7, %c0_44, %c0_45] : memref<9x64x128xf32, #tpu.memory_space<vmem>>, vector<1x64x128xf32>
    %43 = vector.shape_cast %42 : vector<1x64x128xf32> to vector<64x128xf32>
    %cst_46 = arith.constant dense<0.000000e+00> : vector<16x128xf32>
    %44 = tpu.matmul %41, %43, %cst_46 {dimension_numbers = #tpu.dot_dimension_numbers<[1], [0], [0], [1], [0, 0, 1, 1], [], []>} : vector<16x64xf32>, vector<64x128xf32>, vector<16x128xf32> -> vector<16x128xf32>
    %45 = arith.addf %40, %44 : vector<16x128xf32>
    %c2_47 = arith.constant 2 : index
    %c8_48 = arith.constant 8 : index
    %46 = vector.load %arg9[%c2_47, %c8_48] : memref<18x72xf32, #tpu.memory_space<vmem>>, vector<16x64xf32>
    %c8_49 = arith.constant 8 : index
    %c0_50 = arith.constant 0 : index
    %c0_51 = arith.constant 0 : index
    %47 = vector.load %arg2[%c8_49, %c0_50, %c0_51] : memref<9x64x128xf32, #tpu.memory_space<vmem>>, vector<1x64x128xf32>
    %48 = vector.shape_cast %47 : vector<1x64x128xf32> to vector<64x128xf32>
    %cst_52 = arith.constant dense<0.000000e+00> : vector<16x128xf32>
    %49 = tpu.matmul %46, %48, %cst_52 {dimension_numbers = #tpu.dot_dimension_numbers<[1], [0], [0], [1], [0, 0, 1, 1], [], []>} : vector<16x64xf32>, vector<64x128xf32>, vector<16x128xf32> -> vector<16x128xf32>
    %50 = arith.addf %45, %49 : vector<16x128xf32>
    %c0_53 = arith.constant 0 : index
    %c0_54 = arith.constant 0 : index
    %51 = vector.load %arg3[%c0_53, %c0_54] : memref<1x128xf32, #tpu.memory_space<vmem>>, vector<1x128xf32>
    %52 = vector.broadcast %51 : vector<1x128xf32> to vector<16x128xf32>
    %53 = arith.addf %50, %52 : vector<16x128xf32>
    %c0_55 = arith.constant 0 : index
    %c0_56 = arith.constant 0 : index
    %c0_57 = arith.constant 0 : index
    %54 = vector.load %arg6[%c0_55, %c0_56, %c0_57] : memref<1x16x128xf32, #tpu.memory_space<vmem>>, vector<1x16x128xf32>
    %55 = vector.shape_cast %54 : vector<1x16x128xf32> to vector<16x128xf32>
    %56 = vector.shape_cast %53 : vector<16x128xf32> to vector<1x16x128xf32>
    tpu.vector_store %arg6[%c0_55, %c0_56, %c0_57], %56 {strides = array<i32>} : memref<1x16x128xf32, #tpu.memory_space<vmem>>, vector<1x16x128xf32>,
    %cst_58 = arith.constant dense<0.000000e+00> : vector<128xf32>
    %57 = vector.multi_reduction <add>, %53, %cst_58 [0] : vector<16x128xf32> to vector<128xf32>
    %58 = vector.shape_cast %57 : vector<128xf32> to vector<1x128xf32>
    %c0_59 = arith.constant 0 : index
    %c0_60 = arith.constant 0 : index
    %c0_61 = arith.constant 0 : index
    %59 = vector.load %arg7[%c0_59, %c0_60, %c0_61] : memref<1x1x128xf32, #tpu.memory_space<vmem>>, vector<1x1x128xf32>
    %60 = vector.shape_cast %59 : vector<1x1x128xf32> to vector<1x128xf32>
    %61 = vector.shape_cast %58 : vector<1x128xf32> to vector<1x1x128xf32>
    tpu.vector_store %arg7[%c0_59, %c0_60, %c0_61], %61 {strides = array<i32>} : memref<1x1x128xf32, #tpu.memory_space<vmem>>, vector<1x1x128xf32>,
    %62 = arith.mulf %53, %53 : vector<16x128xf32>
    %cst_62 = arith.constant dense<0.000000e+00> : vector<128xf32>
    %63 = vector.multi_reduction <add>, %62, %cst_62 [0] : vector<16x128xf32> to vector<128xf32>
    %64 = vector.shape_cast %63 : vector<128xf32> to vector<1x128xf32>
    %c0_63 = arith.constant 0 : index
    %c0_64 = arith.constant 0 : index
    %c0_65 = arith.constant 0 : index
    %65 = vector.load %arg8[%c0_63, %c0_64, %c0_65] : memref<1x1x128xf32, #tpu.memory_space<vmem>>, vector<1x1x128xf32>
    %66 = vector.shape_cast %65 : vector<1x1x128xf32> to vector<1x128xf32>
    %67 = vector.shape_cast %64 : vector<1x128xf32> to vector<1x1x128xf32>
    tpu.vector_store %arg8[%c0_63, %c0_64, %c0_65], %67 {strides = array<i32>} : memref<1x1x128xf32, #tpu.memory_space<vmem>>, vector<1x1x128xf32>,
    return
  }
  func.func @transform_0(%arg0: i32) -> (i32, i32, i32) {
    %c0_i32 = arith.constant 0 : i32
    %c0_i32_0 = arith.constant 0 : i32
    %c0_i32_1 = arith.constant 0 : i32
    return %arg0, %c0_i32, %c0_i32_0 : i32, i32, i32
  }
  func.func @transform_1(%arg0: i32) -> (i32, i32, i32) {
    %c0_i32 = arith.constant 0 : i32
    %c0_i32_0 = arith.constant 0 : i32
    %c0_i32_1 = arith.constant 0 : i32
    %c0_i32_2 = arith.constant 0 : i32
    return %c0_i32, %c0_i32_0, %c0_i32_1 : i32, i32, i32
  }
  func.func @transform_2(%arg0: i32) -> (i32, i32) {
    %c0_i32 = arith.constant 0 : i32
    %c0_i32_0 = arith.constant 0 : i32
    %c0_i32_1 = arith.constant 0 : i32
    return %c0_i32, %c0_i32_0 : i32, i32
  }
  func.func @transform_3(%arg0: i32) -> (i32, i32) {
    %c0_i32 = arith.constant 0 : i32
    %c0_i32_0 = arith.constant 0 : i32
    %c0_i32_1 = arith.constant 0 : i32
    return %c0_i32, %c0_i32_0 : i32, i32
  }
  func.func @transform_4(%arg0: i32) -> (i32, i32) {
    %c0_i32 = arith.constant 0 : i32
    %c0_i32_0 = arith.constant 0 : i32
    %c0_i32_1 = arith.constant 0 : i32
    return %c0_i32, %c0_i32_0 : i32, i32
  }
  func.func @transform_5(%arg0: i32) -> (i32, i32, i32) {
    %c0_i32 = arith.constant 0 : i32
    %c0_i32_0 = arith.constant 0 : i32
    %c0_i32_1 = arith.constant 0 : i32
    return %arg0, %c0_i32, %c0_i32_0 : i32, i32, i32
  }
  func.func @transform_6(%arg0: i32) -> (i32, i32, i32) {
    %c0_i32 = arith.constant 0 : i32
    %c0_i32_0 = arith.constant 0 : i32
    %c0_i32_1 = arith.constant 0 : i32
    return %arg0, %c0_i32, %c0_i32_0 : i32, i32, i32
  }
  func.func @transform_7(%arg0: i32) -> (i32, i32, i32) {
    %c0_i32 = arith.constant 0 : i32
    %c0_i32_0 = arith.constant 0 : i32
    %c0_i32_1 = arith.constant 0 : i32
    return %arg0, %c0_i32, %c0_i32_0 : i32, i32, i32
  }
}

module attributes {stable_mosaic.version = 11 : i64} {
  func.func @_conv_bn_stats_kernel(%arg0: i32, %arg1: memref<1x16x128xf32, #tpu.memory_space<vmem>>, %arg2: memref<9x128x128xf32, #tpu.memory_space<vmem>>, %arg3: memref<1x128xf32, #tpu.memory_space<vmem>>, %arg4: memref<1x128xf32, #tpu.memory_space<vmem>>, %arg5: memref<1x128xf32, #tpu.memory_space<vmem>>, %arg6: memref<1x16x128xf32, #tpu.memory_space<vmem>>, %arg7: memref<1x1x128xf32, #tpu.memory_space<vmem>>, %arg8: memref<1x1x128xf32, #tpu.memory_space<vmem>>, %arg9: memref<18x144xf32, #tpu.memory_space<vmem>>) attributes {dimension_semantics = [#tpu.dimension_semantics<parallel>], iteration_bounds = array<i64: 2>, scalar_prefetch = 0 : i64, scratch_operands = 1 : i64, tpu.core_type = #tpu.core_type<tc>, window_params = [{transform_indices = @transform_0, window_bounds = array<i64: 1, 16, 128>}, {pipeline_mode = #tpu.pipeline_mode<synchronous>, transform_indices = @transform_1, window_bounds = array<i64: 9, 128, 128>}, {pipeline_mode = #tpu.pipeline_mode<synchronous>, transform_indices = @transform_2, window_bounds = array<i64: 1, 128>}, {pipeline_mode = #tpu.pipeline_mode<synchronous>, transform_indices = @transform_3, window_bounds = array<i64: 1, 128>}, {pipeline_mode = #tpu.pipeline_mode<synchronous>, transform_indices = @transform_4, window_bounds = array<i64: 1, 128>}, {transform_indices = @transform_5, window_bounds = array<i64: 1, 16, 128>}, {transform_indices = @transform_6, window_bounds = array<i64: 1, 1, 128>}, {transform_indices = @transform_7, window_bounds = array<i64: 1, 1, 128>}]} {
    %c0 = arith.constant 0 : index
    %c0_0 = arith.constant 0 : index
    %c0_1 = arith.constant 0 : index
    %0 = vector.load %arg1[%c0, %c0_0, %c0_1] : memref<1x16x128xf32, #tpu.memory_space<vmem>>, vector<1x16x128xf32>
    %1 = vector.shape_cast %0 : vector<1x16x128xf32> to vector<16x128xf32>
    %c0_2 = arith.constant 0 : index
    %c0_3 = arith.constant 0 : index
    %2 = vector.load %arg4[%c0_2, %c0_3] : memref<1x128xf32, #tpu.memory_space<vmem>>, vector<1x128xf32>
    %3 = vector.broadcast %2 : vector<1x128xf32> to vector<16x128xf32>
    %4 = arith.mulf %1, %3 : vector<16x128xf32>
    %c0_4 = arith.constant 0 : index
    %c0_5 = arith.constant 0 : index
    %5 = vector.load %arg5[%c0_4, %c0_5] : memref<1x128xf32, #tpu.memory_space<vmem>>, vector<1x128xf32>
    %6 = vector.broadcast %5 : vector<1x128xf32> to vector<16x128xf32>
    %7 = arith.addf %4, %6 : vector<16x128xf32>
    %cst = arith.constant 0.000000e+00 : f32
    %8 = vector.broadcast %cst : f32 to vector<16x128xf32>
    %9 = arith.maximumf %7, %8 : vector<16x128xf32>
    %cst_6 = arith.constant 0.000000e+00 : f32
    %10 = vector.broadcast %cst_6 : f32 to vector<18x144xf32>
    %c0_7 = arith.constant 0 : index
    %c0_8 = arith.constant 0 : index
    %11 = vector.load %arg9[%c0_7, %c0_8] : memref<18x144xf32, #tpu.memory_space<vmem>>, vector<18x144xf32>
    tpu.vector_store %arg9[%c0_7, %c0_8], %10 {strides = array<i32>} : memref<18x144xf32, #tpu.memory_space<vmem>>, vector<18x144xf32>,
    %c1 = arith.constant 1 : index
    %c8 = arith.constant 8 : index
    %12 = vector.load %arg9[%c1, %c8] : memref<18x144xf32, #tpu.memory_space<vmem>>, vector<16x128xf32>
    tpu.vector_store %arg9[%c1, %c8], %9 {strides = array<i32>} : memref<18x144xf32, #tpu.memory_space<vmem>>, vector<16x128xf32>,
    %cst_9 = arith.constant 0.000000e+00 : f32
    %13 = vector.broadcast %cst_9 : f32 to vector<16x128xf32>
    %c0_10 = arith.constant 0 : index
    %c0_11 = arith.constant 0 : index
    %14 = vector.load %arg9[%c0_10, %c0_11] : memref<18x144xf32, #tpu.memory_space<vmem>>, vector<16x128xf32>
    %c0_12 = arith.constant 0 : index
    %c0_13 = arith.constant 0 : index
    %c0_14 = arith.constant 0 : index
    %15 = vector.load %arg2[%c0_12, %c0_13, %c0_14] : memref<9x128x128xf32, #tpu.memory_space<vmem>>, vector<1x128x128xf32>
    %16 = vector.shape_cast %15 : vector<1x128x128xf32> to vector<128x128xf32>
    %cst_15 = arith.constant dense<0.000000e+00> : vector<16x128xf32>
    %17 = tpu.matmul %14, %16, %cst_15 {dimension_numbers = #tpu.dot_dimension_numbers<[1], [0], [0], [1], [0, 0, 1, 1], [], []>} : vector<16x128xf32>, vector<128x128xf32>, vector<16x128xf32> -> vector<16x128xf32>
    %18 = arith.addf %13, %17 : vector<16x128xf32>
    %c0_16 = arith.constant 0 : index
    %c8_17 = arith.constant 8 : index
    %19 = vector.load %arg9[%c0_16, %c8_17] : memref<18x144xf32, #tpu.memory_space<vmem>>, vector<16x128xf32>
    %c1_18 = arith.constant 1 : index
    %c0_19 = arith.constant 0 : index
    %c0_20 = arith.constant 0 : index
    %20 = vector.load %arg2[%c1_18, %c0_19, %c0_20] : memref<9x128x128xf32, #tpu.memory_space<vmem>>, vector<1x128x128xf32>
    %21 = vector.shape_cast %20 : vector<1x128x128xf32> to vector<128x128xf32>
    %cst_21 = arith.constant dense<0.000000e+00> : vector<16x128xf32>
    %22 = tpu.matmul %19, %21, %cst_21 {dimension_numbers = #tpu.dot_dimension_numbers<[1], [0], [0], [1], [0, 0, 1, 1], [], []>} : vector<16x128xf32>, vector<128x128xf32>, vector<16x128xf32> -> vector<16x128xf32>
    %23 = arith.addf %18, %22 : vector<16x128xf32>
    %c0_22 = arith.constant 0 : index
    %c16 = arith.constant 16 : index
    %24 = vector.load %arg9[%c0_22, %c16] : memref<18x144xf32, #tpu.memory_space<vmem>>, vector<16x128xf32>
    %c2 = arith.constant 2 : index
    %c0_23 = arith.constant 0 : index
    %c0_24 = arith.constant 0 : index
    %25 = vector.load %arg2[%c2, %c0_23, %c0_24] : memref<9x128x128xf32, #tpu.memory_space<vmem>>, vector<1x128x128xf32>
    %26 = vector.shape_cast %25 : vector<1x128x128xf32> to vector<128x128xf32>
    %cst_25 = arith.constant dense<0.000000e+00> : vector<16x128xf32>
    %27 = tpu.matmul %24, %26, %cst_25 {dimension_numbers = #tpu.dot_dimension_numbers<[1], [0], [0], [1], [0, 0, 1, 1], [], []>} : vector<16x128xf32>, vector<128x128xf32>, vector<16x128xf32> -> vector<16x128xf32>
    %28 = arith.addf %23, %27 : vector<16x128xf32>
    %c1_26 = arith.constant 1 : index
    %c0_27 = arith.constant 0 : index
    %29 = vector.load %arg9[%c1_26, %c0_27] : memref<18x144xf32, #tpu.memory_space<vmem>>, vector<16x128xf32>
    %c3 = arith.constant 3 : index
    %c0_28 = arith.constant 0 : index
    %c0_29 = arith.constant 0 : index
    %30 = vector.load %arg2[%c3, %c0_28, %c0_29] : memref<9x128x128xf32, #tpu.memory_space<vmem>>, vector<1x128x128xf32>
    %31 = vector.shape_cast %30 : vector<1x128x128xf32> to vector<128x128xf32>
    %cst_30 = arith.constant dense<0.000000e+00> : vector<16x128xf32>
    %32 = tpu.matmul %29, %31, %cst_30 {dimension_numbers = #tpu.dot_dimension_numbers<[1], [0], [0], [1], [0, 0, 1, 1], [], []>} : vector<16x128xf32>, vector<128x128xf32>, vector<16x128xf32> -> vector<16x128xf32>
    %33 = arith.addf %28, %32 : vector<16x128xf32>
    %c1_31 = arith.constant 1 : index
    %c8_32 = arith.constant 8 : index
    %34 = vector.load %arg9[%c1_31, %c8_32] : memref<18x144xf32, #tpu.memory_space<vmem>>, vector<16x128xf32>
    %c4 = arith.constant 4 : index
    %c0_33 = arith.constant 0 : index
    %c0_34 = arith.constant 0 : index
    %35 = vector.load %arg2[%c4, %c0_33, %c0_34] : memref<9x128x128xf32, #tpu.memory_space<vmem>>, vector<1x128x128xf32>
    %36 = vector.shape_cast %35 : vector<1x128x128xf32> to vector<128x128xf32>
    %cst_35 = arith.constant dense<0.000000e+00> : vector<16x128xf32>
    %37 = tpu.matmul %34, %36, %cst_35 {dimension_numbers = #tpu.dot_dimension_numbers<[1], [0], [0], [1], [0, 0, 1, 1], [], []>} : vector<16x128xf32>, vector<128x128xf32>, vector<16x128xf32> -> vector<16x128xf32>
    %38 = arith.addf %33, %37 : vector<16x128xf32>
    %c1_36 = arith.constant 1 : index
    %c16_37 = arith.constant 16 : index
    %39 = vector.load %arg9[%c1_36, %c16_37] : memref<18x144xf32, #tpu.memory_space<vmem>>, vector<16x128xf32>
    %c5 = arith.constant 5 : index
    %c0_38 = arith.constant 0 : index
    %c0_39 = arith.constant 0 : index
    %40 = vector.load %arg2[%c5, %c0_38, %c0_39] : memref<9x128x128xf32, #tpu.memory_space<vmem>>, vector<1x128x128xf32>
    %41 = vector.shape_cast %40 : vector<1x128x128xf32> to vector<128x128xf32>
    %cst_40 = arith.constant dense<0.000000e+00> : vector<16x128xf32>
    %42 = tpu.matmul %39, %41, %cst_40 {dimension_numbers = #tpu.dot_dimension_numbers<[1], [0], [0], [1], [0, 0, 1, 1], [], []>} : vector<16x128xf32>, vector<128x128xf32>, vector<16x128xf32> -> vector<16x128xf32>
    %43 = arith.addf %38, %42 : vector<16x128xf32>
    %c2_41 = arith.constant 2 : index
    %c0_42 = arith.constant 0 : index
    %44 = vector.load %arg9[%c2_41, %c0_42] : memref<18x144xf32, #tpu.memory_space<vmem>>, vector<16x128xf32>
    %c6 = arith.constant 6 : index
    %c0_43 = arith.constant 0 : index
    %c0_44 = arith.constant 0 : index
    %45 = vector.load %arg2[%c6, %c0_43, %c0_44] : memref<9x128x128xf32, #tpu.memory_space<vmem>>, vector<1x128x128xf32>
    %46 = vector.shape_cast %45 : vector<1x128x128xf32> to vector<128x128xf32>
    %cst_45 = arith.constant dense<0.000000e+00> : vector<16x128xf32>
    %47 = tpu.matmul %44, %46, %cst_45 {dimension_numbers = #tpu.dot_dimension_numbers<[1], [0], [0], [1], [0, 0, 1, 1], [], []>} : vector<16x128xf32>, vector<128x128xf32>, vector<16x128xf32> -> vector<16x128xf32>
    %48 = arith.addf %43, %47 : vector<16x128xf32>
    %c2_46 = arith.constant 2 : index
    %c8_47 = arith.constant 8 : index
    %49 = vector.load %arg9[%c2_46, %c8_47] : memref<18x144xf32, #tpu.memory_space<vmem>>, vector<16x128xf32>
    %c7 = arith.constant 7 : index
    %c0_48 = arith.constant 0 : index
    %c0_49 = arith.constant 0 : index
    %50 = vector.load %arg2[%c7, %c0_48, %c0_49] : memref<9x128x128xf32, #tpu.memory_space<vmem>>, vector<1x128x128xf32>
    %51 = vector.shape_cast %50 : vector<1x128x128xf32> to vector<128x128xf32>
    %cst_50 = arith.constant dense<0.000000e+00> : vector<16x128xf32>
    %52 = tpu.matmul %49, %51, %cst_50 {dimension_numbers = #tpu.dot_dimension_numbers<[1], [0], [0], [1], [0, 0, 1, 1], [], []>} : vector<16x128xf32>, vector<128x128xf32>, vector<16x128xf32> -> vector<16x128xf32>
    %53 = arith.addf %48, %52 : vector<16x128xf32>
    %c2_51 = arith.constant 2 : index
    %c16_52 = arith.constant 16 : index
    %54 = vector.load %arg9[%c2_51, %c16_52] : memref<18x144xf32, #tpu.memory_space<vmem>>, vector<16x128xf32>
    %c8_53 = arith.constant 8 : index
    %c0_54 = arith.constant 0 : index
    %c0_55 = arith.constant 0 : index
    %55 = vector.load %arg2[%c8_53, %c0_54, %c0_55] : memref<9x128x128xf32, #tpu.memory_space<vmem>>, vector<1x128x128xf32>
    %56 = vector.shape_cast %55 : vector<1x128x128xf32> to vector<128x128xf32>
    %cst_56 = arith.constant dense<0.000000e+00> : vector<16x128xf32>
    %57 = tpu.matmul %54, %56, %cst_56 {dimension_numbers = #tpu.dot_dimension_numbers<[1], [0], [0], [1], [0, 0, 1, 1], [], []>} : vector<16x128xf32>, vector<128x128xf32>, vector<16x128xf32> -> vector<16x128xf32>
    %58 = arith.addf %53, %57 : vector<16x128xf32>
    %c0_57 = arith.constant 0 : index
    %c0_58 = arith.constant 0 : index
    %59 = vector.load %arg3[%c0_57, %c0_58] : memref<1x128xf32, #tpu.memory_space<vmem>>, vector<1x128xf32>
    %60 = vector.broadcast %59 : vector<1x128xf32> to vector<16x128xf32>
    %61 = arith.addf %58, %60 : vector<16x128xf32>
    %c0_59 = arith.constant 0 : index
    %c0_60 = arith.constant 0 : index
    %c0_61 = arith.constant 0 : index
    %62 = vector.load %arg6[%c0_59, %c0_60, %c0_61] : memref<1x16x128xf32, #tpu.memory_space<vmem>>, vector<1x16x128xf32>
    %63 = vector.shape_cast %62 : vector<1x16x128xf32> to vector<16x128xf32>
    %64 = vector.shape_cast %61 : vector<16x128xf32> to vector<1x16x128xf32>
    tpu.vector_store %arg6[%c0_59, %c0_60, %c0_61], %64 {strides = array<i32>} : memref<1x16x128xf32, #tpu.memory_space<vmem>>, vector<1x16x128xf32>,
    %cst_62 = arith.constant dense<0.000000e+00> : vector<128xf32>
    %65 = vector.multi_reduction <add>, %61, %cst_62 [0] : vector<16x128xf32> to vector<128xf32>
    %66 = vector.shape_cast %65 : vector<128xf32> to vector<1x128xf32>
    %c0_63 = arith.constant 0 : index
    %c0_64 = arith.constant 0 : index
    %c0_65 = arith.constant 0 : index
    %67 = vector.load %arg7[%c0_63, %c0_64, %c0_65] : memref<1x1x128xf32, #tpu.memory_space<vmem>>, vector<1x1x128xf32>
    %68 = vector.shape_cast %67 : vector<1x1x128xf32> to vector<1x128xf32>
    %69 = vector.shape_cast %66 : vector<1x128xf32> to vector<1x1x128xf32>
    tpu.vector_store %arg7[%c0_63, %c0_64, %c0_65], %69 {strides = array<i32>} : memref<1x1x128xf32, #tpu.memory_space<vmem>>, vector<1x1x128xf32>,
    %70 = arith.mulf %61, %61 : vector<16x128xf32>
    %cst_66 = arith.constant dense<0.000000e+00> : vector<128xf32>
    %71 = vector.multi_reduction <add>, %70, %cst_66 [0] : vector<16x128xf32> to vector<128xf32>
    %72 = vector.shape_cast %71 : vector<128xf32> to vector<1x128xf32>
    %c0_67 = arith.constant 0 : index
    %c0_68 = arith.constant 0 : index
    %c0_69 = arith.constant 0 : index
    %73 = vector.load %arg8[%c0_67, %c0_68, %c0_69] : memref<1x1x128xf32, #tpu.memory_space<vmem>>, vector<1x1x128xf32>
    %74 = vector.shape_cast %73 : vector<1x1x128xf32> to vector<1x128xf32>
    %75 = vector.shape_cast %72 : vector<1x128xf32> to vector<1x1x128xf32>
    tpu.vector_store %arg8[%c0_67, %c0_68, %c0_69], %75 {strides = array<i32>} : memref<1x1x128xf32, #tpu.memory_space<vmem>>, vector<1x1x128xf32>,
    return
  }
  func.func @transform_0(%arg0: i32) -> (i32, i32, i32) {
    %c0_i32 = arith.constant 0 : i32
    %c0_i32_0 = arith.constant 0 : i32
    %c0_i32_1 = arith.constant 0 : i32
    return %arg0, %c0_i32, %c0_i32_0 : i32, i32, i32
  }
  func.func @transform_1(%arg0: i32) -> (i32, i32, i32) {
    %c0_i32 = arith.constant 0 : i32
    %c0_i32_0 = arith.constant 0 : i32
    %c0_i32_1 = arith.constant 0 : i32
    %c0_i32_2 = arith.constant 0 : i32
    return %c0_i32, %c0_i32_0, %c0_i32_1 : i32, i32, i32
  }
  func.func @transform_2(%arg0: i32) -> (i32, i32) {
    %c0_i32 = arith.constant 0 : i32
    %c0_i32_0 = arith.constant 0 : i32
    %c0_i32_1 = arith.constant 0 : i32
    return %c0_i32, %c0_i32_0 : i32, i32
  }
  func.func @transform_3(%arg0: i32) -> (i32, i32) {
    %c0_i32 = arith.constant 0 : i32
    %c0_i32_0 = arith.constant 0 : i32
    %c0_i32_1 = arith.constant 0 : i32
    return %c0_i32, %c0_i32_0 : i32, i32
  }
  func.func @transform_4(%arg0: i32) -> (i32, i32) {
    %c0_i32 = arith.constant 0 : i32
    %c0_i32_0 = arith.constant 0 : i32
    %c0_i32_1 = arith.constant 0 : i32
    return %c0_i32, %c0_i32_0 : i32, i32
  }
  func.func @transform_5(%arg0: i32) -> (i32, i32, i32) {
    %c0_i32 = arith.constant 0 : i32
    %c0_i32_0 = arith.constant 0 : i32
    %c0_i32_1 = arith.constant 0 : i32
    return %arg0, %c0_i32, %c0_i32_0 : i32, i32, i32
  }
  func.func @transform_6(%arg0: i32) -> (i32, i32, i32) {
    %c0_i32 = arith.constant 0 : i32
    %c0_i32_0 = arith.constant 0 : i32
    %c0_i32_1 = arith.constant 0 : i32
    return %arg0, %c0_i32, %c0_i32_0 : i32, i32, i32
  }
  func.func @transform_7(%arg0: i32) -> (i32, i32, i32) {
    %c0_i32 = arith.constant 0 : i32
    %c0_i32_0 = arith.constant 0 : i32
    %c0_i32_1 = arith.constant 0 : i32
    return %arg0, %c0_i32, %c0_i32_0 : i32, i32, i32
  }
}

module attributes {stable_mosaic.version = 11 : i64} {
  func.func @_bn_relu_kernel(%arg0: i32, %arg1: memref<1x16x128xf32, #tpu.memory_space<vmem>>, %arg2: memref<1x128xf32, #tpu.memory_space<vmem>>, %arg3: memref<1x128xf32, #tpu.memory_space<vmem>>, %arg4: memref<1x16x128xf32, #tpu.memory_space<vmem>>) attributes {dimension_semantics = [#tpu.dimension_semantics<parallel>], iteration_bounds = array<i64: 2>, scalar_prefetch = 0 : i64, scratch_operands = 0 : i64, tpu.core_type = #tpu.core_type<tc>, window_params = [{transform_indices = @transform_0, window_bounds = array<i64: 1, 16, 128>}, {pipeline_mode = #tpu.pipeline_mode<synchronous>, transform_indices = @transform_1, window_bounds = array<i64: 1, 128>}, {pipeline_mode = #tpu.pipeline_mode<synchronous>, transform_indices = @transform_2, window_bounds = array<i64: 1, 128>}, {transform_indices = @transform_3, window_bounds = array<i64: 1, 16, 128>}]} {
    %c0 = arith.constant 0 : index
    %c0_0 = arith.constant 0 : index
    %c0_1 = arith.constant 0 : index
    %0 = vector.load %arg1[%c0, %c0_0, %c0_1] : memref<1x16x128xf32, #tpu.memory_space<vmem>>, vector<1x16x128xf32>
    %1 = vector.shape_cast %0 : vector<1x16x128xf32> to vector<16x128xf32>
    %c0_2 = arith.constant 0 : index
    %c0_3 = arith.constant 0 : index
    %2 = vector.load %arg2[%c0_2, %c0_3] : memref<1x128xf32, #tpu.memory_space<vmem>>, vector<1x128xf32>
    %3 = vector.broadcast %2 : vector<1x128xf32> to vector<16x128xf32>
    %4 = arith.mulf %1, %3 : vector<16x128xf32>
    %c0_4 = arith.constant 0 : index
    %c0_5 = arith.constant 0 : index
    %5 = vector.load %arg3[%c0_4, %c0_5] : memref<1x128xf32, #tpu.memory_space<vmem>>, vector<1x128xf32>
    %6 = vector.broadcast %5 : vector<1x128xf32> to vector<16x128xf32>
    %7 = arith.addf %4, %6 : vector<16x128xf32>
    %cst = arith.constant 0.000000e+00 : f32
    %8 = vector.broadcast %cst : f32 to vector<16x128xf32>
    %9 = arith.maximumf %7, %8 : vector<16x128xf32>
    %c0_6 = arith.constant 0 : index
    %c0_7 = arith.constant 0 : index
    %c0_8 = arith.constant 0 : index
    %10 = vector.load %arg4[%c0_6, %c0_7, %c0_8] : memref<1x16x128xf32, #tpu.memory_space<vmem>>, vector<1x16x128xf32>
    %11 = vector.shape_cast %10 : vector<1x16x128xf32> to vector<16x128xf32>
    %12 = vector.shape_cast %9 : vector<16x128xf32> to vector<1x16x128xf32>
    tpu.vector_store %arg4[%c0_6, %c0_7, %c0_8], %12 {strides = array<i32>} : memref<1x16x128xf32, #tpu.memory_space<vmem>>, vector<1x16x128xf32>,
    return
  }
  func.func @transform_0(%arg0: i32) -> (i32, i32, i32) {
    %c0_i32 = arith.constant 0 : i32
    %c0_i32_0 = arith.constant 0 : i32
    %c0_i32_1 = arith.constant 0 : i32
    return %arg0, %c0_i32, %c0_i32_0 : i32, i32, i32
  }
  func.func @transform_1(%arg0: i32) -> (i32, i32) {
    %c0_i32 = arith.constant 0 : i32
    %c0_i32_0 = arith.constant 0 : i32
    %c0_i32_1 = arith.constant 0 : i32
    return %c0_i32, %c0_i32_0 : i32, i32
  }
  func.func @transform_2(%arg0: i32) -> (i32, i32) {
    %c0_i32 = arith.constant 0 : i32
    %c0_i32_0 = arith.constant 0 : i32
    %c0_i32_1 = arith.constant 0 : i32
    return %c0_i32, %c0_i32_0 : i32, i32
  }
  func.func @transform_3(%arg0: i32) -> (i32, i32, i32) {
    %c0_i32 = arith.constant 0 : i32
    %c0_i32_0 = arith.constant 0 : i32
    %c0_i32_1 = arith.constant 0 : i32
    return %arg0, %c0_i32, %c0_i32_0 : i32, i32, i32
  }
}

</mosaic_0001>

<llo_original>
// kernel: tile.33
$region0: #{tile.33}
  #allocation0 [shape = 's32[1]{0}', space=sflag, size = 0x4, scoped, tag = 'scoped memory for tile.33']
  %s0 = inlined_call_operand.vmem [shape: f32[8], index: 0, kind: input, shape index: {}]
  %s1 = inlined_call_operand.vmem [shape: f32[16,8], index: 1, kind: output, shape index: {}]
  // Predicated region
  $region2: #{tile.33} parent=0 // pred_check
    _
  $region3: #{tile.33} parent=0 // pred_check_branch
    %3 = sbr.rel (0) target = $region5
  $region4: #{tile.33} parent=0 // pred_region
    _
  $region5: #{tile.33} parent=0 // pred_fallthru
    _
  %v4 = vld [vmem:[%s0] ss:$0 sm:$0xff]
  %5 = vst [vmem:[%s1] sm:$0xff] %v4
  %s6 = scalar_lea.vmem %s1, 8
  %7 = vst [vmem:[%s6] sm:$0xff] %v4

// kernel: tile.34
$region0: #{tile.34}
  %s0 = inlined_call_operand.vmem [shape: f32[16,8], index: 0, kind: input, shape index: {}]
  %s1 = inlined_call_operand.vmem [shape: f32[1,128], index: 1, kind: output, shape index: {}]
  $region1: #{tile.34} parent=0
    #allocation0 [shape = 'u8[4096]{0}', space=vmem, size = 0x1000, scoped, tag = 'scoped mem for output reshape']
    %v2 = vld [vmem:[%s0] sm:$0x1]
    %vm3 = vcmask 64512
    %4 = vst.msk [vmem:[#allocation0] sm:$0x1] %vm3, %v2
    %s5 = scalar_lea.vmem %s0, 15
    %v6 = vld [vmem:[%s5] sm:$0x1]
    %7 = vrot.lane.b32.xlu0 %v6, 120
    %v8 = vpop.permute.xlu0 %7
    %vm9 = vcmask 1048512
    %10 = vst.msk [vmem:[#allocation0] sm:$0x1] %vm9, %v8
    %s11 = scalar_lea.vmem %s0, 14
    %v12 = vld [vmem:[%s11] sm:$0x1]
    %13 = vrot.lane.b32.xlu0 %v12, 112
    %v14 = vpop.permute.xlu0 %13
    %vm15 = vcmask 982912
    %16 = vst.msk [vmem:[#allocation0] sm:$0x1] %vm15, %v14
    %s17 = scalar_lea.vmem %s0, 13
    %v18 = vld [vmem:[%s17] sm:$0x1]
    %19 = vrot.lane.b32.xlu0 %v18, 104
    %v20 = vpop.permute.xlu0 %19
    %vm21 = vcmask 917312
    %22 = vst.msk [vmem:[#allocation0] sm:$0x1] %vm21, %v20
    %s23 = scalar_lea.vmem %s0, 12
    %v24 = vld [vmem:[%s23] sm:$0x1]
    %25 = vrot.lane.b32.xlu0 %v24, 96
    %v26 = vpop.permute.xlu0 %25
    %vm27 = vcmask 851712
    %28 = vst.msk [vmem:[#allocation0] sm:$0x1] %vm27, %v26
    %s29 = scalar_lea.vmem %s0, 11
    %v30 = vld [vmem:[%s29] sm:$0x1]
    %31 = vrot.lane.b32.xlu0 %v30, 88
    %v32 = vpop.permute.xlu0 %31
    %vm33 = vcmask 786112
    %34 = vst.msk [vmem:[#allocation0] sm:$0x1] %vm33, %v32
    %s35 = scalar_lea.vmem %s0, 10
    %v36 = vld [vmem:[%s35] sm:$0x1]
    %37 = vrot.lane.b32.xlu0 %v36, 80
    %v38 = vpop.permute.xlu0 %37
    %vm39 = vcmask 720512
    %40 = vst.msk [vmem:[#allocation0] sm:$0x1] %vm39, %v38
    %s41 = scalar_lea.vmem %s0, 9
    %v42 = vld [vmem:[%s41] sm:$0x1]
    %43 = vrot.lane.b32.xlu0 %v42, 72
    %v44 = vpop.permute.xlu0 %43
    %vm45 = vcmask 654912
    %46 = vst.msk [vmem:[#allocation0] sm:$0x1] %vm45, %v44
    %s47 = scalar_lea.vmem %s0, 8
    %v48 = vld [vmem:[%s47] sm:$0x1]
    %49 = vrot.lane.b32.xlu0 %v48, 64
    %v50 = vpop.permute.xlu0 %49
    %vm51 = vcmask 589312
    %52 = vst.msk [vmem:[#allocation0] sm:$0x1] %vm51, %v50
    %s53 = scalar_lea.vmem %s0, 7
    %v54 = vld [vmem:[%s53] sm:$0x1]
    %55 = vrot.lane.b32.xlu0 %v54, 56
    %v56 = vpop.permute.xlu0 %55
    %vm57 = vcmask 523712
    %58 = vst.msk [vmem:[#allocation0] sm:$0x1] %vm57, %v56
    %s59 = scalar_lea.vmem %s0, 6
    %v60 = vld [vmem:[%s59] sm:$0x1]
    %61 = vrot.lane.b32.xlu0 %v60, 48
    %v62 = vpop.permute.xlu0 %61
    %vm63 = vcmask 458112
    %64 = vst.msk [vmem:[#allocation0] sm:$0x1] %vm63, %v62
    %s65 = scalar_lea.vmem %s0, 5
    %v66 = vld [vmem:[%s65] sm:$0x1]
    %67 = vrot.lane.b32.xlu0 %v66, 40
    %v68 = vpop.permute.xlu0 %67
    %vm69 = vcmask 392512
    %70 = vst.msk [vmem:[#allocation0] sm:$0x1] %vm69, %v68
    %s71 = scalar_lea.vmem %s0, 4
    %v72 = vld [vmem:[%s71] sm:$0x1]
    %73 = vrot.lane.b32.xlu0 %v72, 32
    %v74 = vpop.permute.xlu0 %73
    %vm75 = vcmask 326912
    %76 = vst.msk [vmem:[#allocation0] sm:$0x1] %vm75, %v74
    %s77 = scalar_lea.vmem %s0, 3
    %v78 = vld [vmem:[%s77] sm:$0x1]
    %79 = vrot.lane.b32.xlu0 %v78, 24
    %v80 = vpop.permute.xlu0 %79
    %vm81 = vcmask 261312
    %82 = vst.msk [vmem:[#allocation0] sm:$0x1] %vm81, %v80
    %s83 = scalar_lea.vmem %s0, 2
    %v84 = vld [vmem:[%s83] sm:$0x1]
    %85 = vrot.lane.b32.xlu0 %v84, 16
    %v86 = vpop.permute.xlu0 %85
    %vm87 = vcmask 195712
    %88 = vst.msk [vmem:[#allocation0] sm:$0x1] %vm87, %v86
    %s89 = scalar_lea.vmem %s0, 1
    %v90 = vld [vmem:[%s89] sm:$0x1]
    %91 = vrot.lane.b32.xlu0 %v90, 8
    %v92 = vpop.permute.xlu0 %91
    %vm93 = vcmask 130112
    %94 = vst.msk [vmem:[#allocation0] sm:$0x1] %vm93, %v92
    %s96 = sshll.u32 1, 1
    %s97 = ssub.s32 %s96, 1
    %v99 = vld [vmem:[#allocation0] sm:%s97]
    %s100 = sshll.u32 1, 1
    %s101 = ssub.s32 %s100, 1
    %102 = vst [vmem:[%s1] sm:%s101] %v99

// kernel: decoder_block.3
$region0: #{decoder_block.3}
  #allocation0 [shape = 'u32[]', space=smem, size = 0x4, offset = 0x4, fixed_abs, tag = 'smem constant byte address 0x4 - core index']
  #allocation1 [shape = 'u32[144,128]{1,0:T(1,128)}', space=vmem, size = 0x12000, scoped, tag = 'internal scratch']
  #allocation2 [shape = 'f32[18,72]{1,0:T(8,128)}', space=vmem, size = 0x3000, scoped, tag = 'scratch operand']
  %s0 = inlined_call_operand.vmem [shape: f32[2,16,64], index: 0, kind: input, shape index: {}]
  %s1 = inlined_call_operand.vmem [shape: f32[9,64,128], index: 1, kind: input, shape index: {}]
  %s2 = inlined_call_operand.vmem [shape: f32[1,128], index: 2, kind: input, shape index: {}]
  %s3 = inlined_call_operand.vmem [shape: f32[1,64], index: 3, kind: input, shape index: {}]
  %s4 = inlined_call_operand.vmem [shape: f32[1,64], index: 4, kind: input, shape index: {}]
  %s5 = inlined_call_operand.vmem [shape: f32[2,16,128], index: 5, kind: output, shape index: {0}]
  %s6 = inlined_call_operand.vmem [shape: f32[2,1,128], index: 6, kind: output, shape index: {1}]
  %s7 = inlined_call_operand.vmem [shape: f32[2,1,128], index: 7, kind: output, shape index: {2}]
  %8 = xla_tuple %s5, %s6, %s7
  %s9 = sld [smem:[#allocation0]]
  $region69: #{decoder_block.3} parent=0
    _
  %s11 = ssub.s32 1, %s9
  %s12 = scalar_select 0, %s11, %s9
  loop: start=0, step=1, limit=4
  $region2: #{decoder_block.3} parent=0 // loop_pre_header
    _
  $region3: #{decoder_block.3} parent=0 // loop_header
    %s14 = sphi 0, %s18
    %p15 = scmp.ge.s32.totalorder %s14, 4
    %s24 = sphi 0, %s26
    %s27 = sphi 0, %s24
    %s28 = sphi 0, %s27
    %s44 = sphi 0, %s28
    %s48 = sphi 0, %s48
    %s50 = sphi 0, %s48
    %s51 = sphi 0, %s50
    %s65 = sphi 0, %s51
    %s69 = sphi 0, %s69
    %s71 = sphi 0, %s69
    %s72 = sphi 0, %s71
    %s86 = sphi 0, %s72
    %s90 = sphi 0, %s90
    %s92 = sphi 0, %s90
    %s93 = sphi 0, %s92
    %s107 = sphi 0, %s93
    %s111 = sphi 0, %s111
    %s113 = sphi 0, %s111
    %s114 = sphi 0, %s113
    %s128 = sphi 0, %s114
    %s134 = sphi 0, %s136
    %s137 = sphi 0, %s134
    %s138 = sphi 0, %s137
    %s154 = sphi 0, %s138
    %s160 = sphi 0, %s162
    %s163 = sphi 0, %s160
    %s164 = sphi 0, %s163
    %s180 = sphi 0, %s164
    %s186 = sphi 0, %s188
    %s189 = sphi 0, %s186
    %s190 = sphi 0, %s189
    %s206 = sphi 0, %s190
  $region4: #{decoder_block.3} parent=0 // loop_header_branch
    %17 = sbr.rel (%p15) target = $region8
  $region5: #{decoder_block.3} parent=0 // loop_body
    %s19 = ssub.s32 %s14, 1
    %s20 = ssub.s32 %s14, 2
    %s21 = sadd.s32 %s14, 1
    %s22 = ssub.s32 %s14, %s21
    %p23 = scmp.eq.s32.totalorder %s22, 0
    %s25 = sadd.s32 %s24, 1
    %s26 = scalar_select %p23, %s24, %s25
    %p29 = pneg %p23
    %p30 = scmp.eq.s32.totalorder %s14, 1
    %p31 = por %p29, %p30
    %p32 = scmp.ne.s32.totalorder %s24, %s27
    %p33 = scmp.eq.s32.totalorder %s14, 0
    %p34 = por %p32, %p33
    %p35 = scmp.ne.s32.totalorder %s24, %s27
    %p36 = scmp.eq.s32.totalorder %s19, 1
    %p37 = por %p35, %p36
    %p38 = scmp.ne.s32.totalorder %s27, %s28
    %p39 = scmp.eq.s32.totalorder %s19, 0
    %p40 = por %p38, %p39
    %p41 = scmp.ne.s32.totalorder %s27, %s28
    %p42 = scmp.eq.s32.totalorder %s20, 1
    %p43 = por %p41, %p42
    %p45 = scmp.ne.s32.totalorder %s28, %s44
    %p46 = scmp.eq.s32.totalorder %s20, 0
    %p47 = por %p45, %p46
    %s49 = sadd.s32 %s48, 1
    %p52 = scmp.eq.s32.totalorder %s14, 1
    %p53 = scmp.ne.s32.totalorder %s48, %s50
    %p54 = scmp.eq.s32.totalorder %s14, 0
    %p55 = por %p53, %p54
    %p56 = scmp.ne.s32.totalorder %s48, %s50
    %p57 = scmp.eq.s32.totalorder %s19, 1
    %p58 = por %p56, %p57
    %p59 = scmp.ne.s32.totalorder %s50, %s51
    %p60 = scmp.eq.s32.totalorder %s19, 0
    %p61 = por %p59, %p60
    %p62 = scmp.ne.s32.totalorder %s50, %s51
    %p63 = scmp.eq.s32.totalorder %s20, 1
    %p64 = por %p62, %p63
    %p66 = scmp.ne.s32.totalorder %s51, %s65
    %p67 = scmp.eq.s32.totalorder %s20, 0
    %p68 = por %p66, %p67
    %s70 = sadd.s32 %s69, 1
    %p73 = scmp.eq.s32.totalorder %s14, 1
    %p74 = scmp.ne.s32.totalorder %s69, %s71
    %p75 = scmp.eq.s32.totalorder %s14, 0
    %p76 = por %p74, %p75
    %p77 = scmp.ne.s32.totalorder %s69, %s71
    %p78 = scmp.eq.s32.totalorder %s19, 1
    %p79 = por %p77, %p78
    %p80 = scmp.ne.s32.totalorder %s71, %s72
    %p81 = scmp.eq.s32.totalorder %s19, 0
    %p82 = por %p80, %p81
    %p83 = scmp.ne.s32.totalorder %s71, %s72
    %p84 = scmp.eq.s32.totalorder %s20, 1
    %p85 = por %p83, %p84
    %p87 = scmp.ne.s32.totalorder %s72, %s86
    %p88 = scmp.eq.s32.totalorder %s20, 0
    %p89 = por %p87, %p88
    %s91 = sadd.s32 %s90, 1
    %p94 = scmp.eq.s32.totalorder %s14, 1
    %p95 = scmp.ne.s32.totalorder %s90, %s92
    %p96 = scmp.eq.s32.totalorder %s14, 0
    %p97 = por %p95, %p96
    %p98 = scmp.ne.s32.totalorder %s90, %s92
    %p99 = scmp.eq.s32.totalorder %s19, 1
    %p100 = por %p98, %p99
    %p101 = scmp.ne.s32.totalorder %s92, %s93
    %p102 = scmp.eq.s32.totalorder %s19, 0
    %p103 = por %p101, %p102
    %p104 = scmp.ne.s32.totalorder %s92, %s93
    %p105 = scmp.eq.s32.totalorder %s20, 1
    %p106 = por %p104, %p105
    %p108 = scmp.ne.s32.totalorder %s93, %s107
    %p109 = scmp.eq.s32.totalorder %s20, 0
    %p110 = por %p108, %p109
    %s112 = sadd.s32 %s111, 1
    %p115 = scmp.eq.s32.totalorder %s14, 1
    %p116 = scmp.ne.s32.totalorder %s111, %s113
    %p117 = scmp.eq.s32.totalorder %s14, 0
    %p118 = por %p116, %p117
    %p119 = scmp.ne.s32.totalorder %s111, %s113
    %p120 = scmp.eq.s32.totalorder %s19, 1
    %p121 = por %p119, %p120
    %p122 = scmp.ne.s32.totalorder %s113, %s114
    %p123 = scmp.eq.s32.totalorder %s19, 0
    %p124 = por %p122, %p123
    %p125 = scmp.ne.s32.totalorder %s113, %s114
    %p126 = scmp.eq.s32.totalorder %s20, 1
    %p127 = por %p125, %p126
    %p129 = scmp.ne.s32.totalorder %s114, %s128
    %p130 = scmp.eq.s32.totalorder %s20, 0
    %p131 = por %p129, %p130
    %s132 = ssub.s32 %s14, %s21
    %p133 = scmp.eq.s32.totalorder %s132, 0
    %s135 = sadd.s32 %s134, 1
    %s136 = scalar_select %p133, %s134, %s135
    %p139 = pneg %p133
    %p140 = scmp.eq.s32.totalorder %s14, 1
    %p141 = por %p139, %p140
    %p142 = scmp.ne.s32.totalorder %s134, %s137
    %p143 = scmp.eq.s32.totalorder %s14, 0
    %p144 = por %p142, %p143
    %p145 = scmp.ne.s32.totalorder %s134, %s137
    %p146 = scmp.eq.s32.totalorder %s19, 1
    %p147 = por %p145, %p146
    %p148 = scmp.ne.s32.totalorder %s137, %s138
    %p149 = scmp.eq.s32.totalorder %s19, 0
    %p150 = por %p148, %p149
    %p151 = scmp.ne.s32.totalorder %s137, %s138
    %p152 = scmp.eq.s32.totalorder %s20, 1
    %p153 = por %p151, %p152
    %p155 = scmp.ne.s32.totalorder %s138, %s154
    %p156 = scmp.eq.s32.totalorder %s20, 0
    %p157 = por %p155, %p156
    %s158 = ssub.s32 %s14, %s21
    %p159 = scmp.eq.s32.totalorder %s158, 0
    %s161 = sadd.s32 %s160, 1
    %s162 = scalar_select %p159, %s160, %s161
    %p165 = pneg %p159
    %p166 = scmp.eq.s32.totalorder %s14, 1
    %p167 = por %p165, %p166
    %p168 = scmp.ne.s32.totalorder %s160, %s163
    %p169 = scmp.eq.s32.totalorder %s14, 0
    %p170 = por %p168, %p169
    %p171 = scmp.ne.s32.totalorder %s160, %s163
    %p172 = scmp.eq.s32.totalorder %s19, 1
    %p173 = por %p171, %p172
    %p174 = scmp.ne.s32.totalorder %s163, %s164
    %p175 = scmp.eq.s32.totalorder %s19, 0
    %p176 = por %p174, %p175
    %p177 = scmp.ne.s32.totalorder %s163, %s164
    %p178 = scmp.eq.s32.totalorder %s20, 1
    %p179 = por %p177, %p178
    %p181 = scmp.ne.s32.totalorder %s164, %s180
    %p182 = scmp.eq.s32.totalorder %s20, 0
    %p183 = por %p181, %p182
    %s184 = ssub.s32 %s14, %s21
    %p185 = scmp.eq.s32.totalorder %s184, 0
    %s187 = sadd.s32 %s186, 1
    %s188 = scalar_select %p185, %s186, %s187
    %p191 = pneg %p185
    %p192 = scmp.eq.s32.totalorder %s14, 1
    %p193 = por %p191, %p192
    %p194 = scmp.ne.s32.totalorder %s186, %s189
    %p195 = scmp.eq.s32.totalorder %s14, 0
    %p196 = por %p194, %p195
    %p197 = scmp.ne.s32.totalorder %s186, %s189
    %p198 = scmp.eq.s32.totalorder %s19, 1
    %p199 = por %p197, %p198
    %p200 = scmp.ne.s32.totalorder %s189, %s190
    %p201 = scmp.eq.s32.totalorder %s19, 0
    %p202 = por %p200, %p201
    %p203 = scmp.ne.s32.totalorder %s189, %s190
    %p204 = scmp.eq.s32.totalorder %s20, 1
    %p205 = por %p203, %p204
    %p207 = scmp.ne.s32.totalorder %s190, %s206
    %p208 = scmp.eq.s32.totalorder %s20, 0
    %p209 = por %p207, %p208
    %p210 = scmp.le.s32.totalorder 1, %s14
    %p211 = scmp.lt.s32.totalorder %s14, 3
    %p212 = pnand %p210, %p211
    %p213 = pneg %p212
    // Predicated region
    $region9: #{decoder_block.3} parent=5 // pred_check
      _
    $region10: #{decoder_block.3} parent=5 // pred_check_branch
      %215 = sbr.rel (%p212) target = $region12
    $region11: #{decoder_block.3} parent=5 // pred_region
      %s216 = ssub.s32 %s14, 1
      // Predicated region
      $region13: #{decoder_block.3} parent=11 // pred_check
        %p217 = pneg %p61
      $region14: #{decoder_block.3} parent=11 // pred_check_branch
        %219 = sbr.rel (%p217) target = $region16
      $region15: #{decoder_block.3} parent=11 // pred_region
        _
      $region16: #{decoder_block.3} parent=11 // pred_fallthru
        _
      // Predicated region
      $region17: #{decoder_block.3} parent=11 // pred_check
        %p220 = pneg %p82
      $region18: #{decoder_block.3} parent=11 // pred_check_branch
        %222 = sbr.rel (%p220) target = $region20
      $region19: #{decoder_block.3} parent=11 // pred_region
        _
      $region20: #{decoder_block.3} parent=11 // pred_fallthru
        _
      // Predicated region
      $region21: #{decoder_block.3} parent=11 // pred_check
        %p223 = pneg %p103
      $region22: #{decoder_block.3} parent=11 // pred_check_branch
        %225 = sbr.rel (%p223) target = $region24
      $region23: #{decoder_block.3} parent=11 // pred_region
        _
      $region24: #{decoder_block.3} parent=11 // pred_fallthru
        _
      // Predicated region
      $region25: #{decoder_block.3} parent=11 // pred_check
        %p226 = pneg %p124
      $region26: #{decoder_block.3} parent=11 // pred_check_branch
        %228 = sbr.rel (%p226) target = $region28
      $region27: #{decoder_block.3} parent=11 // pred_region
        _
      $region28: #{decoder_block.3} parent=11 // pred_fallthru
        _
    $region12: #{decoder_block.3} parent=5 // pred_fallthru
      _
    %p229 = scmp.lt.s32.totalorder %s14, 2
    // Predicated region
    $region29: #{decoder_block.3} parent=5 // pred_check
      %p230 = pneg %p229
    $region30: #{decoder_block.3} parent=5 // pred_check_branch
      %232 = sbr.rel (%p230) target = $region32
    $region31: #{decoder_block.3} parent=5 // pred_region
      // Predicated region
      $region33: #{decoder_block.3} parent=31 // pred_check
        %p233 = pneg %p34
      $region34: #{decoder_block.3} parent=31 // pred_check_branch
        %235 = sbr.rel (%p233) target = $region36
      $region35: #{decoder_block.3} parent=31 // pred_region
        %p236 = scmp.lt.s32.totalorder %s14, 1
        %s237 = scalar_select %p236, %s14, 1
        %s238 = smul.addr %s237, 2
        %s239 = smul.addr %s238, 8
        %s240 = scalar_lea.vmem %s0, %s239
      $region36: #{decoder_block.3} parent=31 // pred_fallthru
        _
    $region32: #{decoder_block.3} parent=5 // pred_fallthru
      _
    %p241 = scmp.le.s32.totalorder 1, %s14
    %p242 = scmp.lt.s32.totalorder %s14, 3
    %p243 = pnand %p241, %p242
    %p244 = pneg %p243
    // Predicated region
    $region37: #{decoder_block.3} parent=5 // pred_check
      _
    $region38: #{decoder_block.3} parent=5 // pred_check_branch
      %246 = sbr.rel (%p243) target = $region40
    $region39: #{decoder_block.3} parent=5 // pred_region
      %s247 = ssub.s32 %s14, 1
      %p248 = scmp.lt.s32.totalorder %s19, 1
      %s249 = scalar_select %p248, %s19, 1
      %s250 = smul.addr %s249, 2
      %s251 = smul.addr %s250, 8
      %s252 = scalar_lea.vmem %s0, %s251
      %p253 = pneg %p40
      %p254 = pneg %p37
      %p255 = pneg %p61
      %p256 = pneg %p58
      %p257 = pneg %p82
      %p258 = pneg %p79
      %p259 = pneg %p103
      %p260 = pneg %p100
      %p261 = pneg %p124
      %p262 = pneg %p121
      %p263 = pneg %p150
      %p264 = pneg %p147
      %p265 = scmp.lt.s32.totalorder %s19, 1
      %s266 = scalar_select %p265, %s19, 1
      %s267 = smul.addr %s266, 2
      %s268 = smul.addr %s267, 8
      %s269 = scalar_lea.vmem %s5, %s268
      %p270 = pneg %p176
      %p271 = pneg %p173
      %p272 = scmp.lt.s32.totalorder %s19, 1
      %s273 = scalar_select %p272, %s19, 1
      %s274 = scalar_lea.vmem %s6, %s273
      %p275 = pneg %p202
      %p276 = pneg %p199
      %p277 = scmp.lt.s32.totalorder %s19, 1
      %s278 = scalar_select %p277, %s19, 1
      %s279 = scalar_lea.vmem %s7, %s278
      %p280 = scmp.lt.s32.totalorder %s19, 1
      %s281 = scalar_select %p280, %s19, 1
      %s282 = smul.addr %s281, 2
      %s283 = smul.addr %s282, 8
      %s284 = scalar_lea.vmem %s0, %s283
      %p285 = scmp.lt.s32.totalorder %s19, 1
      %s286 = scalar_select %p285, %s19, 1
      %s287 = smul.addr %s286, 2
      %s288 = smul.addr %s287, 8
      %s289 = scalar_lea.vmem %s5, %s288
      %p290 = scmp.lt.s32.totalorder %s19, 1
      %s291 = scalar_select %p290, %s19, 1
      %s292 = scalar_lea.vmem %s6, %s291
      %p293 = scmp.lt.s32.totalorder %s19, 1
      %s294 = scalar_select %p293, %s19, 1
      %s295 = scalar_lea.vmem %s7, %s294
      %v296 = vld [vmem:[%s284] sm:$0xff]
      %v297 = vld [vmem:[%s284 + $0x8] sm:$0xff]
      %vm298 = vcmask 588800
      %299 = vst.msk [vmem:[#allocation2] sm:$0xff] %vm298, 0.0
      %300 = vst.msk [vmem:[#allocation2 + $0x8] sm:$0xff] %vm298, 0.0
      %vm301 = vcmask 582656
      %302 = vst.msk [vmem:[#allocation2 + $0x10] sm:$0x3] %vm301, 0.0
      %305 = vrot.lane.b32.xlu0 %v296, 4
      %v306 = vpop.permute.xlu0 %305
      %307 = vrot.lane.b32.xlu0 %v297, 4
      %v308 = vpop.permute.xlu0 %307
      %vm311 = vcmask 556064
      %312 = vst.msk [vmem:[#allocation2 + $0x1] sm:$0xff] %vm311, %v306
      %313 = vst.msk [vmem:[#allocation2 + $0x9] sm:$0xff] %vm311, %v308
      %v314 = vld [vmem:[#allocation2] sm:$0xff]
      %v315 = vld [vmem:[#allocation2 + $0x8] sm:$0xff]
      %v316 = vld [vmem:[%s1] sm:$0xff]
      %v317 = vld [vmem:[%s1 + $0x8] sm:$0xff]
      %v318 = vld [vmem:[%s1 + $0x10] sm:$0xff]
      %v319 = vld [vmem:[%s1 + $0x18] sm:$0xff]
      %v320 = vld [vmem:[%s1 + $0x20] sm:$0xff]
      %v321 = vld [vmem:[%s1 + $0x28] sm:$0xff]
      %v322 = vld [vmem:[%s1 + $0x30] sm:$0xff]
      %v323 = vld [vmem:[%s1 + $0x38] sm:$0xff]
      %s324 = scalar_lea.vmem %s1, 64
      %v325 = vld [vmem:[%s324] sm:$0xff]
      %v326 = vld [vmem:[%s324 + $0x8] sm:$0xff]
      %v327 = vld [vmem:[%s324 + $0x10] sm:$0xff]
      %v328 = vld [vmem:[%s324 + $0x18] sm:$0xff]
      %v329 = vld [vmem:[%s324 + $0x20] sm:$0xff]
      %v330 = vld [vmem:[%s324 + $0x28] sm:$0xff]
      %v331 = vld [vmem:[%s324 + $0x30] sm:$0xff]
      %v332 = vld [vmem:[%s324 + $0x38] sm:$0xff]
      %335 = vrot.lane.b32.xlu0 %v314, 124
      %v336 = vpop.permute.xlu0 %335
      %337 = vrot.lane.b32.xlu0 %v315, 124
      %v338 = vpop.permute.xlu0 %337
      %vm339 = vcmask 523264
      %v340 = vsel %vm339, %v336, 0
      %v342 = vsel %vm339, %v338, 0
      %344 = vmatprep.subr.mxu0 0.0
      %345 = vmatpush1.msra.mxu0 0.0
      %346 = vmatprep.subr.mxu0 0.0
      %347 = vmatpush1.msra.mxu0 0.0
      %348 = vmatprep.subr.mxu0 0.0
      %349 = vmatpush1.msra.mxu0 0.0
      %350 = vmatprep.subr.mxu0 0.0
      %351 = vmatpush1.msra.mxu0 0.0
      %352 = vmatprep.subr.mxu0 0.0
      %353 = vmatpush1.msra.mxu0 0.0
      %354 = vmatprep.subr.mxu0 0.0
      %355 = vmatpush1.msra.mxu0 0.0
      %356 = vmatprep.subr.mxu0 0.0
      %357 = vmatpush1.msra.mxu0 0.0
      %358 = vmatprep.subr.mxu0 0.0
      %359 = vmatpush1.msra.mxu0 0.0
      %360 = vmatprep.subr.mxu0 0.0
      %361 = vmatpush1.msra.mxu0 %v332
      %362 = vmatprep.subr.mxu0 0.0
      %363 = vmatpush1.msra.mxu0 %v331
      %364 = vmatprep.subr.mxu0 0.0
      %365 = vmatpush1.msra.mxu0 %v330
      %366 = vmatprep.subr.mxu0 0.0
      %367 = vmatpush1.msra.mxu0 %v329
      %368 = vmatprep.subr.mxu0 0.0
      %369 = vmatpush1.msra.mxu0 %v328
      %370 = vmatprep.subr.mxu0 0.0
      %371 = vmatpush1.msra.mxu0 %v327
      %372 = vmatprep.subr.mxu0 0.0
      %373 = vmatpush1.msra.mxu0 %v326
      %374 = vmatprep.subr.mxu0 0.0
      %375 = vmatpush1.msra.mxu0 %v325
      %376 = vmatprep.subr.mxu0 0.0
      %377 = vmatpush2.msra.mxu0 0.0
      %378 = vmatprep.subr.mxu0 0.0
      %379 = vmatpush2.msra.mxu0 0.0
      %380 = vmatprep.subr.mxu0 0.0
      %381 = vmatpush2.msra.mxu0 0.0
      %382 = vmatprep.subr.mxu0 0.0
      %383 = vmatpush2.msra.mxu0 0.0
      %384 = vmatprep.subr.mxu0 0.0
      %385 = vmatpush2.msra.mxu0 0.0
      %386 = vmatprep.subr.mxu0 0.0
      %387 = vmatpush2.msra.mxu0 0.0
      %388 = vmatprep.subr.mxu0 0.0
      %389 = vmatpush2.msra.mxu0 0.0
      %390 = vmatprep.subr.mxu0 0.0
      %391 = vmatpush2.msra.mxu0 0.0
      %392 = vmatprep.subr.mxu0 0.0
      %393 = vmatpush2.msra.mxu0 0.0
      %394 = vmatprep.subr.mxu0 0.0
      %395 = vmatpush2.msra.mxu0 0.0
      %396 = vmatprep.subr.mxu0 0.0
      %397 = vmatpush2.msra.mxu0 0.0
      %398 = vmatprep.subr.mxu0 0.0
      %399 = vmatpush2.msra.mxu0 0.0
      %400 = vmatprep.subr.mxu0 0.0
      %401 = vmatpush2.msra.mxu0 0.0
      %402 = vmatprep.subr.mxu0 0.0
      %403 = vmatpush2.msra.mxu0 0.0
      %404 = vmatprep.subr.mxu0 0.0
      %405 = vmatpush2.msra.mxu0 0.0
      %406 = vmatprep.subr.mxu0 0.0
      %407 = vmatpush2.msra.mxu0 0.0
      %408 = vmatprep.mubr.f32.mxu0 0.0
      %409 = vmatmul.mubr.f32.gmra.mxu0 %v340
      %v410 = vpop.f32.mrf.mxu0
      %v411 = vadd.f32 0.0, %v410
      %v412 = vpop.f32.mrf.mxu0
      %413 = vmatprep.mubr.f32.mxu0 0.0
      %414 = vmatmul.mubr.f32.gmra.mxu0 %v342
      %v415 = vpop.f32.mrf.mxu0
      %v416 = vadd.f32 0.0, %v415
      %v417 = vpop.f32.mrf.mxu0
      %418 = vdwg.mxu0
      %v419 = vsel %vm339, %v314, 0
      %v421 = vsel %vm339, %v315, 0
      %423 = vmatprep.subr.mxu0 0.0
      %424 = vmatpush1.msra.mxu0 0.0
      %425 = vmatprep.subr.mxu0 0.0
      %426 = vmatpush1.msra.mxu0 0.0
      %427 = vmatprep.subr.mxu0 0.0
      %428 = vmatpush1.msra.mxu0 0.0
      %429 = vmatprep.subr.mxu0 0.0
      %430 = vmatpush1.msra.mxu0 0.0
      %431 = vmatprep.subr.mxu0 0.0
      %432 = vmatpush1.msra.mxu0 0.0
      %433 = vmatprep.subr.mxu0 0.0
      %434 = vmatpush1.msra.mxu0 0.0
      %435 = vmatprep.subr.mxu0 0.0
      %436 = vmatpush1.msra.mxu0 0.0
      %437 = vmatprep.subr.mxu0 0.0
      %438 = vmatpush1.msra.mxu0 0.0
      %439 = vmatprep.subr.mxu0 0.0
      %440 = vmatpush1.msra.mxu0 %v323
      %441 = vmatprep.subr.mxu0 0.0
      %442 = vmatpush1.msra.mxu0 %v322
      %443 = vmatprep.subr.mxu0 0.0
      %444 = vmatpush1.msra.mxu0 %v321
      %445 = vmatprep.subr.mxu0 0.0
      %446 = vmatpush1.msra.mxu0 %v320
      %447 = vmatprep.subr.mxu0 0.0
      %448 = vmatpush1.msra.mxu0 %v319
      %449 = vmatprep.subr.mxu0 0.0
      %450 = vmatpush1.msra.mxu0 %v318
      %451 = vmatprep.subr.mxu0 0.0
      %452 = vmatpush1.msra.mxu0 %v317
      %453 = vmatprep.subr.mxu0 0.0
      %454 = vmatpush1.msra.mxu0 %v316
      %455 = vmatprep.subr.mxu0 0.0
      %456 = vmatpush2.msra.mxu0 0.0
      %457 = vmatprep.subr.mxu0 0.0
      %458 = vmatpush2.msra.mxu0 0.0
      %459 = vmatprep.subr.mxu0 0.0
      %460 = vmatpush2.msra.mxu0 0.0
      %461 = vmatprep.subr.mxu0 0.0
      %462 = vmatpush2.msra.mxu0 0.0
      %463 = vmatprep.subr.mxu0 0.0
      %464 = vmatpush2.msra.mxu0 0.0
      %465 = vmatprep.subr.mxu0 0.0
      %466 = vmatpush2.msra.mxu0 0.0
      %467 = vmatprep.subr.mxu0 0.0
      %468 = vmatpush2.msra.mxu0 0.0
      %469 = vmatprep.subr.mxu0 0.0
      %470 = vmatpush2.msra.mxu0 0.0
      %471 = vmatprep.subr.mxu0 0.0
      %472 = vmatpush2.msra.mxu0 0.0
      %473 = vmatprep.subr.mxu0 0.0
      %474 = vmatpush2.msra.mxu0 0.0
      %475 = vmatprep.subr.mxu0 0.0
      %476 = vmatpush2.msra.mxu0 0.0
      %477 = vmatprep.subr.mxu0 0.0
      %478 = vmatpush2.msra.mxu0 0.0
      %479 = vmatprep.subr.mxu0 0.0
      %480 = vmatpush2.msra.mxu0 0.0
      %481 = vmatprep.subr.mxu0 0.0
      %482 = vmatpush2.msra.mxu0 0.0
      %483 = vmatprep.subr.mxu0 0.0
      %484 = vmatpush2.msra.mxu0 0.0
      %485 = vmatprep.subr.mxu0 0.0
      %486 = vmatpush2.msra.mxu0 0.0
      %487 = vmatprep.mubr.f32.mxu0 0.0
      %488 = vmatmul.mubr.f32.gmra.mxu0 %v419
      %v489 = vpop.f32.mrf.mxu0
      %v490 = vadd.f32 %v411, %v489
      %v491 = vpop.f32.mrf.mxu0
      %492 = vmatprep.mubr.f32.mxu0 0.0
      %493 = vmatmul.mubr.f32.gmra.mxu0 %v421
      %v494 = vpop.f32.mrf.mxu0
      %v495 = vadd.f32 %v416, %v494
      %v496 = vpop.f32.mrf.mxu0
      %497 = vdwg.mxu0
      %s498 = scalar_lea.vmem %s1, 128
      %v499 = vld [vmem:[%s498] sm:$0xff]
      %v500 = vld [vmem:[%s498 + $0x8] sm:$0xff]
      %v501 = vld [vmem:[%s498 + $0x10] sm:$0xff]
      %v502 = vld [vmem:[%s498 + $0x18] sm:$0xff]
      %v503 = vld [vmem:[%s498 + $0x20] sm:$0xff]
      %v504 = vld [vmem:[%s498 + $0x28] sm:$0xff]
      %v505 = vld [vmem:[%s498 + $0x30] sm:$0xff]
      %v506 = vld [vmem:[%s498 + $0x38] sm:$0xff]
      %507 = vrot.lane.b32.xlu0 %v314, 120
      %v508 = vpop.permute.xlu0 %507
      %509 = vrot.lane.b32.xlu0 %v315, 120
      %v510 = vpop.permute.xlu0 %509
      %v511 = vsel %vm339, %v508, 0
      %v513 = vsel %vm339, %v510, 0
      %515 = vmatprep.subr.mxu0 0.0
      %516 = vmatpush1.msra.mxu0 0.0
      %517 = vmatprep.subr.mxu0 0.0
      %518 = vmatpush1.msra.mxu0 0.0
      %519 = vmatprep.subr.mxu0 0.0
      %520 = vmatpush1.msra.mxu0 0.0
      %521 = vmatprep.subr.mxu0 0.0
      %522 = vmatpush1.msra.mxu0 0.0
      %523 = vmatprep.subr.mxu0 0.0
      %524 = vmatpush1.msra.mxu0 0.0
      %525 = vmatprep.subr.mxu0 0.0
      %526 = vmatpush1.msra.mxu0 0.0
      %527 = vmatprep.subr.mxu0 0.0
      %528 = vmatpush1.msra.mxu0 0.0
      %529 = vmatprep.subr.mxu0 0.0
      %530 = vmatpush1.msra.mxu0 0.0
      %531 = vmatprep.subr.mxu0 0.0
      %532 = vmatpush1.msra.mxu0 %v506
      %533 = vmatprep.subr.mxu0 0.0
      %534 = vmatpush1.msra.mxu0 %v505
      %535 = vmatprep.subr.mxu0 0.0
      %536 = vmatpush1.msra.mxu0 %v504
      %537 = vmatprep.subr.mxu0 0.0
      %538 = vmatpush1.msra.mxu0 %v503
      %539 = vmatprep.subr.mxu0 0.0
      %540 = vmatpush1.msra.mxu0 %v502
      %541 = vmatprep.subr.mxu0 0.0
      %542 = vmatpush1.msra.mxu0 %v501
      %543 = vmatprep.subr.mxu0 0.0
      %544 = vmatpush1.msra.mxu0 %v500
      %545 = vmatprep.subr.mxu0 0.0
      %546 = vmatpush1.msra.mxu0 %v499
      %547 = vmatprep.subr.mxu0 0.0
      %548 = vmatpush2.msra.mxu0 0.0
      %549 = vmatprep.subr.mxu0 0.0
      %550 = vmatpush2.msra.mxu0 0.0
      %551 = vmatprep.subr.mxu0 0.0
      %552 = vmatpush2.msra.mxu0 0.0
      %553 = vmatprep.subr.mxu0 0.0
      %554 = vmatpush2.msra.mxu0 0.0
      %555 = vmatprep.subr.mxu0 0.0
      %556 = vmatpush2.msra.mxu0 0.0
      %557 = vmatprep.subr.mxu0 0.0
      %558 = vmatpush2.msra.mxu0 0.0
      %559 = vmatprep.subr.mxu0 0.0
      %560 = vmatpush2.msra.mxu0 0.0
      %561 = vmatprep.subr.mxu0 0.0
      %562 = vmatpush2.msra.mxu0 0.0
      %563 = vmatprep.subr.mxu0 0.0
      %564 = vmatpush2.msra.mxu0 0.0
      %565 = vmatprep.subr.mxu0 0.0
      %566 = vmatpush2.msra.mxu0 0.0
      %567 = vmatprep.subr.mxu0 0.0
      %568 = vmatpush2.msra.mxu0 0.0
      %569 = vmatprep.subr.mxu0 0.0
      %570 = vmatpush2.msra.mxu0 0.0
      %571 = vmatprep.subr.mxu0 0.0
      %572 = vmatpush2.msra.mxu0 0.0
      %573 = vmatprep.subr.mxu0 0.0
      %574 = vmatpush2.msra.mxu0 0.0
      %575 = vmatprep.subr.mxu0 0.0
      %576 = vmatpush2.msra.mxu0 0.0
      %577 = vmatprep.subr.mxu0 0.0
      %578 = vmatpush2.msra.mxu0 0.0
      %579 = vmatprep.mubr.f32.mxu0 0.0
      %580 = vmatmul.mubr.f32.gmra.mxu0 %v511
      %v581 = vpop.f32.mrf.mxu0
      %v582 = vadd.f32 0.0, %v581
      %v583 = vpop.f32.mrf.mxu0
      %584 = vmatprep.mubr.f32.mxu0 0.0
      %585 = vmatmul.mubr.f32.gmra.mxu0 %v513
      %v586 = vpop.f32.mrf.mxu0
      %v587 = vadd.f32 0.0, %v586
      %v588 = vpop.f32.mrf.mxu0
      %589 = vdwg.mxu0
      %v590 = vadd.f32 %v490, %v582
      %v591 = vadd.f32 %v495, %v587
      %v592 = vld [vmem:[#allocation2 + $0x1] sm:$0xff]
      %v593 = vld [vmem:[#allocation2 + $0x9] sm:$0xff]
      %s594 = scalar_lea.vmem %s1, 192
      %v595 = vld [vmem:[%s594] sm:$0xff]
      %v596 = vld [vmem:[%s594 + $0x8] sm:$0xff]
      %v597 = vld [vmem:[%s594 + $0x10] sm:$0xff]
      %v598 = vld [vmem:[%s594 + $0x18] sm:$0xff]
      %v599 = vld [vmem:[%s594 + $0x20] sm:$0xff]
      %v600 = vld [vmem:[%s594 + $0x28] sm:$0xff]
      %v601 = vld [vmem:[%s594 + $0x30] sm:$0xff]
      %v602 = vld [vmem:[%s594 + $0x38] sm:$0xff]
      %v604 = vsel %vm339, %v592, 0
      %v607 = vsel %vm339, %v593, 0
      %609 = vmatprep.subr.mxu0 0.0
      %610 = vmatpush1.msra.mxu0 0.0
      %611 = vmatprep.subr.mxu0 0.0
      %612 = vmatpush1.msra.mxu0 0.0
      %613 = vmatprep.subr.mxu0 0.0
      %614 = vmatpush1.msra.mxu0 0.0
      %615 = vmatprep.subr.mxu0 0.0
      %616 = vmatpush1.msra.mxu0 0.0
      %617 = vmatprep.subr.mxu0 0.0
      %618 = vmatpush1.msra.mxu0 0.0
      %619 = vmatprep.subr.mxu0 0.0
      %620 = vmatpush1.msra.mxu0 0.0
      %621 = vmatprep.subr.mxu0 0.0
      %622 = vmatpush1.msra.mxu0 0.0
      %623 = vmatprep.subr.mxu0 0.0
      %624 = vmatpush1.msra.mxu0 0.0
      %625 = vmatprep.subr.mxu0 0.0
      %626 = vmatpush1.msra.mxu0 %v602
      %627 = vmatprep.subr.mxu0 0.0
      %628 = vmatpush1.msra.mxu0 %v601
      %629 = vmatprep.subr.mxu0 0.0
      %630 = vmatpush1.msra.mxu0 %v600
      %631 = vmatprep.subr.mxu0 0.0
      %632 = vmatpush1.msra.mxu0 %v599
      %633 = vmatprep.subr.mxu0 0.0
      %634 = vmatpush1.msra.mxu0 %v598
      %635 = vmatprep.subr.mxu0 0.0
      %636 = vmatpush1.msra.mxu0 %v597
      %637 = vmatprep.subr.mxu0 0.0
      %638 = vmatpush1.msra.mxu0 %v596
      %639 = vmatprep.subr.mxu0 0.0
      %640 = vmatpush1.msra.mxu0 %v595
      %641 = vmatprep.subr.mxu0 0.0
      %642 = vmatpush2.msra.mxu0 0.0
      %643 = vmatprep.subr.mxu0 0.0
      %644 = vmatpush2.msra.mxu0 0.0
      %645 = vmatprep.subr.mxu0 0.0
      %646 = vmatpush2.msra.mxu0 0.0
      %647 = vmatprep.subr.mxu0 0.0
      %648 = vmatpush2.msra.mxu0 0.0
      %649 = vmatprep.subr.mxu0 0.0
      %650 = vmatpush2.msra.mxu0 0.0
      %651 = vmatprep.subr.mxu0 0.0
      %652 = vmatpush2.msra.mxu0 0.0
      %653 = vmatprep.subr.mxu0 0.0
      %654 = vmatpush2.msra.mxu0 0.0
      %655 = vmatprep.subr.mxu0 0.0
      %656 = vmatpush2.msra.mxu0 0.0
      %657 = vmatprep.subr.mxu0 0.0
      %658 = vmatpush2.msra.mxu0 0.0
      %659 = vmatprep.subr.mxu0 0.0
      %660 = vmatpush2.msra.mxu0 0.0
      %661 = vmatprep.subr.mxu0 0.0
      %662 = vmatpush2.msra.mxu0 0.0
      %663 = vmatprep.subr.mxu0 0.0
      %664 = vmatpush2.msra.mxu0 0.0
      %665 = vmatprep.subr.mxu0 0.0
      %666 = vmatpush2.msra.mxu0 0.0
      %667 = vmatprep.subr.mxu0 0.0
      %668 = vmatpush2.msra.mxu0 0.0
      %669 = vmatprep.subr.mxu0 0.0
      %670 = vmatpush2.msra.mxu0 0.0
      %671 = vmatprep.subr.mxu0 0.0
      %672 = vmatpush2.msra.mxu0 0.0
      %673 = vmatprep.mubr.f32.mxu0 0.0
      %674 = vmatmul.mubr.f32.gmra.mxu0 %v604
      %v675 = vpop.f32.mrf.mxu0
      %v676 = vadd.f32 0.0, %v675
      %v677 = vpop.f32.mrf.mxu0
      %678 = vmatprep.mubr.f32.mxu0 0.0
      %679 = vmatmul.mubr.f32.gmra.mxu0 %v607
      %v680 = vpop.f32.mrf.mxu0
      %v681 = vadd.f32 0.0, %v680
      %v682 = vpop.f32.mrf.mxu0
      %683 = vdwg.mxu0
      %v684 = vadd.f32 %v590, %v676
      %v685 = vadd.f32 %v591, %v681
      %s686 = scalar_lea.vmem %s1, 256
      %v687 = vld [vmem:[%s686] sm:$0xff]
      %v688 = vld [vmem:[%s686 + $0x8] sm:$0xff]
      %v689 = vld [vmem:[%s686 + $0x10] sm:$0xff]
      %v690 = vld [vmem:[%s686 + $0x18] sm:$0xff]
      %v691 = vld [vmem:[%s686 + $0x20] sm:$0xff]
      %v692 = vld [vmem:[%s686 + $0x28] sm:$0xff]
      %v693 = vld [vmem:[%s686 + $0x30] sm:$0xff]
      %v694 = vld [vmem:[%s686 + $0x38] sm:$0xff]
      %695 = vrot.lane.b32.xlu0 %v592, 124
      %v696 = vpop.permute.xlu0 %695
      %697 = vrot.lane.b32.xlu0 %v593, 124
      %v698 = vpop.permute.xlu0 %697
      %v699 = vsel %vm339, %v696, 0
      %v701 = vsel %vm339, %v698, 0
      %703 = vmatprep.subr.mxu0 0.0
      %704 = vmatpush1.msra.mxu0 0.0
      %705 = vmatprep.subr.mxu0 0.0
      %706 = vmatpush1.msra.mxu0 0.0
      %707 = vmatprep.subr.mxu0 0.0
      %708 = vmatpush1.msra.mxu0 0.0
      %709 = vmatprep.subr.mxu0 0.0
      %710 = vmatpush1.msra.mxu0 0.0
      %711 = vmatprep.subr.mxu0 0.0
      %712 = vmatpush1.msra.mxu0 0.0
      %713 = vmatprep.subr.mxu0 0.0
      %714 = vmatpush1.msra.mxu0 0.0
      %715 = vmatprep.subr.mxu0 0.0
      %716 = vmatpush1.msra.mxu0 0.0
      %717 = vmatprep.subr.mxu0 0.0
      %718 = vmatpush1.msra.mxu0 0.0
      %719 = vmatprep.subr.mxu0 0.0
      %720 = vmatpush1.msra.mxu0 %v694
      %721 = vmatprep.subr.mxu0 0.0
      %722 = vmatpush1.msra.mxu0 %v693
      %723 = vmatprep.subr.mxu0 0.0
      %724 = vmatpush1.msra.mxu0 %v692
      %725 = vmatprep.subr.mxu0 0.0
      %726 = vmatpush1.msra.mxu0 %v691
      %727 = vmatprep.subr.mxu0 0.0
      %728 = vmatpush1.msra.mxu0 %v690
      %729 = vmatprep.subr.mxu0 0.0
      %730 = vmatpush1.msra.mxu0 %v689
      %731 = vmatprep.subr.mxu0 0.0
      %732 = vmatpush1.msra.mxu0 %v688
      %733 = vmatprep.subr.mxu0 0.0
      %734 = vmatpush1.msra.mxu0 %v687
      %735 = vmatprep.subr.mxu0 0.0
      %736 = vmatpush2.msra.mxu0 0.0
      %737 = vmatprep.subr.mxu0 0.0
      %738 = vmatpush2.msra.mxu0 0.0
      %739 = vmatprep.subr.mxu0 0.0
      %740 = vmatpush2.msra.mxu0 0.0
      %741 = vmatprep.subr.mxu0 0.0
      %742 = vmatpush2.msra.mxu0 0.0
      %743 = vmatprep.subr.mxu0 0.0
      %744 = vmatpush2.msra.mxu0 0.0
      %745 = vmatprep.subr.mxu0 0.0
      %746 = vmatpush2.msra.mxu0 0.0
      %747 = vmatprep.subr.mxu0 0.0
      %748 = vmatpush2.msra.mxu0 0.0
      %749 = vmatprep.subr.mxu0 0.0
      %750 = vmatpush2.msra.mxu0 0.0
      %751 = vmatprep.subr.mxu0 0.0
      %752 = vmatpush2.msra.mxu0 0.0
      %753 = vmatprep.subr.mxu0 0.0
      %754 = vmatpush2.msra.mxu0 0.0
      %755 = vmatprep.subr.mxu0 0.0
      %756 = vmatpush2.msra.mxu0 0.0
      %757 = vmatprep.subr.mxu0 0.0
      %758 = vmatpush2.msra.mxu0 0.0
      %759 = vmatprep.subr.mxu0 0.0
      %760 = vmatpush2.msra.mxu0 0.0
      %761 = vmatprep.subr.mxu0 0.0
      %762 = vmatpush2.msra.mxu0 0.0
      %763 = vmatprep.subr.mxu0 0.0
      %764 = vmatpush2.msra.mxu0 0.0
      %765 = vmatprep.subr.mxu0 0.0
      %766 = vmatpush2.msra.mxu0 0.0
      %767 = vmatprep.mubr.f32.mxu0 0.0
      %768 = vmatmul.mubr.f32.gmra.mxu0 %v699
      %v769 = vpop.f32.mrf.mxu0
      %v770 = vadd.f32 0.0, %v769
      %v771 = vpop.f32.mrf.mxu0
      %772 = vmatprep.mubr.f32.mxu0 0.0
      %773 = vmatmul.mubr.f32.gmra.mxu0 %v701
      %v774 = vpop.f32.mrf.mxu0
      %v775 = vadd.f32 0.0, %v774
      %v776 = vpop.f32.mrf.mxu0
      %777 = vdwg.mxu0
      %v778 = vadd.f32 %v684, %v770
      %v779 = vadd.f32 %v685, %v775
      %s780 = scalar_lea.vmem %s1, 320
      %v781 = vld [vmem:[%s780] sm:$0xff]
      %v782 = vld [vmem:[%s780 + $0x8] sm:$0xff]
      %v783 = vld [vmem:[%s780 + $0x10] sm:$0xff]
      %v784 = vld [vmem:[%s780 + $0x18] sm:$0xff]
      %v785 = vld [vmem:[%s780 + $0x20] sm:$0xff]
      %v786 = vld [vmem:[%s780 + $0x28] sm:$0xff]
      %v787 = vld [vmem:[%s780 + $0x30] sm:$0xff]
      %v788 = vld [vmem:[%s780 + $0x38] sm:$0xff]
      %789 = vrot.lane.b32.xlu0 %v592, 120
      %v790 = vpop.permute.xlu0 %789
      %791 = vrot.lane.b32.xlu0 %v593, 120
      %v792 = vpop.permute.xlu0 %791
      %v793 = vsel %vm339, %v790, 0
      %v795 = vsel %vm339, %v792, 0
      %797 = vmatprep.subr.mxu0 0.0
      %798 = vmatpush1.msra.mxu0 0.0
      %799 = vmatprep.subr.mxu0 0.0
      %800 = vmatpush1.msra.mxu0 0.0
      %801 = vmatprep.subr.mxu0 0.0
      %802 = vmatpush1.msra.mxu0 0.0
      %803 = vmatprep.subr.mxu0 0.0
      %804 = vmatpush1.msra.mxu0 0.0
      %805 = vmatprep.subr.mxu0 0.0
      %806 = vmatpush1.msra.mxu0 0.0
      %807 = vmatprep.subr.mxu0 0.0
      %808 = vmatpush1.msra.mxu0 0.0
      %809 = vmatprep.subr.mxu0 0.0
      %810 = vmatpush1.msra.mxu0 0.0
      %811 = vmatprep.subr.mxu0 0.0
      %812 = vmatpush1.msra.mxu0 0.0
      %813 = vmatprep.subr.mxu0 0.0
      %814 = vmatpush1.msra.mxu0 %v788
      %815 = vmatprep.subr.mxu0 0.0
      %816 = vmatpush1.msra.mxu0 %v787
      %817 = vmatprep.subr.mxu0 0.0
      %818 = vmatpush1.msra.mxu0 %v786
      %819 = vmatprep.subr.mxu0 0.0
      %820 = vmatpush1.msra.mxu0 %v785
      %821 = vmatprep.subr.mxu0 0.0
      %822 = vmatpush1.msra.mxu0 %v784
      %823 = vmatprep.subr.mxu0 0.0
      %824 = vmatpush1.msra.mxu0 %v783
      %825 = vmatprep.subr.mxu0 0.0
      %826 = vmatpush1.msra.mxu0 %v782
      %827 = vmatprep.subr.mxu0 0.0
      %828 = vmatpush1.msra.mxu0 %v781
      %829 = vmatprep.subr.mxu0 0.0
      %830 = vmatpush2.msra.mxu0 0.0
      %831 = vmatprep.subr.mxu0 0.0
      %832 = vmatpush2.msra.mxu0 0.0
      %833 = vmatprep.subr.mxu0 0.0
      %834 = vmatpush2.msra.mxu0 0.0
      %835 = vmatprep.subr.mxu0 0.0
      %836 = vmatpush2.msra.mxu0 0.0
      %837 = vmatprep.subr.mxu0 0.0
      %838 = vmatpush2.msra.mxu0 0.0
      %839 = vmatprep.subr.mxu0 0.0
      %840 = vmatpush2.msra.mxu0 0.0
      %841 = vmatprep.subr.mxu0 0.0
      %842 = vmatpush2.msra.mxu0 0.0
      %843 = vmatprep.subr.mxu0 0.0
      %844 = vmatpush2.msra.mxu0 0.0
      %845 = vmatprep.subr.mxu0 0.0
      %846 = vmatpush2.msra.mxu0 0.0
      %847 = vmatprep.subr.mxu0 0.0
      %848 = vmatpush2.msra.mxu0 0.0
      %849 = vmatprep.subr.mxu0 0.0
      %850 = vmatpush2.msra.mxu0 0.0
      %851 = vmatprep.subr.mxu0 0.0
      %852 = vmatpush2.msra.mxu0 0.0
      %853 = vmatprep.subr.mxu0 0.0
      %854 = vmatpush2.msra.mxu0 0.0
      %855 = vmatprep.subr.mxu0 0.0
      %856 = vmatpush2.msra.mxu0 0.0
      %857 = vmatprep.subr.mxu0 0.0
      %858 = vmatpush2.msra.mxu0 0.0
      %859 = vmatprep.subr.mxu0 0.0
      %860 = vmatpush2.msra.mxu0 0.0
      %861 = vmatprep.mubr.f32.mxu0 0.0
      %862 = vmatmul.mubr.f32.gmra.mxu0 %v793
      %v863 = vpop.f32.mrf.mxu0
      %v864 = vadd.f32 0.0, %v863
      %v865 = vpop.f32.mrf.mxu0
      %866 = vmatprep.mubr.f32.mxu0 0.0
      %867 = vmatmul.mubr.f32.gmra.mxu0 %v795
      %v868 = vpop.f32.mrf.mxu0
      %v869 = vadd.f32 0.0, %v868
      %v870 = vpop.f32.mrf.mxu0
      %871 = vdwg.mxu0
      %v872 = vadd.f32 %v778, %v864
      %v873 = vadd.f32 %v779, %v869
      %v874 = vld [vmem:[#allocation2 + $0x2] sm:$0xff]
      %v875 = vld [vmem:[#allocation2 + $0xa] sm:$0xff]
      %s876 = scalar_lea.vmem %s1, 384
      %v877 = vld [vmem:[%s876] sm:$0xff]
      %v878 = vld [vmem:[%s876 + $0x8] sm:$0xff]
      %v879 = vld [vmem:[%s876 + $0x10] sm:$0xff]
      %v880 = vld [vmem:[%s876 + $0x18] sm:$0xff]
      %v881 = vld [vmem:[%s876 + $0x20] sm:$0xff]
      %v882 = vld [vmem:[%s876 + $0x28] sm:$0xff]
      %v883 = vld [vmem:[%s876 + $0x30] sm:$0xff]
      %v884 = vld [vmem:[%s876 + $0x38] sm:$0xff]
      %v886 = vsel %vm339, %v874, 0
      %v889 = vsel %vm339, %v875, 0
      %891 = vmatprep.subr.mxu0 0.0
      %892 = vmatpush1.msra.mxu0 0.0
      %893 = vmatprep.subr.mxu0 0.0
      %894 = vmatpush1.msra.mxu0 0.0
      %895 = vmatprep.subr.mxu0 0.0
      %896 = vmatpush1.msra.mxu0 0.0
      %897 = vmatprep.subr.mxu0 0.0
      %898 = vmatpush1.msra.mxu0 0.0
      %899 = vmatprep.subr.mxu0 0.0
      %900 = vmatpush1.msra.mxu0 0.0
      %901 = vmatprep.subr.mxu0 0.0
      %902 = vmatpush1.msra.mxu0 0.0
      %903 = vmatprep.subr.mxu0 0.0
      %904 = vmatpush1.msra.mxu0 0.0
      %905 = vmatprep.subr.mxu0 0.0
      %906 = vmatpush1.msra.mxu0 0.0
      %907 = vmatprep.subr.mxu0 0.0
      %908 = vmatpush1.msra.mxu0 %v884
      %909 = vmatprep.subr.mxu0 0.0
      %910 = vmatpush1.msra.mxu0 %v883
      %911 = vmatprep.subr.mxu0 0.0
      %912 = vmatpush1.msra.mxu0 %v882
      %913 = vmatprep.subr.mxu0 0.0
      %914 = vmatpush1.msra.mxu0 %v881
      %915 = vmatprep.subr.mxu0 0.0
      %916 = vmatpush1.msra.mxu0 %v880
      %917 = vmatprep.subr.mxu0 0.0
      %918 = vmatpush1.msra.mxu0 %v879
      %919 = vmatprep.subr.mxu0 0.0
      %920 = vmatpush1.msra.mxu0 %v878
      %921 = vmatprep.subr.mxu0 0.0
      %922 = vmatpush1.msra.mxu0 %v877
      %923 = vmatprep.subr.mxu0 0.0
      %924 = vmatpush2.msra.mxu0 0.0
      %925 = vmatprep.subr.mxu0 0.0
      %926 = vmatpush2.msra.mxu0 0.0
      %927 = vmatprep.subr.mxu0 0.0
      %928 = vmatpush2.msra.mxu0 0.0
      %929 = vmatprep.subr.mxu0 0.0
      %930 = vmatpush2.msra.mxu0 0.0
      %931 = vmatprep.subr.mxu0 0.0
      %932 = vmatpush2.msra.mxu0 0.0
      %933 = vmatprep.subr.mxu0 0.0
      %934 = vmatpush2.msra.mxu0 0.0
      %935 = vmatprep.subr.mxu0 0.0
      %936 = vmatpush2.msra.mxu0 0.0
      %937 = vmatprep.subr.mxu0 0.0
      %938 = vmatpush2.msra.mxu0 0.0
      %939 = vmatprep.subr.mxu0 0.0
      %940 = vmatpush2.msra.mxu0 0.0
      %941 = vmatprep.subr.mxu0 0.0
      %942 = vmatpush2.msra.mxu0 0.0
      %943 = vmatprep.subr.mxu0 0.0
      %944 = vmatpush2.msra.mxu0 0.0
      %945 = vmatprep.subr.mxu0 0.0
      %946 = vmatpush2.msra.mxu0 0.0
      %947 = vmatprep.subr.mxu0 0.0
      %948 = vmatpush2.msra.mxu0 0.0
      %949 = vmatprep.subr.mxu0 0.0
      %950 = vmatpush2.msra.mxu0 0.0
      %951 = vmatprep.subr.mxu0 0.0
      %952 = vmatpush2.msra.mxu0 0.0
      %953 = vmatprep.subr.mxu0 0.0
      %954 = vmatpush2.msra.mxu0 0.0
      %955 = vmatprep.mubr.f32.mxu0 0.0
      %956 = vmatmul.mubr.f32.gmra.mxu0 %v886
      %v957 = vpop.f32.mrf.mxu0
      %v958 = vadd.f32 0.0, %v957
      %v959 = vpop.f32.mrf.mxu0
      %960 = vmatprep.mubr.f32.mxu0 0.0
      %961 = vmatmul.mubr.f32.gmra.mxu0 %v889
      %v962 = vpop.f32.mrf.mxu0
      %v963 = vadd.f32 0.0, %v962
      %v964 = vpop.f32.mrf.mxu0
      %965 = vdwg.mxu0
      %v966 = vadd.f32 %v872, %v958
      %v967 = vadd.f32 %v873, %v963
      %s968 = scalar_lea.vmem %s1, 448
      %v969 = vld [vmem:[%s968] sm:$0xff]
      %v970 = vld [vmem:[%s968 + $0x8] sm:$0xff]
      %v971 = vld [vmem:[%s968 + $0x10] sm:$0xff]
      %v972 = vld [vmem:[%s968 + $0x18] sm:$0xff]
      %v973 = vld [vmem:[%s968 + $0x20] sm:$0xff]
      %v974 = vld [vmem:[%s968 + $0x28] sm:$0xff]
      %v975 = vld [vmem:[%s968 + $0x30] sm:$0xff]
      %v976 = vld [vmem:[%s968 + $0x38] sm:$0xff]
      %977 = vrot.lane.b32.xlu0 %v874, 124
      %v978 = vpop.permute.xlu0 %977
      %979 = vrot.lane.b32.xlu0 %v875, 124
      %v980 = vpop.permute.xlu0 %979
      %v981 = vsel %vm339, %v978, 0
      %v983 = vsel %vm339, %v980, 0
      %985 = vmatprep.subr.mxu0 0.0
      %986 = vmatpush1.msra.mxu0 0.0
      %987 = vmatprep.subr.mxu0 0.0
      %988 = vmatpush1.msra.mxu0 0.0
      %989 = vmatprep.subr.mxu0 0.0
      %990 = vmatpush1.msra.mxu0 0.0
      %991 = vmatprep.subr.mxu0 0.0
      %992 = vmatpush1.msra.mxu0 0.0
      %993 = vmatprep.subr.mxu0 0.0
      %994 = vmatpush1.msra.mxu0 0.0
      %995 = vmatprep.subr.mxu0 0.0
      %996 = vmatpush1.msra.mxu0 0.0
      %997 = vmatprep.subr.mxu0 0.0
      %998 = vmatpush1.msra.mxu0 0.0
      %999 = vmatprep.subr.mxu0 0.0
      %1000 = vmatpush1.msra.mxu0 0.0
      %1001 = vmatprep.subr.mxu0 0.0
      %1002 = vmatpush1.msra.mxu0 %v976
      %1003 = vmatprep.subr.mxu0 0.0
      %1004 = vmatpush1.msra.mxu0 %v975
      %1005 = vmatprep.subr.mxu0 0.0
      %1006 = vmatpush1.msra.mxu0 %v974
      %1007 = vmatprep.subr.mxu0 0.0
      %1008 = vmatpush1.msra.mxu0 %v973
      %1009 = vmatprep.subr.mxu0 0.0
      %1010 = vmatpush1.msra.mxu0 %v972
      %1011 = vmatprep.subr.mxu0 0.0
      %1012 = vmatpush1.msra.mxu0 %v971
      %1013 = vmatprep.subr.mxu0 0.0
      %1014 = vmatpush1.msra.mxu0 %v970
      %1015 = vmatprep.subr.mxu0 0.0
      %1016 = vmatpush1.msra.mxu0 %v969
      %1017 = vmatprep.subr.mxu0 0.0
      %1018 = vmatpush2.msra.mxu0 0.0
      %1019 = vmatprep.subr.mxu0 0.0
      %1020 = vmatpush2.msra.mxu0 0.0
      %1021 = vmatprep.subr.mxu0 0.0
      %1022 = vmatpush2.msra.mxu0 0.0
      %1023 = vmatprep.subr.mxu0 0.0
      %1024 = vmatpush2.msra.mxu0 0.0
      %1025 = vmatprep.subr.mxu0 0.0
      %1026 = vmatpush2.msra.mxu0 0.0
      %1027 = vmatprep.subr.mxu0 0.0
      %1028 = vmatpush2.msra.mxu0 0.0
      %1029 = vmatprep.subr.mxu0 0.0
      %1030 = vmatpush2.msra.mxu0 0.0
      %1031 = vmatprep.subr.mxu0 0.0
      %1032 = vmatpush2.msra.mxu0 0.0
      %1033 = vmatprep.subr.mxu0 0.0
      %1034 = vmatpush2.msra.mxu0 0.0
      %1035 = vmatprep.subr.mxu0 0.0
      %1036 = vmatpush2.msra.mxu0 0.0
      %1037 = vmatprep.subr.mxu0 0.0
      %1038 = vmatpush2.msra.mxu0 0.0
      %1039 = vmatprep.subr.mxu0 0.0
      %1040 = vmatpush2.msra.mxu0 0.0
      %1041 = vmatprep.subr.mxu0 0.0
      %1042 = vmatpush2.msra.mxu0 0.0
      %1043 = vmatprep.subr.mxu0 0.0
      %1044 = vmatpush2.msra.mxu0 0.0
      %1045 = vmatprep.subr.mxu0 0.0
      %1046 = vmatpush2.msra.mxu0 0.0
      %1047 = vmatprep.subr.mxu0 0.0
      %1048 = vmatpush2.msra.mxu0 0.0
      %1049 = vmatprep.mubr.f32.mxu0 0.0
      %1050 = vmatmul.mubr.f32.gmra.mxu0 %v981
      %v1051 = vpop.f32.mrf.mxu0
      %v1052 = vadd.f32 0.0, %v1051
      %v1053 = vpop.f32.mrf.mxu0
      %1054 = vmatprep.mubr.f32.mxu0 0.0
      %1055 = vmatmul.mubr.f32.gmra.mxu0 %v983
      %v1056 = vpop.f32.mrf.mxu0
      %v1057 = vadd.f32 0.0, %v1056
      %v1058 = vpop.f32.mrf.mxu0
      %1059 = vdwg.mxu0
      %v1060 = vadd.f32 %v966, %v1052
      %v1061 = vadd.f32 %v967, %v1057
      %s1062 = scalar_lea.vmem %s1, 512
      %v1063 = vld [vmem:[%s1062] sm:$0xff]
      %v1064 = vld [vmem:[%s1062 + $0x8] sm:$0xff]
      %v1065 = vld [vmem:[%s1062 + $0x10] sm:$0xff]
      %v1066 = vld [vmem:[%s1062 + $0x18] sm:$0xff]
      %v1067 = vld [vmem:[%s1062 + $0x20] sm:$0xff]
      %v1068 = vld [vmem:[%s1062 + $0x28] sm:$0xff]
      %v1069 = vld [vmem:[%s1062 + $0x30] sm:$0xff]
      %v1070 = vld [vmem:[%s1062 + $0x38] sm:$0xff]
      %1071 = vrot.lane.b32.xlu0 %v874, 120
      %v1072 = vpop.permute.xlu0 %1071
      %1073 = vrot.lane.b32.xlu0 %v875, 120
      %v1074 = vpop.permute.xlu0 %1073
      %v1075 = vsel %vm339, %v1072, 0
      %v1077 = vsel %vm339, %v1074, 0
      %1079 = vmatprep.subr.mxu0 0.0
      %1080 = vmatpush1.msra.mxu0 0.0
      %1081 = vmatprep.subr.mxu0 0.0
      %1082 = vmatpush1.msra.mxu0 0.0
      %1083 = vmatprep.subr.mxu0 0.0
      %1084 = vmatpush1.msra.mxu0 0.0
      %1085 = vmatprep.subr.mxu0 0.0
      %1086 = vmatpush1.msra.mxu0 0.0
      %1087 = vmatprep.subr.mxu0 0.0
      %1088 = vmatpush1.msra.mxu0 0.0
      %1089 = vmatprep.subr.mxu0 0.0
      %1090 = vmatpush1.msra.mxu0 0.0
      %1091 = vmatprep.subr.mxu0 0.0
      %1092 = vmatpush1.msra.mxu0 0.0
      %1093 = vmatprep.subr.mxu0 0.0
      %1094 = vmatpush1.msra.mxu0 0.0
      %1095 = vmatprep.subr.mxu0 0.0
      %1096 = vmatpush1.msra.mxu0 %v1070
      %1097 = vmatprep.subr.mxu0 0.0
      %1098 = vmatpush1.msra.mxu0 %v1069
      %1099 = vmatprep.subr.mxu0 0.0
      %1100 = vmatpush1.msra.mxu0 %v1068
      %1101 = vmatprep.subr.mxu0 0.0
      %1102 = vmatpush1.msra.mxu0 %v1067
      %1103 = vmatprep.subr.mxu0 0.0
      %1104 = vmatpush1.msra.mxu0 %v1066
      %1105 = vmatprep.subr.mxu0 0.0
      %1106 = vmatpush1.msra.mxu0 %v1065
      %1107 = vmatprep.subr.mxu0 0.0
      %1108 = vmatpush1.msra.mxu0 %v1064
      %1109 = vmatprep.subr.mxu0 0.0
      %1110 = vmatpush1.msra.mxu0 %v1063
      %1111 = vmatprep.subr.mxu0 0.0
      %1112 = vmatpush2.msra.mxu0 0.0
      %1113 = vmatprep.subr.mxu0 0.0
      %1114 = vmatpush2.msra.mxu0 0.0
      %1115 = vmatprep.subr.mxu0 0.0
      %1116 = vmatpush2.msra.mxu0 0.0
      %1117 = vmatprep.subr.mxu0 0.0
      %1118 = vmatpush2.msra.mxu0 0.0
      %1119 = vmatprep.subr.mxu0 0.0
      %1120 = vmatpush2.msra.mxu0 0.0
      %1121 = vmatprep.subr.mxu0 0.0
      %1122 = vmatpush2.msra.mxu0 0.0
      %1123 = vmatprep.subr.mxu0 0.0
      %1124 = vmatpush2.msra.mxu0 0.0
      %1125 = vmatprep.subr.mxu0 0.0
      %1126 = vmatpush2.msra.mxu0 0.0
      %1127 = vmatprep.subr.mxu0 0.0
      %1128 = vmatpush2.msra.mxu0 0.0
      %1129 = vmatprep.subr.mxu0 0.0
      %1130 = vmatpush2.msra.mxu0 0.0
      %1131 = vmatprep.subr.mxu0 0.0
      %1132 = vmatpush2.msra.mxu0 0.0
      %1133 = vmatprep.subr.mxu0 0.0
      %1134 = vmatpush2.msra.mxu0 0.0
      %1135 = vmatprep.subr.mxu0 0.0
      %1136 = vmatpush2.msra.mxu0 0.0
      %1137 = vmatprep.subr.mxu0 0.0
      %1138 = vmatpush2.msra.mxu0 0.0
      %1139 = vmatprep.subr.mxu0 0.0
      %1140 = vmatpush2.msra.mxu0 0.0
      %1141 = vmatprep.subr.mxu0 0.0
      %1142 = vmatpush2.msra.mxu0 0.0
      %1143 = vmatprep.mubr.f32.mxu0 0.0
      %1144 = vmatmul.mubr.f32.gmra.mxu0 %v1075
      %v1145 = vpop.f32.mrf.mxu0
      %v1146 = vadd.f32 0.0, %v1145
      %v1147 = vpop.f32.mrf.mxu0
      %1148 = vmatprep.mubr.f32.mxu0 0.0
      %1149 = vmatmul.mubr.f32.gmra.mxu0 %v1077
      %v1150 = vpop.f32.mrf.mxu0
      %v1151 = vadd.f32 0.0, %v1150
      %v1152 = vpop.f32.mrf.mxu0
      %1153 = vdwg.mxu0
      %v1154 = vadd.f32 %v1060, %v1146
      %v1155 = vadd.f32 %v1061, %v1151
      %v1156 = vld [vmem:[%s2] sm:$0x1]
      %v1158 = vlaneseq
      %v1159 = vshrl.u32 %v1158, 7
      %v1160 = vsub.s32 0, %v1159
      %v1161 = vrot.slane %v1156, %v1160
      %v1163 = vadd.f32 %v1154, %v1161
      %v1164 = vadd.f32 %v1155, %v1161
      %1165 = vst [vmem:[%s289] sm:$0xff] %v1163
      %1166 = vst [vmem:[%s289 + $0x8] sm:$0xff] %v1164
      %v1167 = vadd.f32 %v1163, %v1164
      %v1168 = vrot.slane %v1167, 4
      %v1169 = vadd.f32 %v1167, %v1168
      %v1170 = vrot.slane %v1169, 2
      %v1171 = vadd.f32 %v1169, %v1170
      %v1172 = vrot.slane %v1171, 1
      %v1173 = vadd.f32 %v1171, %v1172
      %1174 = vst [vmem:[%s292] sm:$0x1] %v1173
      %v1175 = vmul.f32 %v1163, %v1163
      %v1176 = vmul.f32 %v1164, %v1164
      %v1177 = vadd.f32 %v1175, %v1176
      %v1178 = vrot.slane %v1177, 4
      %v1179 = vadd.f32 %v1177, %v1178
      %v1180 = vrot.slane %v1179, 2
      %v1181 = vadd.f32 %v1179, %v1180
      %v1182 = vrot.slane %v1181, 1
      %v1183 = vadd.f32 %v1181, %v1182
      %1184 = vst [vmem:[%s295] sm:$0x1] %v1183
      %p1185 = scmp.lt.s32.totalorder %s19, 1
      %s1186 = scalar_select %p1185, %s19, 1
      %s1187 = smul.addr %s1186, 2
      %s1188 = smul.addr %s1187, 8
      %s1189 = scalar_lea.vmem %s5, %s1188
      %p1190 = scmp.lt.s32.totalorder %s19, 1
      %s1191 = scalar_select %p1190, %s19, 1
      %s1192 = scalar_lea.vmem %s6, %s1191
      %p1193 = scmp.lt.s32.totalorder %s19, 1
      %s1194 = scalar_select %p1193, %s19, 1
      %s1195 = scalar_lea.vmem %s7, %s1194
      // Predicated region
      $region41: #{decoder_block.3} parent=39 // pred_check
        %p1196 = pneg %p147
      $region42: #{decoder_block.3} parent=39 // pred_check_branch
        %1198 = sbr.rel (%p1196) target = $region44
      $region43: #{decoder_block.3} parent=39 // pred_region
        _
      $region44: #{decoder_block.3} parent=39 // pred_fallthru
        _
      // Predicated region
      $region45: #{decoder_block.3} parent=39 // pred_check
        %p1199 = pneg %p173
      $region46: #{decoder_block.3} parent=39 // pred_check_branch
        %1201 = sbr.rel (%p1199) target = $region48
      $region47: #{decoder_block.3} parent=39 // pred_region
        _
      $region48: #{decoder_block.3} parent=39 // pred_fallthru
        _
      // Predicated region
      $region49: #{decoder_block.3} parent=39 // pred_check
        %p1202 = pneg %p199
      $region50: #{decoder_block.3} parent=39 // pred_check_branch
        %1204 = sbr.rel (%p1202) target = $region52
      $region51: #{decoder_block.3} parent=39 // pred_region
        _
      $region52: #{decoder_block.3} parent=39 // pred_fallthru
        _
    $region40: #{decoder_block.3} parent=5 // pred_fallthru
      _
    %p1205 = scmp.le.s32.totalorder 2, %s14
    // Predicated region
    $region53: #{decoder_block.3} parent=5 // pred_check
      %p1206 = pneg %p1205
    $region54: #{decoder_block.3} parent=5 // pred_check_branch
      %1208 = sbr.rel (%p1206) target = $region56
    $region55: #{decoder_block.3} parent=5 // pred_region
      %s1209 = ssub.s32 %s14, 2
      // Predicated region
      $region57: #{decoder_block.3} parent=55 // pred_check
        %p1210 = pneg %p153
      $region58: #{decoder_block.3} parent=55 // pred_check_branch
        %1212 = sbr.rel (%p1210) target = $region60
      $region59: #{decoder_block.3} parent=55 // pred_region
        %p1213 = scmp.lt.s32.totalorder %s20, 1
        %s1214 = scalar_select %p1213, %s20, 1
        %s1215 = smul.addr %s1214, 2
        %s1216 = smul.addr %s1215, 8
        %s1217 = scalar_lea.vmem %s5, %s1216
      $region60: #{decoder_block.3} parent=55 // pred_fallthru
        _
      // Predicated region
      $region61: #{decoder_block.3} parent=55 // pred_check
        %p1218 = pneg %p179
      $region62: #{decoder_block.3} parent=55 // pred_check_branch
        %1220 = sbr.rel (%p1218) target = $region64
      $region63: #{decoder_block.3} parent=55 // pred_region
        %p1221 = scmp.lt.s32.totalorder %s20, 1
        %s1222 = scalar_select %p1221, %s20, 1
        %s1223 = scalar_lea.vmem %s6, %s1222
      $region64: #{decoder_block.3} parent=55 // pred_fallthru
        _
      // Predicated region
      $region65: #{decoder_block.3} parent=55 // pred_check
        %p1224 = pneg %p205
      $region66: #{decoder_block.3} parent=55 // pred_check_branch
        %1226 = sbr.rel (%p1224) target = $region68
      $region67: #{decoder_block.3} parent=55 // pred_region
        %p1227 = scmp.lt.s32.totalorder %s20, 1
        %s1228 = scalar_select %p1227, %s20, 1
        %s1229 = scalar_lea.vmem %s7, %s1228
      $region68: #{decoder_block.3} parent=55 // pred_fallthru
        _
    $region56: #{decoder_block.3} parent=5 // pred_fallthru
      _
  $region6: #{decoder_block.3} parent=0 // loop_footer
    %s18 = sadd.s32 1, %s14
  $region7: #{decoder_block.3} parent=0 // loop_footer_branch
    %13 = sbr.rel target = $region3
  $region8: #{decoder_block.3} parent=0 // loop_exit
    _

// kernel: decoder_block.4
$region0: #{decoder_block.4}
  #allocation0 [shape = 'u32[]', space=smem, size = 0x4, offset = 0x4, fixed_abs, tag = 'smem constant byte address 0x4 - core index']
  #allocation1 [shape = 'u32[144,128]{1,0:T(1,128)}', space=vmem, size = 0x12000, scoped, tag = 'internal scratch']
  #allocation2 [shape = 'f32[18,144]{1,0:T(8,128)}', space=vmem, size = 0x6000, scoped, tag = 'scratch operand']
  %s0 = inlined_call_operand.vmem [shape: f32[2,16,128], index: 0, kind: input, shape index: {}]
  %s1 = inlined_call_operand.vmem [shape: f32[9,128,128], index: 1, kind: input, shape index: {}]
  %s2 = inlined_call_operand.vmem [shape: f32[1,128], index: 2, kind: input, shape index: {}]
  %s3 = inlined_call_operand.vmem [shape: f32[1,128], index: 3, kind: input, shape index: {}]
  %s4 = inlined_call_operand.vmem [shape: f32[1,128], index: 4, kind: input, shape index: {}]
  %s5 = inlined_call_operand.vmem [shape: f32[2,16,128], index: 5, kind: output, shape index: {0}]
  %s6 = inlined_call_operand.vmem [shape: f32[2,1,128], index: 6, kind: output, shape index: {1}]
  %s7 = inlined_call_operand.vmem [shape: f32[2,1,128], index: 7, kind: output, shape index: {2}]
  %8 = xla_tuple %s5, %s6, %s7
  %s9 = sld [smem:[#allocation0]]
  $region69: #{decoder_block.4} parent=0
    _
  %s11 = ssub.s32 1, %s9
  %s12 = scalar_select 0, %s11, %s9
  loop: start=0, step=1, limit=4
  $region2: #{decoder_block.4} parent=0 // loop_pre_header
    _
  $region3: #{decoder_block.4} parent=0 // loop_header
    %s14 = sphi 0, %s18
    %p15 = scmp.ge.s32.totalorder %s14, 4
    %s24 = sphi 0, %s26
    %s27 = sphi 0, %s24
    %s28 = sphi 0, %s27
    %s44 = sphi 0, %s28
    %s48 = sphi 0, %s48
    %s50 = sphi 0, %s48
    %s51 = sphi 0, %s50
    %s65 = sphi 0, %s51
    %s69 = sphi 0, %s69
    %s71 = sphi 0, %s69
    %s72 = sphi 0, %s71
    %s86 = sphi 0, %s72
    %s90 = sphi 0, %s90
    %s92 = sphi 0, %s90
    %s93 = sphi 0, %s92
    %s107 = sphi 0, %s93
    %s111 = sphi 0, %s111
    %s113 = sphi 0, %s111
    %s114 = sphi 0, %s113
    %s128 = sphi 0, %s114
    %s134 = sphi 0, %s136
    %s137 = sphi 0, %s134
    %s138 = sphi 0, %s137
    %s154 = sphi 0, %s138
    %s160 = sphi 0, %s162
    %s163 = sphi 0, %s160
    %s164 = sphi 0, %s163
    %s180 = sphi 0, %s164
    %s186 = sphi 0, %s188
    %s189 = sphi 0, %s186
    %s190 = sphi 0, %s189
    %s206 = sphi 0, %s190
  $region4: #{decoder_block.4} parent=0 // loop_header_branch
    %17 = sbr.rel (%p15) target = $region8
  $region5: #{decoder_block.4} parent=0 // loop_body
    %s19 = ssub.s32 %s14, 1
    %s20 = ssub.s32 %s14, 2
    %s21 = sadd.s32 %s14, 1
    %s22 = ssub.s32 %s14, %s21
    %p23 = scmp.eq.s32.totalorder %s22, 0
    %s25 = sadd.s32 %s24, 1
    %s26 = scalar_select %p23, %s24, %s25
    %p29 = pneg %p23
    %p30 = scmp.eq.s32.totalorder %s14, 1
    %p31 = por %p29, %p30
    %p32 = scmp.ne.s32.totalorder %s24, %s27
    %p33 = scmp.eq.s32.totalorder %s14, 0
    %p34 = por %p32, %p33
    %p35 = scmp.ne.s32.totalorder %s24, %s27
    %p36 = scmp.eq.s32.totalorder %s19, 1
    %p37 = por %p35, %p36
    %p38 = scmp.ne.s32.totalorder %s27, %s28
    %p39 = scmp.eq.s32.totalorder %s19, 0
    %p40 = por %p38, %p39
    %p41 = scmp.ne.s32.totalorder %s27, %s28
    %p42 = scmp.eq.s32.totalorder %s20, 1
    %p43 = por %p41, %p42
    %p45 = scmp.ne.s32.totalorder %s28, %s44
    %p46 = scmp.eq.s32.totalorder %s20, 0
    %p47 = por %p45, %p46
    %s49 = sadd.s32 %s48, 1
    %p52 = scmp.eq.s32.totalorder %s14, 1
    %p53 = scmp.ne.s32.totalorder %s48, %s50
    %p54 = scmp.eq.s32.totalorder %s14, 0
    %p55 = por %p53, %p54
    %p56 = scmp.ne.s32.totalorder %s48, %s50
    %p57 = scmp.eq.s32.totalorder %s19, 1
    %p58 = por %p56, %p57
    %p59 = scmp.ne.s32.totalorder %s50, %s51
    %p60 = scmp.eq.s32.totalorder %s19, 0
    %p61 = por %p59, %p60
    %p62 = scmp.ne.s32.totalorder %s50, %s51
    %p63 = scmp.eq.s32.totalorder %s20, 1
    %p64 = por %p62, %p63
    %p66 = scmp.ne.s32.totalorder %s51, %s65
    %p67 = scmp.eq.s32.totalorder %s20, 0
    %p68 = por %p66, %p67
    %s70 = sadd.s32 %s69, 1
    %p73 = scmp.eq.s32.totalorder %s14, 1
    %p74 = scmp.ne.s32.totalorder %s69, %s71
    %p75 = scmp.eq.s32.totalorder %s14, 0
    %p76 = por %p74, %p75
    %p77 = scmp.ne.s32.totalorder %s69, %s71
    %p78 = scmp.eq.s32.totalorder %s19, 1
    %p79 = por %p77, %p78
    %p80 = scmp.ne.s32.totalorder %s71, %s72
    %p81 = scmp.eq.s32.totalorder %s19, 0
    %p82 = por %p80, %p81
    %p83 = scmp.ne.s32.totalorder %s71, %s72
    %p84 = scmp.eq.s32.totalorder %s20, 1
    %p85 = por %p83, %p84
    %p87 = scmp.ne.s32.totalorder %s72, %s86
    %p88 = scmp.eq.s32.totalorder %s20, 0
    %p89 = por %p87, %p88
    %s91 = sadd.s32 %s90, 1
    %p94 = scmp.eq.s32.totalorder %s14, 1
    %p95 = scmp.ne.s32.totalorder %s90, %s92
    %p96 = scmp.eq.s32.totalorder %s14, 0
    %p97 = por %p95, %p96
    %p98 = scmp.ne.s32.totalorder %s90, %s92
    %p99 = scmp.eq.s32.totalorder %s19, 1
    %p100 = por %p98, %p99
    %p101 = scmp.ne.s32.totalorder %s92, %s93
    %p102 = scmp.eq.s32.totalorder %s19, 0
    %p103 = por %p101, %p102
    %p104 = scmp.ne.s32.totalorder %s92, %s93
    %p105 = scmp.eq.s32.totalorder %s20, 1
    %p106 = por %p104, %p105
    %p108 = scmp.ne.s32.totalorder %s93, %s107
    %p109 = scmp.eq.s32.totalorder %s20, 0
    %p110 = por %p108, %p109
    %s112 = sadd.s32 %s111, 1
    %p115 = scmp.eq.s32.totalorder %s14, 1
    %p116 = scmp.ne.s32.totalorder %s111, %s113
    %p117 = scmp.eq.s32.totalorder %s14, 0
    %p118 = por %p116, %p117
    %p119 = scmp.ne.s32.totalorder %s111, %s113
    %p120 = scmp.eq.s32.totalorder %s19, 1
    %p121 = por %p119, %p120
    %p122 = scmp.ne.s32.totalorder %s113, %s114
    %p123 = scmp.eq.s32.totalorder %s19, 0
    %p124 = por %p122, %p123
    %p125 = scmp.ne.s32.totalorder %s113, %s114
    %p126 = scmp.eq.s32.totalorder %s20, 1
    %p127 = por %p125, %p126
    %p129 = scmp.ne.s32.totalorder %s114, %s128
    %p130 = scmp.eq.s32.totalorder %s20, 0
    %p131 = por %p129, %p130
    %s132 = ssub.s32 %s14, %s21
    %p133 = scmp.eq.s32.totalorder %s132, 0
    %s135 = sadd.s32 %s134, 1
    %s136 = scalar_select %p133, %s134, %s135
    %p139 = pneg %p133
    %p140 = scmp.eq.s32.totalorder %s14, 1
    %p141 = por %p139, %p140
    %p142 = scmp.ne.s32.totalorder %s134, %s137
    %p143 = scmp.eq.s32.totalorder %s14, 0
    %p144 = por %p142, %p143
    %p145 = scmp.ne.s32.totalorder %s134, %s137
    %p146 = scmp.eq.s32.totalorder %s19, 1
    %p147 = por %p145, %p146
    %p148 = scmp.ne.s32.totalorder %s137, %s138
    %p149 = scmp.eq.s32.totalorder %s19, 0
    %p150 = por %p148, %p149
    %p151 = scmp.ne.s32.totalorder %s137, %s138
    %p152 = scmp.eq.s32.totalorder %s20, 1
    %p153 = por %p151, %p152
    %p155 = scmp.ne.s32.totalorder %s138, %s154
    %p156 = scmp.eq.s32.totalorder %s20, 0
    %p157 = por %p155, %p156
    %s158 = ssub.s32 %s14, %s21
    %p159 = scmp.eq.s32.totalorder %s158, 0
    %s161 = sadd.s32 %s160, 1
    %s162 = scalar_select %p159, %s160, %s161
    %p165 = pneg %p159
    %p166 = scmp.eq.s32.totalorder %s14, 1
    %p167 = por %p165, %p166
    %p168 = scmp.ne.s32.totalorder %s160, %s163
    %p169 = scmp.eq.s32.totalorder %s14, 0
    %p170 = por %p168, %p169
    %p171 = scmp.ne.s32.totalorder %s160, %s163
    %p172 = scmp.eq.s32.totalorder %s19, 1
    %p173 = por %p171, %p172
    %p174 = scmp.ne.s32.totalorder %s163, %s164
    %p175 = scmp.eq.s32.totalorder %s19, 0
    %p176 = por %p174, %p175
    %p177 = scmp.ne.s32.totalorder %s163, %s164
    %p178 = scmp.eq.s32.totalorder %s20, 1
    %p179 = por %p177, %p178
    %p181 = scmp.ne.s32.totalorder %s164, %s180
    %p182 = scmp.eq.s32.totalorder %s20, 0
    %p183 = por %p181, %p182
    %s184 = ssub.s32 %s14, %s21
    %p185 = scmp.eq.s32.totalorder %s184, 0
    %s187 = sadd.s32 %s186, 1
    %s188 = scalar_select %p185, %s186, %s187
    %p191 = pneg %p185
    %p192 = scmp.eq.s32.totalorder %s14, 1
    %p193 = por %p191, %p192
    %p194 = scmp.ne.s32.totalorder %s186, %s189
    %p195 = scmp.eq.s32.totalorder %s14, 0
    %p196 = por %p194, %p195
    %p197 = scmp.ne.s32.totalorder %s186, %s189
    %p198 = scmp.eq.s32.totalorder %s19, 1
    %p199 = por %p197, %p198
    %p200 = scmp.ne.s32.totalorder %s189, %s190
    %p201 = scmp.eq.s32.totalorder %s19, 0
    %p202 = por %p200, %p201
    %p203 = scmp.ne.s32.totalorder %s189, %s190
    %p204 = scmp.eq.s32.totalorder %s20, 1
    %p205 = por %p203, %p204
    %p207 = scmp.ne.s32.totalorder %s190, %s206
    %p208 = scmp.eq.s32.totalorder %s20, 0
    %p209 = por %p207, %p208
    %p210 = scmp.le.s32.totalorder 1, %s14
    %p211 = scmp.lt.s32.totalorder %s14, 3
    %p212 = pnand %p210, %p211
    %p213 = pneg %p212
    // Predicated region
    $region9: #{decoder_block.4} parent=5 // pred_check
      _
    $region10: #{decoder_block.4} parent=5 // pred_check_branch
      %215 = sbr.rel (%p212) target = $region12
    $region11: #{decoder_block.4} parent=5 // pred_region
      %s216 = ssub.s32 %s14, 1
      // Predicated region
      $region13: #{decoder_block.4} parent=11 // pred_check
        %p217 = pneg %p61
      $region14: #{decoder_block.4} parent=11 // pred_check_branch
        %219 = sbr.rel (%p217) target = $region16
      $region15: #{decoder_block.4} parent=11 // pred_region
        _
      $region16: #{decoder_block.4} parent=11 // pred_fallthru
        _
      // Predicated region
      $region17: #{decoder_block.4} parent=11 // pred_check
        %p220 = pneg %p82
      $region18: #{decoder_block.4} parent=11 // pred_check_branch
        %222 = sbr.rel (%p220) target = $region20
      $region19: #{decoder_block.4} parent=11 // pred_region
        _
      $region20: #{decoder_block.4} parent=11 // pred_fallthru
        _
      // Predicated region
      $region21: #{decoder_block.4} parent=11 // pred_check
        %p223 = pneg %p103
      $region22: #{decoder_block.4} parent=11 // pred_check_branch
        %225 = sbr.rel (%p223) target = $region24
      $region23: #{decoder_block.4} parent=11 // pred_region
        _
      $region24: #{decoder_block.4} parent=11 // pred_fallthru
        _
      // Predicated region
      $region25: #{decoder_block.4} parent=11 // pred_check
        %p226 = pneg %p124
      $region26: #{decoder_block.4} parent=11 // pred_check_branch
        %228 = sbr.rel (%p226) target = $region28
      $region27: #{decoder_block.4} parent=11 // pred_region
        _
      $region28: #{decoder_block.4} parent=11 // pred_fallthru
        _
    $region12: #{decoder_block.4} parent=5 // pred_fallthru
      _
    %p229 = scmp.lt.s32.totalorder %s14, 2
    // Predicated region
    $region29: #{decoder_block.4} parent=5 // pred_check
      %p230 = pneg %p229
    $region30: #{decoder_block.4} parent=5 // pred_check_branch
      %232 = sbr.rel (%p230) target = $region32
    $region31: #{decoder_block.4} parent=5 // pred_region
      // Predicated region
      $region33: #{decoder_block.4} parent=31 // pred_check
        %p233 = pneg %p34
      $region34: #{decoder_block.4} parent=31 // pred_check_branch
        %235 = sbr.rel (%p233) target = $region36
      $region35: #{decoder_block.4} parent=31 // pred_region
        %p236 = scmp.lt.s32.totalorder %s14, 1
        %s237 = scalar_select %p236, %s14, 1
        %s238 = smul.addr %s237, 2
        %s239 = smul.addr %s238, 8
        %s240 = scalar_lea.vmem %s0, %s239
      $region36: #{decoder_block.4} parent=31 // pred_fallthru
        _
    $region32: #{decoder_block.4} parent=5 // pred_fallthru
      _
    %p241 = scmp.le.s32.totalorder 1, %s14
    %p242 = scmp.lt.s32.totalorder %s14, 3
    %p243 = pnand %p241, %p242
    %p244 = pneg %p243
    // Predicated region
    $region37: #{decoder_block.4} parent=5 // pred_check
      _
    $region38: #{decoder_block.4} parent=5 // pred_check_branch
      %246 = sbr.rel (%p243) target = $region40
    $region39: #{decoder_block.4} parent=5 // pred_region
      %s247 = ssub.s32 %s14, 1
      %p248 = scmp.lt.s32.totalorder %s19, 1
      %s249 = scalar_select %p248, %s19, 1
      %s250 = smul.addr %s249, 2
      %s251 = smul.addr %s250, 8
      %s252 = scalar_lea.vmem %s0, %s251
      %p253 = pneg %p40
      %p254 = pneg %p37
      %p255 = pneg %p61
      %p256 = pneg %p58
      %p257 = pneg %p82
      %p258 = pneg %p79
      %p259 = pneg %p103
      %p260 = pneg %p100
      %p261 = pneg %p124
      %p262 = pneg %p121
      %p263 = pneg %p150
      %p264 = pneg %p147
      %p265 = scmp.lt.s32.totalorder %s19, 1
      %s266 = scalar_select %p265, %s19, 1
      %s267 = smul.addr %s266, 2
      %s268 = smul.addr %s267, 8
      %s269 = scalar_lea.vmem %s5, %s268
      %p270 = pneg %p176
      %p271 = pneg %p173
      %p272 = scmp.lt.s32.totalorder %s19, 1
      %s273 = scalar_select %p272, %s19, 1
      %s274 = scalar_lea.vmem %s6, %s273
      %p275 = pneg %p202
      %p276 = pneg %p199
      %p277 = scmp.lt.s32.totalorder %s19, 1
      %s278 = scalar_select %p277, %s19, 1
      %s279 = scalar_lea.vmem %s7, %s278
      %p280 = scmp.lt.s32.totalorder %s19, 1
      %s281 = scalar_select %p280, %s19, 1
      %s282 = smul.addr %s281, 2
      %s283 = smul.addr %s282, 8
      %s284 = scalar_lea.vmem %s0, %s283
      %p285 = scmp.lt.s32.totalorder %s19, 1
      %s286 = scalar_select %p285, %s19, 1
      %s287 = smul.addr %s286, 2
      %s288 = smul.addr %s287, 8
      %s289 = scalar_lea.vmem %s5, %s288
      %p290 = scmp.lt.s32.totalorder %s19, 1
      %s291 = scalar_select %p290, %s19, 1
      %s292 = scalar_lea.vmem %s6, %s291
      %p293 = scmp.lt.s32.totalorder %s19, 1
      %s294 = scalar_select %p293, %s19, 1
      %s295 = scalar_lea.vmem %s7, %s294
      %v296 = vld [vmem:[%s284] sm:$0xff]
      %v297 = vld [vmem:[%s284 + $0x8] sm:$0xff]
      %v298 = vld [vmem:[%s3] sm:$0x1]
      %v300 = vlaneseq
      %v301 = vshrl.u32 %v300, 7
      %v302 = vsub.s32 0, %v301
      %v303 = vrot.slane %v298, %v302
      %v305 = vmul.f32 %v296, %v303
      %v306 = vmul.f32 %v297, %v303
      %v307 = vld [vmem:[%s4] sm:$0x1]
      %v309 = vlaneseq
      %v310 = vshrl.u32 %v309, 7
      %v311 = vsub.s32 0, %v310
      %v312 = vrot.slane %v307, %v311
      %v314 = vadd.f32 %v305, %v312
      %v315 = vadd.f32 %v306, %v312
      %v316 = vmax.f32 %v314, 0.0
      %v317 = vmax.f32 %v315, 0.0
      %318 = vst [vmem:[#allocation2] sm:$0xff] 0.0
      %vm319 = vcmask 130048
      %320 = vst.msk [vmem:[#allocation2 + $0x8] sm:$0xff] %vm319, 0.0
      %321 = vst [vmem:[#allocation2 + $0x10] sm:$0xff] 0.0
      %322 = vst.msk [vmem:[#allocation2 + $0x18] sm:$0xff] %vm319, 0.0
      %323 = vst [vmem:[#allocation2 + $0x20] sm:$0x3] 0.0
      %vm324 = vcmask 123904
      %325 = vst.msk [vmem:[#allocation2 + $0x28] sm:$0x3] %vm324, 0.0
      %vm328 = vcmask 1040384
      %v329 = vrot.slane %v316, 7
      %v330 = vrot.slane %v317, 7
      %v331 = vsel %vm328, %v329, %v330
      %332 = vrot.lane.b32.xlu0 %v329, 8
      %v333 = vpop.permute.xlu0 %332
      %334 = vrot.lane.b32.xlu0 %v331, 8
      %v335 = vpop.permute.xlu0 %334
      %336 = vrot.lane.b32.xlu0 %v330, 8
      %v337 = vpop.permute.xlu0 %336
      %vm341 = vcmask 1047617
      %342 = vst.msk [vmem:[#allocation2] sm:$0xfe] %vm341, %v333
      %vm343 = vcmask 64513
      %344 = vst.msk [vmem:[#allocation2 + $0x8] sm:$0xfe] %vm343, %v333
      %vm345 = vcmask 1047616
      %346 = vst.msk [vmem:[#allocation2 + $0x10] sm:$0xff] %vm345, %v335
      %vm347 = vcmask 64512
      %348 = vst.msk [vmem:[#allocation2 + $0x18] sm:$0xff] %vm347, %v335
      %vm349 = vcmask 1040448
      %350 = vst.msk [vmem:[#allocation2 + $0x20] sm:$0x1] %vm349, %v337
      %vm351 = vcmask 57344
      %352 = vst.msk [vmem:[#allocation2 + $0x28] sm:$0x1] %vm351, %v337
      %v353 = vld [vmem:[#allocation2] sm:$0xff]
      %v354 = vld [vmem:[#allocation2 + $0x10] sm:$0xff]
      %v355 = vld [vmem:[%s1] sm:$0xff]
      %v356 = vld [vmem:[%s1 + $0x8] sm:$0xff]
      %v357 = vld [vmem:[%s1 + $0x10] sm:$0xff]
      %v358 = vld [vmem:[%s1 + $0x18] sm:$0xff]
      %v359 = vld [vmem:[%s1 + $0x20] sm:$0xff]
      %v360 = vld [vmem:[%s1 + $0x28] sm:$0xff]
      %v361 = vld [vmem:[%s1 + $0x30] sm:$0xff]
      %v362 = vld [vmem:[%s1 + $0x38] sm:$0xff]
      %v363 = vld [vmem:[%s1 + $0x40] sm:$0xff]
      %v364 = vld [vmem:[%s1 + $0x48] sm:$0xff]
      %v365 = vld [vmem:[%s1 + $0x50] sm:$0xff]
      %v366 = vld [vmem:[%s1 + $0x58] sm:$0xff]
      %v367 = vld [vmem:[%s1 + $0x60] sm:$0xff]
      %v368 = vld [vmem:[%s1 + $0x68] sm:$0xff]
      %v369 = vld [vmem:[%s1 + $0x70] sm:$0xff]
      %v370 = vld [vmem:[%s1 + $0x78] sm:$0xff]
      %v371 = vld [vmem:[#allocation2 + $0x8] sm:$0xff]
      %v372 = vld [vmem:[#allocation2 + $0x18] sm:$0xff]
      %s373 = scalar_lea.vmem %s1, 128
      %v374 = vld [vmem:[%s373] sm:$0xff]
      %v375 = vld [vmem:[%s373 + $0x8] sm:$0xff]
      %v376 = vld [vmem:[%s373 + $0x10] sm:$0xff]
      %v377 = vld [vmem:[%s373 + $0x18] sm:$0xff]
      %v378 = vld [vmem:[%s373 + $0x20] sm:$0xff]
      %v379 = vld [vmem:[%s373 + $0x28] sm:$0xff]
      %v380 = vld [vmem:[%s373 + $0x30] sm:$0xff]
      %v381 = vld [vmem:[%s373 + $0x38] sm:$0xff]
      %v382 = vld [vmem:[%s373 + $0x40] sm:$0xff]
      %v383 = vld [vmem:[%s373 + $0x48] sm:$0xff]
      %v384 = vld [vmem:[%s373 + $0x50] sm:$0xff]
      %v385 = vld [vmem:[%s373 + $0x58] sm:$0xff]
      %v386 = vld [vmem:[%s373 + $0x60] sm:$0xff]
      %v387 = vld [vmem:[%s373 + $0x68] sm:$0xff]
      %v388 = vld [vmem:[%s373 + $0x70] sm:$0xff]
      %v389 = vld [vmem:[%s373 + $0x78] sm:$0xff]
      %394 = vrot.lane.b32.xlu0 %v353, 120
      %v395 = vpop.permute.xlu0 %394
      %396 = vrot.lane.b32.xlu0 %v371, 120
      %v397 = vpop.permute.xlu0 %396
      %398 = vrot.lane.b32.xlu0 %v354, 120
      %v399 = vpop.permute.xlu0 %398
      %400 = vrot.lane.b32.xlu0 %v372, 120
      %v401 = vpop.permute.xlu0 %400
      %vm402 = vcmask 982016
      %v403 = vsel %vm402, %v395, %v397
      %v404 = vsel %vm402, %v399, %v401
      %407 = vmatprep.subr.mxu0 0.0
      %408 = vmatpush1.msra.mxu0 %v389
      %409 = vmatprep.subr.mxu0 0.0
      %410 = vmatpush1.msra.mxu0 %v388
      %411 = vmatprep.subr.mxu0 0.0
      %412 = vmatpush1.msra.mxu0 %v387
      %413 = vmatprep.subr.mxu0 0.0
      %414 = vmatpush1.msra.mxu0 %v386
      %415 = vmatprep.subr.mxu0 0.0
      %416 = vmatpush1.msra.mxu0 %v385
      %417 = vmatprep.subr.mxu0 0.0
      %418 = vmatpush1.msra.mxu0 %v384
      %419 = vmatprep.subr.mxu0 0.0
      %420 = vmatpush1.msra.mxu0 %v383
      %421 = vmatprep.subr.mxu0 0.0
      %422 = vmatpush1.msra.mxu0 %v382
      %423 = vmatprep.subr.mxu0 0.0
      %424 = vmatpush1.msra.mxu0 %v381
      %425 = vmatprep.subr.mxu0 0.0
      %426 = vmatpush1.msra.mxu0 %v380
      %427 = vmatprep.subr.mxu0 0.0
      %428 = vmatpush1.msra.mxu0 %v379
      %429 = vmatprep.subr.mxu0 0.0
      %430 = vmatpush1.msra.mxu0 %v378
      %431 = vmatprep.subr.mxu0 0.0
      %432 = vmatpush1.msra.mxu0 %v377
      %433 = vmatprep.subr.mxu0 0.0
      %434 = vmatpush1.msra.mxu0 %v376
      %435 = vmatprep.subr.mxu0 0.0
      %436 = vmatpush1.msra.mxu0 %v375
      %437 = vmatprep.subr.mxu0 0.0
      %438 = vmatpush1.msra.mxu0 %v374
      %439 = vmatprep.subr.mxu0 0.0
      %440 = vmatpush2.msra.mxu0 0.0
      %441 = vmatprep.subr.mxu0 0.0
      %442 = vmatpush2.msra.mxu0 0.0
      %443 = vmatprep.subr.mxu0 0.0
      %444 = vmatpush2.msra.mxu0 0.0
      %445 = vmatprep.subr.mxu0 0.0
      %446 = vmatpush2.msra.mxu0 0.0
      %447 = vmatprep.subr.mxu0 0.0
      %448 = vmatpush2.msra.mxu0 0.0
      %449 = vmatprep.subr.mxu0 0.0
      %450 = vmatpush2.msra.mxu0 0.0
      %451 = vmatprep.subr.mxu0 0.0
      %452 = vmatpush2.msra.mxu0 0.0
      %453 = vmatprep.subr.mxu0 0.0
      %454 = vmatpush2.msra.mxu0 0.0
      %455 = vmatprep.subr.mxu0 0.0
      %456 = vmatpush2.msra.mxu0 0.0
      %457 = vmatprep.subr.mxu0 0.0
      %458 = vmatpush2.msra.mxu0 0.0
      %459 = vmatprep.subr.mxu0 0.0
      %460 = vmatpush2.msra.mxu0 0.0
      %461 = vmatprep.subr.mxu0 0.0
      %462 = vmatpush2.msra.mxu0 0.0
      %463 = vmatprep.subr.mxu0 0.0
      %464 = vmatpush2.msra.mxu0 0.0
      %465 = vmatprep.subr.mxu0 0.0
      %466 = vmatpush2.msra.mxu0 0.0
      %467 = vmatprep.subr.mxu0 0.0
      %468 = vmatpush2.msra.mxu0 0.0
      %469 = vmatprep.subr.mxu0 0.0
      %470 = vmatpush2.msra.mxu0 0.0
      %471 = vmatprep.mubr.f32.mxu0 0.0
      %472 = vmatmul.mubr.f32.gmra.mxu0 %v403
      %v473 = vpop.f32.mrf.mxu0
      %v474 = vadd.f32 0.0, %v473
      %v475 = vpop.f32.mrf.mxu0
      %476 = vmatprep.mubr.f32.mxu0 0.0
      %477 = vmatmul.mubr.f32.gmra.mxu0 %v404
      %v478 = vpop.f32.mrf.mxu0
      %v479 = vadd.f32 0.0, %v478
      %v480 = vpop.f32.mrf.mxu0
      %481 = vdwg.mxu0
      %482 = vmatprep.subr.mxu0 0.0
      %483 = vmatpush1.msra.mxu0 %v370
      %484 = vmatprep.subr.mxu0 0.0
      %485 = vmatpush1.msra.mxu0 %v369
      %486 = vmatprep.subr.mxu0 0.0
      %487 = vmatpush1.msra.mxu0 %v368
      %488 = vmatprep.subr.mxu0 0.0
      %489 = vmatpush1.msra.mxu0 %v367
      %490 = vmatprep.subr.mxu0 0.0
      %491 = vmatpush1.msra.mxu0 %v366
      %492 = vmatprep.subr.mxu0 0.0
      %493 = vmatpush1.msra.mxu0 %v365
      %494 = vmatprep.subr.mxu0 0.0
      %495 = vmatpush1.msra.mxu0 %v364
      %496 = vmatprep.subr.mxu0 0.0
      %497 = vmatpush1.msra.mxu0 %v363
      %498 = vmatprep.subr.mxu0 0.0
      %499 = vmatpush1.msra.mxu0 %v362
      %500 = vmatprep.subr.mxu0 0.0
      %501 = vmatpush1.msra.mxu0 %v361
      %502 = vmatprep.subr.mxu0 0.0
      %503 = vmatpush1.msra.mxu0 %v360
      %504 = vmatprep.subr.mxu0 0.0
      %505 = vmatpush1.msra.mxu0 %v359
      %506 = vmatprep.subr.mxu0 0.0
      %507 = vmatpush1.msra.mxu0 %v358
      %508 = vmatprep.subr.mxu0 0.0
      %509 = vmatpush1.msra.mxu0 %v357
      %510 = vmatprep.subr.mxu0 0.0
      %511 = vmatpush1.msra.mxu0 %v356
      %512 = vmatprep.subr.mxu0 0.0
      %513 = vmatpush1.msra.mxu0 %v355
      %514 = vmatprep.subr.mxu0 0.0
      %515 = vmatpush2.msra.mxu0 0.0
      %516 = vmatprep.subr.mxu0 0.0
      %517 = vmatpush2.msra.mxu0 0.0
      %518 = vmatprep.subr.mxu0 0.0
      %519 = vmatpush2.msra.mxu0 0.0
      %520 = vmatprep.subr.mxu0 0.0
      %521 = vmatpush2.msra.mxu0 0.0
      %522 = vmatprep.subr.mxu0 0.0
      %523 = vmatpush2.msra.mxu0 0.0
      %524 = vmatprep.subr.mxu0 0.0
      %525 = vmatpush2.msra.mxu0 0.0
      %526 = vmatprep.subr.mxu0 0.0
      %527 = vmatpush2.msra.mxu0 0.0
      %528 = vmatprep.subr.mxu0 0.0
      %529 = vmatpush2.msra.mxu0 0.0
      %530 = vmatprep.subr.mxu0 0.0
      %531 = vmatpush2.msra.mxu0 0.0
      %532 = vmatprep.subr.mxu0 0.0
      %533 = vmatpush2.msra.mxu0 0.0
      %534 = vmatprep.subr.mxu0 0.0
      %535 = vmatpush2.msra.mxu0 0.0
      %536 = vmatprep.subr.mxu0 0.0
      %537 = vmatpush2.msra.mxu0 0.0
      %538 = vmatprep.subr.mxu0 0.0
      %539 = vmatpush2.msra.mxu0 0.0
      %540 = vmatprep.subr.mxu0 0.0
      %541 = vmatpush2.msra.mxu0 0.0
      %542 = vmatprep.subr.mxu0 0.0
      %543 = vmatpush2.msra.mxu0 0.0
      %544 = vmatprep.subr.mxu0 0.0
      %545 = vmatpush2.msra.mxu0 0.0
      %546 = vmatprep.mubr.f32.mxu0 0.0
      %547 = vmatmul.mubr.f32.gmra.mxu0 %v353
      %v548 = vpop.f32.mrf.mxu0
      %v549 = vadd.f32 %v474, %v548
      %v550 = vpop.f32.mrf.mxu0
      %551 = vmatprep.mubr.f32.mxu0 0.0
      %552 = vmatmul.mubr.f32.gmra.mxu0 %v354
      %v553 = vpop.f32.mrf.mxu0
      %v554 = vadd.f32 %v479, %v553
      %v555 = vpop.f32.mrf.mxu0
      %556 = vdwg.mxu0
      %s557 = scalar_lea.vmem %s1, 256
      %v558 = vld [vmem:[%s557] sm:$0xff]
      %v559 = vld [vmem:[%s557 + $0x8] sm:$0xff]
      %v560 = vld [vmem:[%s557 + $0x10] sm:$0xff]
      %v561 = vld [vmem:[%s557 + $0x18] sm:$0xff]
      %v562 = vld [vmem:[%s557 + $0x20] sm:$0xff]
      %v563 = vld [vmem:[%s557 + $0x28] sm:$0xff]
      %v564 = vld [vmem:[%s557 + $0x30] sm:$0xff]
      %v565 = vld [vmem:[%s557 + $0x38] sm:$0xff]
      %v566 = vld [vmem:[%s557 + $0x40] sm:$0xff]
      %v567 = vld [vmem:[%s557 + $0x48] sm:$0xff]
      %v568 = vld [vmem:[%s557 + $0x50] sm:$0xff]
      %v569 = vld [vmem:[%s557 + $0x58] sm:$0xff]
      %v570 = vld [vmem:[%s557 + $0x60] sm:$0xff]
      %v571 = vld [vmem:[%s557 + $0x68] sm:$0xff]
      %v572 = vld [vmem:[%s557 + $0x70] sm:$0xff]
      %v573 = vld [vmem:[%s557 + $0x78] sm:$0xff]
      %574 = vrot.lane.b32.xlu0 %v353, 112
      %v575 = vpop.permute.xlu0 %574
      %576 = vrot.lane.b32.xlu0 %v371, 112
      %v577 = vpop.permute.xlu0 %576
      %578 = vrot.lane.b32.xlu0 %v354, 112
      %v579 = vpop.permute.xlu0 %578
      %580 = vrot.lane.b32.xlu0 %v372, 112
      %v581 = vpop.permute.xlu0 %580
      %vm582 = vcmask 916480
      %v583 = vsel %vm582, %v575, %v577
      %v584 = vsel %vm582, %v579, %v581
      %587 = vmatprep.subr.mxu0 0.0
      %588 = vmatpush1.msra.mxu0 %v573
      %589 = vmatprep.subr.mxu0 0.0
      %590 = vmatpush1.msra.mxu0 %v572
      %591 = vmatprep.subr.mxu0 0.0
      %592 = vmatpush1.msra.mxu0 %v571
      %593 = vmatprep.subr.mxu0 0.0
      %594 = vmatpush1.msra.mxu0 %v570
      %595 = vmatprep.subr.mxu0 0.0
      %596 = vmatpush1.msra.mxu0 %v569
      %597 = vmatprep.subr.mxu0 0.0
      %598 = vmatpush1.msra.mxu0 %v568
      %599 = vmatprep.subr.mxu0 0.0
      %600 = vmatpush1.msra.mxu0 %v567
      %601 = vmatprep.subr.mxu0 0.0
      %602 = vmatpush1.msra.mxu0 %v566
      %603 = vmatprep.subr.mxu0 0.0
      %604 = vmatpush1.msra.mxu0 %v565
      %605 = vmatprep.subr.mxu0 0.0
      %606 = vmatpush1.msra.mxu0 %v564
      %607 = vmatprep.subr.mxu0 0.0
      %608 = vmatpush1.msra.mxu0 %v563
      %609 = vmatprep.subr.mxu0 0.0
      %610 = vmatpush1.msra.mxu0 %v562
      %611 = vmatprep.subr.mxu0 0.0
      %612 = vmatpush1.msra.mxu0 %v561
      %613 = vmatprep.subr.mxu0 0.0
      %614 = vmatpush1.msra.mxu0 %v560
      %615 = vmatprep.subr.mxu0 0.0
      %616 = vmatpush1.msra.mxu0 %v559
      %617 = vmatprep.subr.mxu0 0.0
      %618 = vmatpush1.msra.mxu0 %v558
      %619 = vmatprep.subr.mxu0 0.0
      %620 = vmatpush2.msra.mxu0 0.0
      %621 = vmatprep.subr.mxu0 0.0
      %622 = vmatpush2.msra.mxu0 0.0
      %623 = vmatprep.subr.mxu0 0.0
      %624 = vmatpush2.msra.mxu0 0.0
      %625 = vmatprep.subr.mxu0 0.0
      %626 = vmatpush2.msra.mxu0 0.0
      %627 = vmatprep.subr.mxu0 0.0
      %628 = vmatpush2.msra.mxu0 0.0
      %629 = vmatprep.subr.mxu0 0.0
      %630 = vmatpush2.msra.mxu0 0.0
      %631 = vmatprep.subr.mxu0 0.0
      %632 = vmatpush2.msra.mxu0 0.0
      %633 = vmatprep.subr.mxu0 0.0
      %634 = vmatpush2.msra.mxu0 0.0
      %635 = vmatprep.subr.mxu0 0.0
      %636 = vmatpush2.msra.mxu0 0.0
      %637 = vmatprep.subr.mxu0 0.0
      %638 = vmatpush2.msra.mxu0 0.0
      %639 = vmatprep.subr.mxu0 0.0
      %640 = vmatpush2.msra.mxu0 0.0
      %641 = vmatprep.subr.mxu0 0.0
      %642 = vmatpush2.msra.mxu0 0.0
      %643 = vmatprep.subr.mxu0 0.0
      %644 = vmatpush2.msra.mxu0 0.0
      %645 = vmatprep.subr.mxu0 0.0
      %646 = vmatpush2.msra.mxu0 0.0
      %647 = vmatprep.subr.mxu0 0.0
      %648 = vmatpush2.msra.mxu0 0.0
      %649 = vmatprep.subr.mxu0 0.0
      %650 = vmatpush2.msra.mxu0 0.0
      %651 = vmatprep.mubr.f32.mxu0 0.0
      %652 = vmatmul.mubr.f32.gmra.mxu0 %v583
      %v653 = vpop.f32.mrf.mxu0
      %v654 = vadd.f32 0.0, %v653
      %v655 = vpop.f32.mrf.mxu0
      %656 = vmatprep.mubr.f32.mxu0 0.0
      %657 = vmatmul.mubr.f32.gmra.mxu0 %v584
      %v658 = vpop.f32.mrf.mxu0
      %v659 = vadd.f32 0.0, %v658
      %v660 = vpop.f32.mrf.mxu0
      %661 = vdwg.mxu0
      %v662 = vadd.f32 %v549, %v654
      %v663 = vadd.f32 %v554, %v659
      %v664 = vld [vmem:[#allocation2] sm:$0xfe]
      %v665 = vld [vmem:[#allocation2 + $0x10] sm:$0xff]
      %v666 = vld [vmem:[#allocation2 + $0x20] sm:$0x1]
      %s667 = scalar_lea.vmem %s1, 384
      %v668 = vld [vmem:[%s667] sm:$0xff]
      %v669 = vld [vmem:[%s667 + $0x8] sm:$0xff]
      %v670 = vld [vmem:[%s667 + $0x10] sm:$0xff]
      %v671 = vld [vmem:[%s667 + $0x18] sm:$0xff]
      %v672 = vld [vmem:[%s667 + $0x20] sm:$0xff]
      %v673 = vld [vmem:[%s667 + $0x28] sm:$0xff]
      %v674 = vld [vmem:[%s667 + $0x30] sm:$0xff]
      %v675 = vld [vmem:[%s667 + $0x38] sm:$0xff]
      %v676 = vld [vmem:[%s667 + $0x40] sm:$0xff]
      %v677 = vld [vmem:[%s667 + $0x48] sm:$0xff]
      %v678 = vld [vmem:[%s667 + $0x50] sm:$0xff]
      %v679 = vld [vmem:[%s667 + $0x58] sm:$0xff]
      %v680 = vld [vmem:[%s667 + $0x60] sm:$0xff]
      %v681 = vld [vmem:[%s667 + $0x68] sm:$0xff]
      %v682 = vld [vmem:[%s667 + $0x70] sm:$0xff]
      %v683 = vld [vmem:[%s667 + $0x78] sm:$0xff]
      %vm687 = vcmask 1046528
      %v688 = vrot.slane %v664, 1
      %v689 = vrot.slane %v665, 1
      %v690 = vsel %vm687, %v688, %v689
      %v691 = vrot.slane %v666, 1
      %v692 = vsel %vm687, %v689, %v691
      %695 = vmatprep.subr.mxu0 0.0
      %696 = vmatpush1.msra.mxu0 %v683
      %697 = vmatprep.subr.mxu0 0.0
      %698 = vmatpush1.msra.mxu0 %v682
      %699 = vmatprep.subr.mxu0 0.0
      %700 = vmatpush1.msra.mxu0 %v681
      %701 = vmatprep.subr.mxu0 0.0
      %702 = vmatpush1.msra.mxu0 %v680
      %703 = vmatprep.subr.mxu0 0.0
      %704 = vmatpush1.msra.mxu0 %v679
      %705 = vmatprep.subr.mxu0 0.0
      %706 = vmatpush1.msra.mxu0 %v678
      %707 = vmatprep.subr.mxu0 0.0
      %708 = vmatpush1.msra.mxu0 %v677
      %709 = vmatprep.subr.mxu0 0.0
      %710 = vmatpush1.msra.mxu0 %v676
      %711 = vmatprep.subr.mxu0 0.0
      %712 = vmatpush1.msra.mxu0 %v675
      %713 = vmatprep.subr.mxu0 0.0
      %714 = vmatpush1.msra.mxu0 %v674
      %715 = vmatprep.subr.mxu0 0.0
      %716 = vmatpush1.msra.mxu0 %v673
      %717 = vmatprep.subr.mxu0 0.0
      %718 = vmatpush1.msra.mxu0 %v672
      %719 = vmatprep.subr.mxu0 0.0
      %720 = vmatpush1.msra.mxu0 %v671
      %721 = vmatprep.subr.mxu0 0.0
      %722 = vmatpush1.msra.mxu0 %v670
      %723 = vmatprep.subr.mxu0 0.0
      %724 = vmatpush1.msra.mxu0 %v669
      %725 = vmatprep.subr.mxu0 0.0
      %726 = vmatpush1.msra.mxu0 %v668
      %727 = vmatprep.subr.mxu0 0.0
      %728 = vmatpush2.msra.mxu0 0.0
      %729 = vmatprep.subr.mxu0 0.0
      %730 = vmatpush2.msra.mxu0 0.0
      %731 = vmatprep.subr.mxu0 0.0
      %732 = vmatpush2.msra.mxu0 0.0
      %733 = vmatprep.subr.mxu0 0.0
      %734 = vmatpush2.msra.mxu0 0.0
      %735 = vmatprep.subr.mxu0 0.0
      %736 = vmatpush2.msra.mxu0 0.0
      %737 = vmatprep.subr.mxu0 0.0
      %738 = vmatpush2.msra.mxu0 0.0
      %739 = vmatprep.subr.mxu0 0.0
      %740 = vmatpush2.msra.mxu0 0.0
      %741 = vmatprep.subr.mxu0 0.0
      %742 = vmatpush2.msra.mxu0 0.0
      %743 = vmatprep.subr.mxu0 0.0
      %744 = vmatpush2.msra.mxu0 0.0
      %745 = vmatprep.subr.mxu0 0.0
      %746 = vmatpush2.msra.mxu0 0.0
      %747 = vmatprep.subr.mxu0 0.0
      %748 = vmatpush2.msra.mxu0 0.0
      %749 = vmatprep.subr.mxu0 0.0
      %750 = vmatpush2.msra.mxu0 0.0
      %751 = vmatprep.subr.mxu0 0.0
      %752 = vmatpush2.msra.mxu0 0.0
      %753 = vmatprep.subr.mxu0 0.0
      %754 = vmatpush2.msra.mxu0 0.0
      %755 = vmatprep.subr.mxu0 0.0
      %756 = vmatpush2.msra.mxu0 0.0
      %757 = vmatprep.subr.mxu0 0.0
      %758 = vmatpush2.msra.mxu0 0.0
      %759 = vmatprep.mubr.f32.mxu0 0.0
      %760 = vmatmul.mubr.f32.gmra.mxu0 %v690
      %v761 = vpop.f32.mrf.mxu0
      %v762 = vadd.f32 0.0, %v761
      %v763 = vpop.f32.mrf.mxu0
      %764 = vmatprep.mubr.f32.mxu0 0.0
      %765 = vmatmul.mubr.f32.gmra.mxu0 %v692
      %v766 = vpop.f32.mrf.mxu0
      %v767 = vadd.f32 0.0, %v766
      %v768 = vpop.f32.mrf.mxu0
      %769 = vdwg.mxu0
      %v770 = vadd.f32 %v662, %v762
      %v771 = vadd.f32 %v663, %v767
      %v772 = vld [vmem:[#allocation2] sm:$0xfe]
      %v773 = vld [vmem:[#allocation2 + $0x8] sm:$0xfe]
      %v774 = vld [vmem:[#allocation2 + $0x10] sm:$0xff]
      %v775 = vld [vmem:[#allocation2 + $0x18] sm:$0xff]
      %v776 = vld [vmem:[#allocation2 + $0x20] sm:$0x1]
      %v777 = vld [vmem:[#allocation2 + $0x28] sm:$0x1]
      %s778 = scalar_lea.vmem %s1, 512
      %v779 = vld [vmem:[%s778] sm:$0xff]
      %v780 = vld [vmem:[%s778 + $0x8] sm:$0xff]
      %v781 = vld [vmem:[%s778 + $0x10] sm:$0xff]
      %v782 = vld [vmem:[%s778 + $0x18] sm:$0xff]
      %v783 = vld [vmem:[%s778 + $0x20] sm:$0xff]
      %v784 = vld [vmem:[%s778 + $0x28] sm:$0xff]
      %v785 = vld [vmem:[%s778 + $0x30] sm:$0xff]
      %v786 = vld [vmem:[%s778 + $0x38] sm:$0xff]
      %v787 = vld [vmem:[%s778 + $0x40] sm:$0xff]
      %v788 = vld [vmem:[%s778 + $0x48] sm:$0xff]
      %v789 = vld [vmem:[%s778 + $0x50] sm:$0xff]
      %v790 = vld [vmem:[%s778 + $0x58] sm:$0xff]
      %v791 = vld [vmem:[%s778 + $0x60] sm:$0xff]
      %v792 = vld [vmem:[%s778 + $0x68] sm:$0xff]
      %v793 = vld [vmem:[%s778 + $0x70] sm:$0xff]
      %v794 = vld [vmem:[%s778 + $0x78] sm:$0xff]
      %v801 = vrot.slane %v772, 1
      %v802 = vrot.slane %v774, 1
      %v803 = vsel %vm687, %v801, %v802
      %v804 = vrot.slane %v773, 1
      %v805 = vrot.slane %v775, 1
      %v806 = vsel %vm687, %v804, %v805
      %v807 = vrot.slane %v776, 1
      %v808 = vsel %vm687, %v802, %v807
      %v809 = vrot.slane %v777, 1
      %v810 = vsel %vm687, %v805, %v809
      %811 = vrot.lane.b32.xlu0 %v803, 120
      %v812 = vpop.permute.xlu0 %811
      %813 = vrot.lane.b32.xlu0 %v806, 120
      %v814 = vpop.permute.xlu0 %813
      %815 = vrot.lane.b32.xlu0 %v808, 120
      %v816 = vpop.permute.xlu0 %815
      %817 = vrot.lane.b32.xlu0 %v810, 120
      %v818 = vpop.permute.xlu0 %817
      %v819 = vsel %vm402, %v812, %v814
      %v820 = vsel %vm402, %v816, %v818
      %823 = vmatprep.subr.mxu0 0.0
      %824 = vmatpush1.msra.mxu0 %v794
      %825 = vmatprep.subr.mxu0 0.0
      %826 = vmatpush1.msra.mxu0 %v793
      %827 = vmatprep.subr.mxu0 0.0
      %828 = vmatpush1.msra.mxu0 %v792
      %829 = vmatprep.subr.mxu0 0.0
      %830 = vmatpush1.msra.mxu0 %v791
      %831 = vmatprep.subr.mxu0 0.0
      %832 = vmatpush1.msra.mxu0 %v790
      %833 = vmatprep.subr.mxu0 0.0
      %834 = vmatpush1.msra.mxu0 %v789
      %835 = vmatprep.subr.mxu0 0.0
      %836 = vmatpush1.msra.mxu0 %v788
      %837 = vmatprep.subr.mxu0 0.0
      %838 = vmatpush1.msra.mxu0 %v787
      %839 = vmatprep.subr.mxu0 0.0
      %840 = vmatpush1.msra.mxu0 %v786
      %841 = vmatprep.subr.mxu0 0.0
      %842 = vmatpush1.msra.mxu0 %v785
      %843 = vmatprep.subr.mxu0 0.0
      %844 = vmatpush1.msra.mxu0 %v784
      %845 = vmatprep.subr.mxu0 0.0
      %846 = vmatpush1.msra.mxu0 %v783
      %847 = vmatprep.subr.mxu0 0.0
      %848 = vmatpush1.msra.mxu0 %v782
      %849 = vmatprep.subr.mxu0 0.0
      %850 = vmatpush1.msra.mxu0 %v781
      %851 = vmatprep.subr.mxu0 0.0
      %852 = vmatpush1.msra.mxu0 %v780
      %853 = vmatprep.subr.mxu0 0.0
      %854 = vmatpush1.msra.mxu0 %v779
      %855 = vmatprep.subr.mxu0 0.0
      %856 = vmatpush2.msra.mxu0 0.0
      %857 = vmatprep.subr.mxu0 0.0
      %858 = vmatpush2.msra.mxu0 0.0
      %859 = vmatprep.subr.mxu0 0.0
      %860 = vmatpush2.msra.mxu0 0.0
      %861 = vmatprep.subr.mxu0 0.0
      %862 = vmatpush2.msra.mxu0 0.0
      %863 = vmatprep.subr.mxu0 0.0
      %864 = vmatpush2.msra.mxu0 0.0
      %865 = vmatprep.subr.mxu0 0.0
      %866 = vmatpush2.msra.mxu0 0.0
      %867 = vmatprep.subr.mxu0 0.0
      %868 = vmatpush2.msra.mxu0 0.0
      %869 = vmatprep.subr.mxu0 0.0
      %870 = vmatpush2.msra.mxu0 0.0
      %871 = vmatprep.subr.mxu0 0.0
      %872 = vmatpush2.msra.mxu0 0.0
      %873 = vmatprep.subr.mxu0 0.0
      %874 = vmatpush2.msra.mxu0 0.0
      %875 = vmatprep.subr.mxu0 0.0
      %876 = vmatpush2.msra.mxu0 0.0
      %877 = vmatprep.subr.mxu0 0.0
      %878 = vmatpush2.msra.mxu0 0.0
      %879 = vmatprep.subr.mxu0 0.0
      %880 = vmatpush2.msra.mxu0 0.0
      %881 = vmatprep.subr.mxu0 0.0
      %882 = vmatpush2.msra.mxu0 0.0
      %883 = vmatprep.subr.mxu0 0.0
      %884 = vmatpush2.msra.mxu0 0.0
      %885 = vmatprep.subr.mxu0 0.0
      %886 = vmatpush2.msra.mxu0 0.0
      %887 = vmatprep.mubr.f32.mxu0 0.0
      %888 = vmatmul.mubr.f32.gmra.mxu0 %v819
      %v889 = vpop.f32.mrf.mxu0
      %v890 = vadd.f32 0.0, %v889
      %v891 = vpop.f32.mrf.mxu0
      %892 = vmatprep.mubr.f32.mxu0 0.0
      %893 = vmatmul.mubr.f32.gmra.mxu0 %v820
      %v894 = vpop.f32.mrf.mxu0
      %v895 = vadd.f32 0.0, %v894
      %v896 = vpop.f32.mrf.mxu0
      %897 = vdwg.mxu0
      %v898 = vadd.f32 %v770, %v890
      %v899 = vadd.f32 %v771, %v895
      %s900 = scalar_lea.vmem %s1, 640
      %v901 = vld [vmem:[%s900] sm:$0xff]
      %v902 = vld [vmem:[%s900 + $0x8] sm:$0xff]
      %v903 = vld [vmem:[%s900 + $0x10] sm:$0xff]
      %v904 = vld [vmem:[%s900 + $0x18] sm:$0xff]
      %v905 = vld [vmem:[%s900 + $0x20] sm:$0xff]
      %v906 = vld [vmem:[%s900 + $0x28] sm:$0xff]
      %v907 = vld [vmem:[%s900 + $0x30] sm:$0xff]
      %v908 = vld [vmem:[%s900 + $0x38] sm:$0xff]
      %v909 = vld [vmem:[%s900 + $0x40] sm:$0xff]
      %v910 = vld [vmem:[%s900 + $0x48] sm:$0xff]
      %v911 = vld [vmem:[%s900 + $0x50] sm:$0xff]
      %v912 = vld [vmem:[%s900 + $0x58] sm:$0xff]
      %v913 = vld [vmem:[%s900 + $0x60] sm:$0xff]
      %v914 = vld [vmem:[%s900 + $0x68] sm:$0xff]
      %v915 = vld [vmem:[%s900 + $0x70] sm:$0xff]
      %v916 = vld [vmem:[%s900 + $0x78] sm:$0xff]
      %917 = vrot.lane.b32.xlu0 %v803, 112
      %v918 = vpop.permute.xlu0 %917
      %919 = vrot.lane.b32.xlu0 %v806, 112
      %v920 = vpop.permute.xlu0 %919
      %921 = vrot.lane.b32.xlu0 %v808, 112
      %v922 = vpop.permute.xlu0 %921
      %923 = vrot.lane.b32.xlu0 %v810, 112
      %v924 = vpop.permute.xlu0 %923
      %v925 = vsel %vm582, %v918, %v920
      %v926 = vsel %vm582, %v922, %v924
      %929 = vmatprep.subr.mxu0 0.0
      %930 = vmatpush1.msra.mxu0 %v916
      %931 = vmatprep.subr.mxu0 0.0
      %932 = vmatpush1.msra.mxu0 %v915
      %933 = vmatprep.subr.mxu0 0.0
      %934 = vmatpush1.msra.mxu0 %v914
      %935 = vmatprep.subr.mxu0 0.0
      %936 = vmatpush1.msra.mxu0 %v913
      %937 = vmatprep.subr.mxu0 0.0
      %938 = vmatpush1.msra.mxu0 %v912
      %939 = vmatprep.subr.mxu0 0.0
      %940 = vmatpush1.msra.mxu0 %v911
      %941 = vmatprep.subr.mxu0 0.0
      %942 = vmatpush1.msra.mxu0 %v910
      %943 = vmatprep.subr.mxu0 0.0
      %944 = vmatpush1.msra.mxu0 %v909
      %945 = vmatprep.subr.mxu0 0.0
      %946 = vmatpush1.msra.mxu0 %v908
      %947 = vmatprep.subr.mxu0 0.0
      %948 = vmatpush1.msra.mxu0 %v907
      %949 = vmatprep.subr.mxu0 0.0
      %950 = vmatpush1.msra.mxu0 %v906
      %951 = vmatprep.subr.mxu0 0.0
      %952 = vmatpush1.msra.mxu0 %v905
      %953 = vmatprep.subr.mxu0 0.0
      %954 = vmatpush1.msra.mxu0 %v904
      %955 = vmatprep.subr.mxu0 0.0
      %956 = vmatpush1.msra.mxu0 %v903
      %957 = vmatprep.subr.mxu0 0.0
      %958 = vmatpush1.msra.mxu0 %v902
      %959 = vmatprep.subr.mxu0 0.0
      %960 = vmatpush1.msra.mxu0 %v901
      %961 = vmatprep.subr.mxu0 0.0
      %962 = vmatpush2.msra.mxu0 0.0
      %963 = vmatprep.subr.mxu0 0.0
      %964 = vmatpush2.msra.mxu0 0.0
      %965 = vmatprep.subr.mxu0 0.0
      %966 = vmatpush2.msra.mxu0 0.0
      %967 = vmatprep.subr.mxu0 0.0
      %968 = vmatpush2.msra.mxu0 0.0
      %969 = vmatprep.subr.mxu0 0.0
      %970 = vmatpush2.msra.mxu0 0.0
      %971 = vmatprep.subr.mxu0 0.0
      %972 = vmatpush2.msra.mxu0 0.0
      %973 = vmatprep.subr.mxu0 0.0
      %974 = vmatpush2.msra.mxu0 0.0
      %975 = vmatprep.subr.mxu0 0.0
      %976 = vmatpush2.msra.mxu0 0.0
      %977 = vmatprep.subr.mxu0 0.0
      %978 = vmatpush2.msra.mxu0 0.0
      %979 = vmatprep.subr.mxu0 0.0
      %980 = vmatpush2.msra.mxu0 0.0
      %981 = vmatprep.subr.mxu0 0.0
      %982 = vmatpush2.msra.mxu0 0.0
      %983 = vmatprep.subr.mxu0 0.0
      %984 = vmatpush2.msra.mxu0 0.0
      %985 = vmatprep.subr.mxu0 0.0
      %986 = vmatpush2.msra.mxu0 0.0
      %987 = vmatprep.subr.mxu0 0.0
      %988 = vmatpush2.msra.mxu0 0.0
      %989 = vmatprep.subr.mxu0 0.0
      %990 = vmatpush2.msra.mxu0 0.0
      %991 = vmatprep.subr.mxu0 0.0
      %992 = vmatpush2.msra.mxu0 0.0
      %993 = vmatprep.mubr.f32.mxu0 0.0
      %994 = vmatmul.mubr.f32.gmra.mxu0 %v925
      %v995 = vpop.f32.mrf.mxu0
      %v996 = vadd.f32 0.0, %v995
      %v997 = vpop.f32.mrf.mxu0
      %998 = vmatprep.mubr.f32.mxu0 0.0
      %999 = vmatmul.mubr.f32.gmra.mxu0 %v926
      %v1000 = vpop.f32.mrf.mxu0
      %v1001 = vadd.f32 0.0, %v1000
      %v1002 = vpop.f32.mrf.mxu0
      %1003 = vdwg.mxu0
      %v1004 = vadd.f32 %v898, %v996
      %v1005 = vadd.f32 %v899, %v1001
      %v1006 = vld [vmem:[#allocation2] sm:$0xfc]
      %v1007 = vld [vmem:[#allocation2 + $0x20] sm:$0x3]
      %s1008 = scalar_lea.vmem %s1, 768
      %v1009 = vld [vmem:[%s1008] sm:$0xff]
      %v1010 = vld [vmem:[%s1008 + $0x8] sm:$0xff]
      %v1011 = vld [vmem:[%s1008 + $0x10] sm:$0xff]
      %v1012 = vld [vmem:[%s1008 + $0x18] sm:$0xff]
      %v1013 = vld [vmem:[%s1008 + $0x20] sm:$0xff]
      %v1014 = vld [vmem:[%s1008 + $0x28] sm:$0xff]
      %v1015 = vld [vmem:[%s1008 + $0x30] sm:$0xff]
      %v1016 = vld [vmem:[%s1008 + $0x38] sm:$0xff]
      %v1017 = vld [vmem:[%s1008 + $0x40] sm:$0xff]
      %v1018 = vld [vmem:[%s1008 + $0x48] sm:$0xff]
      %v1019 = vld [vmem:[%s1008 + $0x50] sm:$0xff]
      %v1020 = vld [vmem:[%s1008 + $0x58] sm:$0xff]
      %v1021 = vld [vmem:[%s1008 + $0x60] sm:$0xff]
      %v1022 = vld [vmem:[%s1008 + $0x68] sm:$0xff]
      %v1023 = vld [vmem:[%s1008 + $0x70] sm:$0xff]
      %v1024 = vld [vmem:[%s1008 + $0x78] sm:$0xff]
      %vm1027 = vcmask 1045504
      %v1028 = vrot.slane %v1006, 2
      %v1029 = vrot.slane %v665, 2
      %v1030 = vsel %vm1027, %v1028, %v1029
      %v1031 = vrot.slane %v1007, 2
      %v1032 = vsel %vm1027, %v1029, %v1031
      %1035 = vmatprep.subr.mxu0 0.0
      %1036 = vmatpush1.msra.mxu0 %v1024
      %1037 = vmatprep.subr.mxu0 0.0
      %1038 = vmatpush1.msra.mxu0 %v1023
      %1039 = vmatprep.subr.mxu0 0.0
      %1040 = vmatpush1.msra.mxu0 %v1022
      %1041 = vmatprep.subr.mxu0 0.0
      %1042 = vmatpush1.msra.mxu0 %v1021
      %1043 = vmatprep.subr.mxu0 0.0
      %1044 = vmatpush1.msra.mxu0 %v1020
      %1045 = vmatprep.subr.mxu0 0.0
      %1046 = vmatpush1.msra.mxu0 %v1019
      %1047 = vmatprep.subr.mxu0 0.0
      %1048 = vmatpush1.msra.mxu0 %v1018
      %1049 = vmatprep.subr.mxu0 0.0
      %1050 = vmatpush1.msra.mxu0 %v1017
      %1051 = vmatprep.subr.mxu0 0.0
      %1052 = vmatpush1.msra.mxu0 %v1016
      %1053 = vmatprep.subr.mxu0 0.0
      %1054 = vmatpush1.msra.mxu0 %v1015
      %1055 = vmatprep.subr.mxu0 0.0
      %1056 = vmatpush1.msra.mxu0 %v1014
      %1057 = vmatprep.subr.mxu0 0.0
      %1058 = vmatpush1.msra.mxu0 %v1013
      %1059 = vmatprep.subr.mxu0 0.0
      %1060 = vmatpush1.msra.mxu0 %v1012
      %1061 = vmatprep.subr.mxu0 0.0
      %1062 = vmatpush1.msra.mxu0 %v1011
      %1063 = vmatprep.subr.mxu0 0.0
      %1064 = vmatpush1.msra.mxu0 %v1010
      %1065 = vmatprep.subr.mxu0 0.0
      %1066 = vmatpush1.msra.mxu0 %v1009
      %1067 = vmatprep.subr.mxu0 0.0
      %1068 = vmatpush2.msra.mxu0 0.0
      %1069 = vmatprep.subr.mxu0 0.0
      %1070 = vmatpush2.msra.mxu0 0.0
      %1071 = vmatprep.subr.mxu0 0.0
      %1072 = vmatpush2.msra.mxu0 0.0
      %1073 = vmatprep.subr.mxu0 0.0
      %1074 = vmatpush2.msra.mxu0 0.0
      %1075 = vmatprep.subr.mxu0 0.0
      %1076 = vmatpush2.msra.mxu0 0.0
      %1077 = vmatprep.subr.mxu0 0.0
      %1078 = vmatpush2.msra.mxu0 0.0
      %1079 = vmatprep.subr.mxu0 0.0
      %1080 = vmatpush2.msra.mxu0 0.0
      %1081 = vmatprep.subr.mxu0 0.0
      %1082 = vmatpush2.msra.mxu0 0.0
      %1083 = vmatprep.subr.mxu0 0.0
      %1084 = vmatpush2.msra.mxu0 0.0
      %1085 = vmatprep.subr.mxu0 0.0
      %1086 = vmatpush2.msra.mxu0 0.0
      %1087 = vmatprep.subr.mxu0 0.0
      %1088 = vmatpush2.msra.mxu0 0.0
      %1089 = vmatprep.subr.mxu0 0.0
      %1090 = vmatpush2.msra.mxu0 0.0
      %1091 = vmatprep.subr.mxu0 0.0
      %1092 = vmatpush2.msra.mxu0 0.0
      %1093 = vmatprep.subr.mxu0 0.0
      %1094 = vmatpush2.msra.mxu0 0.0
      %1095 = vmatprep.subr.mxu0 0.0
      %1096 = vmatpush2.msra.mxu0 0.0
      %1097 = vmatprep.subr.mxu0 0.0
      %1098 = vmatpush2.msra.mxu0 0.0
      %1099 = vmatprep.mubr.f32.mxu0 0.0
      %1100 = vmatmul.mubr.f32.gmra.mxu0 %v1030
      %v1101 = vpop.f32.mrf.mxu0
      %v1102 = vadd.f32 0.0, %v1101
      %v1103 = vpop.f32.mrf.mxu0
      %1104 = vmatprep.mubr.f32.mxu0 0.0
      %1105 = vmatmul.mubr.f32.gmra.mxu0 %v1032
      %v1106 = vpop.f32.mrf.mxu0
      %v1107 = vadd.f32 0.0, %v1106
      %v1108 = vpop.f32.mrf.mxu0
      %1109 = vdwg.mxu0
      %v1110 = vadd.f32 %v1004, %v1102
      %v1111 = vadd.f32 %v1005, %v1107
      %v1112 = vld [vmem:[#allocation2] sm:$0xfc]
      %v1113 = vld [vmem:[#allocation2 + $0x8] sm:$0xfc]
      %v1114 = vld [vmem:[#allocation2 + $0x20] sm:$0x3]
      %v1115 = vld [vmem:[#allocation2 + $0x28] sm:$0x3]
      %s1116 = scalar_lea.vmem %s1, 896
      %v1117 = vld [vmem:[%s1116] sm:$0xff]
      %v1118 = vld [vmem:[%s1116 + $0x8] sm:$0xff]
      %v1119 = vld [vmem:[%s1116 + $0x10] sm:$0xff]
      %v1120 = vld [vmem:[%s1116 + $0x18] sm:$0xff]
      %v1121 = vld [vmem:[%s1116 + $0x20] sm:$0xff]
      %v1122 = vld [vmem:[%s1116 + $0x28] sm:$0xff]
      %v1123 = vld [vmem:[%s1116 + $0x30] sm:$0xff]
      %v1124 = vld [vmem:[%s1116 + $0x38] sm:$0xff]
      %v1125 = vld [vmem:[%s1116 + $0x40] sm:$0xff]
      %v1126 = vld [vmem:[%s1116 + $0x48] sm:$0xff]
      %v1127 = vld [vmem:[%s1116 + $0x50] sm:$0xff]
      %v1128 = vld [vmem:[%s1116 + $0x58] sm:$0xff]
      %v1129 = vld [vmem:[%s1116 + $0x60] sm:$0xff]
      %v1130 = vld [vmem:[%s1116 + $0x68] sm:$0xff]
      %v1131 = vld [vmem:[%s1116 + $0x70] sm:$0xff]
      %v1132 = vld [vmem:[%s1116 + $0x78] sm:$0xff]
      %v1137 = vrot.slane %v1112, 2
      %v1138 = vrot.slane %v774, 2
      %v1139 = vsel %vm1027, %v1137, %v1138
      %v1140 = vrot.slane %v1113, 2
      %v1141 = vrot.slane %v775, 2
      %v1142 = vsel %vm1027, %v1140, %v1141
      %v1143 = vrot.slane %v1114, 2
      %v1144 = vsel %vm1027, %v1138, %v1143
      %v1145 = vrot.slane %v1115, 2
      %v1146 = vsel %vm1027, %v1141, %v1145
      %1147 = vrot.lane.b32.xlu0 %v1139, 120
      %v1148 = vpop.permute.xlu0 %1147
      %1149 = vrot.lane.b32.xlu0 %v1142, 120
      %v1150 = vpop.permute.xlu0 %1149
      %1151 = vrot.lane.b32.xlu0 %v1144, 120
      %v1152 = vpop.permute.xlu0 %1151
      %1153 = vrot.lane.b32.xlu0 %v1146, 120
      %v1154 = vpop.permute.xlu0 %1153
      %v1155 = vsel %vm402, %v1148, %v1150
      %v1156 = vsel %vm402, %v1152, %v1154
      %1159 = vmatprep.subr.mxu0 0.0
      %1160 = vmatpush1.msra.mxu0 %v1132
      %1161 = vmatprep.subr.mxu0 0.0
      %1162 = vmatpush1.msra.mxu0 %v1131
      %1163 = vmatprep.subr.mxu0 0.0
      %1164 = vmatpush1.msra.mxu0 %v1130
      %1165 = vmatprep.subr.mxu0 0.0
      %1166 = vmatpush1.msra.mxu0 %v1129
      %1167 = vmatprep.subr.mxu0 0.0
      %1168 = vmatpush1.msra.mxu0 %v1128
      %1169 = vmatprep.subr.mxu0 0.0
      %1170 = vmatpush1.msra.mxu0 %v1127
      %1171 = vmatprep.subr.mxu0 0.0
      %1172 = vmatpush1.msra.mxu0 %v1126
      %1173 = vmatprep.subr.mxu0 0.0
      %1174 = vmatpush1.msra.mxu0 %v1125
      %1175 = vmatprep.subr.mxu0 0.0
      %1176 = vmatpush1.msra.mxu0 %v1124
      %1177 = vmatprep.subr.mxu0 0.0
      %1178 = vmatpush1.msra.mxu0 %v1123
      %1179 = vmatprep.subr.mxu0 0.0
      %1180 = vmatpush1.msra.mxu0 %v1122
      %1181 = vmatprep.subr.mxu0 0.0
      %1182 = vmatpush1.msra.mxu0 %v1121
      %1183 = vmatprep.subr.mxu0 0.0
      %1184 = vmatpush1.msra.mxu0 %v1120
      %1185 = vmatprep.subr.mxu0 0.0
      %1186 = vmatpush1.msra.mxu0 %v1119
      %1187 = vmatprep.subr.mxu0 0.0
      %1188 = vmatpush1.msra.mxu0 %v1118
      %1189 = vmatprep.subr.mxu0 0.0
      %1190 = vmatpush1.msra.mxu0 %v1117
      %1191 = vmatprep.subr.mxu0 0.0
      %1192 = vmatpush2.msra.mxu0 0.0
      %1193 = vmatprep.subr.mxu0 0.0
      %1194 = vmatpush2.msra.mxu0 0.0
      %1195 = vmatprep.subr.mxu0 0.0
      %1196 = vmatpush2.msra.mxu0 0.0
      %1197 = vmatprep.subr.mxu0 0.0
      %1198 = vmatpush2.msra.mxu0 0.0
      %1199 = vmatprep.subr.mxu0 0.0
      %1200 = vmatpush2.msra.mxu0 0.0
      %1201 = vmatprep.subr.mxu0 0.0
      %1202 = vmatpush2.msra.mxu0 0.0
      %1203 = vmatprep.subr.mxu0 0.0
      %1204 = vmatpush2.msra.mxu0 0.0
      %1205 = vmatprep.subr.mxu0 0.0
      %1206 = vmatpush2.msra.mxu0 0.0
      %1207 = vmatprep.subr.mxu0 0.0
      %1208 = vmatpush2.msra.mxu0 0.0
      %1209 = vmatprep.subr.mxu0 0.0
      %1210 = vmatpush2.msra.mxu0 0.0
      %1211 = vmatprep.subr.mxu0 0.0
      %1212 = vmatpush2.msra.mxu0 0.0
      %1213 = vmatprep.subr.mxu0 0.0
      %1214 = vmatpush2.msra.mxu0 0.0
      %1215 = vmatprep.subr.mxu0 0.0
      %1216 = vmatpush2.msra.mxu0 0.0
      %1217 = vmatprep.subr.mxu0 0.0
      %1218 = vmatpush2.msra.mxu0 0.0
      %1219 = vmatprep.subr.mxu0 0.0
      %1220 = vmatpush2.msra.mxu0 0.0
      %1221 = vmatprep.subr.mxu0 0.0
      %1222 = vmatpush2.msra.mxu0 0.0
      %1223 = vmatprep.mubr.f32.mxu0 0.0
      %1224 = vmatmul.mubr.f32.gmra.mxu0 %v1155
      %v1225 = vpop.f32.mrf.mxu0
      %v1226 = vadd.f32 0.0, %v1225
      %v1227 = vpop.f32.mrf.mxu0
      %1228 = vmatprep.mubr.f32.mxu0 0.0
      %1229 = vmatmul.mubr.f32.gmra.mxu0 %v1156
      %v1230 = vpop.f32.mrf.mxu0
      %v1231 = vadd.f32 0.0, %v1230
      %v1232 = vpop.f32.mrf.mxu0
      %1233 = vdwg.mxu0
      %v1234 = vadd.f32 %v1110, %v1226
      %v1235 = vadd.f32 %v1111, %v1231
      %s1236 = scalar_lea.vmem %s1, 1024
      %v1237 = vld [vmem:[%s1236] sm:$0xff]
      %v1238 = vld [vmem:[%s1236 + $0x8] sm:$0xff]
      %v1239 = vld [vmem:[%s1236 + $0x10] sm:$0xff]
      %v1240 = vld [vmem:[%s1236 + $0x18] sm:$0xff]
      %v1241 = vld [vmem:[%s1236 + $0x20] sm:$0xff]
      %v1242 = vld [vmem:[%s1236 + $0x28] sm:$0xff]
      %v1243 = vld [vmem:[%s1236 + $0x30] sm:$0xff]
      %v1244 = vld [vmem:[%s1236 + $0x38] sm:$0xff]
      %v1245 = vld [vmem:[%s1236 + $0x40] sm:$0xff]
      %v1246 = vld [vmem:[%s1236 + $0x48] sm:$0xff]
      %v1247 = vld [vmem:[%s1236 + $0x50] sm:$0xff]
      %v1248 = vld [vmem:[%s1236 + $0x58] sm:$0xff]
      %v1249 = vld [vmem:[%s1236 + $0x60] sm:$0xff]
      %v1250 = vld [vmem:[%s1236 + $0x68] sm:$0xff]
      %v1251 = vld [vmem:[%s1236 + $0x70] sm:$0xff]
      %v1252 = vld [vmem:[%s1236 + $0x78] sm:$0xff]
      %1253 = vrot.lane.b32.xlu0 %v1139, 112
      %v1254 = vpop.permute.xlu0 %1253
      %1255 = vrot.lane.b32.xlu0 %v1142, 112
      %v1256 = vpop.permute.xlu0 %1255
      %1257 = vrot.lane.b32.xlu0 %v1144, 112
      %v1258 = vpop.permute.xlu0 %1257
      %1259 = vrot.lane.b32.xlu0 %v1146, 112
      %v1260 = vpop.permute.xlu0 %1259
      %v1261 = vsel %vm582, %v1254, %v1256
      %v1262 = vsel %vm582, %v1258, %v1260
      %1265 = vmatprep.subr.mxu0 0.0
      %1266 = vmatpush1.msra.mxu0 %v1252
      %1267 = vmatprep.subr.mxu0 0.0
      %1268 = vmatpush1.msra.mxu0 %v1251
      %1269 = vmatprep.subr.mxu0 0.0
      %1270 = vmatpush1.msra.mxu0 %v1250
      %1271 = vmatprep.subr.mxu0 0.0
      %1272 = vmatpush1.msra.mxu0 %v1249
      %1273 = vmatprep.subr.mxu0 0.0
      %1274 = vmatpush1.msra.mxu0 %v1248
      %1275 = vmatprep.subr.mxu0 0.0
      %1276 = vmatpush1.msra.mxu0 %v1247
      %1277 = vmatprep.subr.mxu0 0.0
      %1278 = vmatpush1.msra.mxu0 %v1246
      %1279 = vmatprep.subr.mxu0 0.0
      %1280 = vmatpush1.msra.mxu0 %v1245
      %1281 = vmatprep.subr.mxu0 0.0
      %1282 = vmatpush1.msra.mxu0 %v1244
      %1283 = vmatprep.subr.mxu0 0.0
      %1284 = vmatpush1.msra.mxu0 %v1243
      %1285 = vmatprep.subr.mxu0 0.0
      %1286 = vmatpush1.msra.mxu0 %v1242
      %1287 = vmatprep.subr.mxu0 0.0
      %1288 = vmatpush1.msra.mxu0 %v1241
      %1289 = vmatprep.subr.mxu0 0.0
      %1290 = vmatpush1.msra.mxu0 %v1240
      %1291 = vmatprep.subr.mxu0 0.0
      %1292 = vmatpush1.msra.mxu0 %v1239
      %1293 = vmatprep.subr.mxu0 0.0
      %1294 = vmatpush1.msra.mxu0 %v1238
      %1295 = vmatprep.subr.mxu0 0.0
      %1296 = vmatpush1.msra.mxu0 %v1237
      %1297 = vmatprep.subr.mxu0 0.0
      %1298 = vmatpush2.msra.mxu0 0.0
      %1299 = vmatprep.subr.mxu0 0.0
      %1300 = vmatpush2.msra.mxu0 0.0
      %1301 = vmatprep.subr.mxu0 0.0
      %1302 = vmatpush2.msra.mxu0 0.0
      %1303 = vmatprep.subr.mxu0 0.0
      %1304 = vmatpush2.msra.mxu0 0.0
      %1305 = vmatprep.subr.mxu0 0.0
      %1306 = vmatpush2.msra.mxu0 0.0
      %1307 = vmatprep.subr.mxu0 0.0
      %1308 = vmatpush2.msra.mxu0 0.0
      %1309 = vmatprep.subr.mxu0 0.0
      %1310 = vmatpush2.msra.mxu0 0.0
      %1311 = vmatprep.subr.mxu0 0.0
      %1312 = vmatpush2.msra.mxu0 0.0
      %1313 = vmatprep.subr.mxu0 0.0
      %1314 = vmatpush2.msra.mxu0 0.0
      %1315 = vmatprep.subr.mxu0 0.0
      %1316 = vmatpush2.msra.mxu0 0.0
      %1317 = vmatprep.subr.mxu0 0.0
      %1318 = vmatpush2.msra.mxu0 0.0
      %1319 = vmatprep.subr.mxu0 0.0
      %1320 = vmatpush2.msra.mxu0 0.0
      %1321 = vmatprep.subr.mxu0 0.0
      %1322 = vmatpush2.msra.mxu0 0.0
      %1323 = vmatprep.subr.mxu0 0.0
      %1324 = vmatpush2.msra.mxu0 0.0
      %1325 = vmatprep.subr.mxu0 0.0
      %1326 = vmatpush2.msra.mxu0 0.0
      %1327 = vmatprep.subr.mxu0 0.0
      %1328 = vmatpush2.msra.mxu0 0.0
      %1329 = vmatprep.mubr.f32.mxu0 0.0
      %1330 = vmatmul.mubr.f32.gmra.mxu0 %v1261
      %v1331 = vpop.f32.mrf.mxu0
      %v1332 = vadd.f32 0.0, %v1331
      %v1333 = vpop.f32.mrf.mxu0
      %1334 = vmatprep.mubr.f32.mxu0 0.0
      %1335 = vmatmul.mubr.f32.gmra.mxu0 %v1262
      %v1336 = vpop.f32.mrf.mxu0
      %v1337 = vadd.f32 0.0, %v1336
      %v1338 = vpop.f32.mrf.mxu0
      %1339 = vdwg.mxu0
      %v1340 = vadd.f32 %v1234, %v1332
      %v1341 = vadd.f32 %v1235, %v1337
      %v1342 = vld [vmem:[%s2] sm:$0x1]
      %v1344 = vlaneseq
      %v1345 = vshrl.u32 %v1344, 7
      %v1346 = vsub.s32 0, %v1345
      %v1347 = vrot.slane %v1342, %v1346
      %v1349 = vadd.f32 %v1340, %v1347
      %v1350 = vadd.f32 %v1341, %v1347
      %1351 = vst [vmem:[%s289] sm:$0xff] %v1349
      %1352 = vst [vmem:[%s289 + $0x8] sm:$0xff] %v1350
      %v1353 = vadd.f32 %v1349, %v1350
      %v1354 = vrot.slane %v1353, 4
      %v1355 = vadd.f32 %v1353, %v1354
      %v1356 = vrot.slane %v1355, 2
      %v1357 = vadd.f32 %v1355, %v1356
      %v1358 = vrot.slane %v1357, 1
      %v1359 = vadd.f32 %v1357, %v1358
      %1360 = vst [vmem:[%s292] sm:$0x1] %v1359
      %v1361 = vmul.f32 %v1349, %v1349
      %v1362 = vmul.f32 %v1350, %v1350
      %v1363 = vadd.f32 %v1361, %v1362
      %v1364 = vrot.slane %v1363, 4
      %v1365 = vadd.f32 %v1363, %v1364
      %v1366 = vrot.slane %v1365, 2
      %v1367 = vadd.f32 %v1365, %v1366
      %v1368 = vrot.slane %v1367, 1
      %v1369 = vadd.f32 %v1367, %v1368
      %1370 = vst [vmem:[%s295] sm:$0x1] %v1369
      %p1371 = scmp.lt.s32.totalorder %s19, 1
      %s1372 = scalar_select %p1371, %s19, 1
      %s1373 = smul.addr %s1372, 2
      %s1374 = smul.addr %s1373, 8
      %s1375 = scalar_lea.vmem %s5, %s1374
      %p1376 = scmp.lt.s32.totalorder %s19, 1
      %s1377 = scalar_select %p1376, %s19, 1
      %s1378 = scalar_lea.vmem %s6, %s1377
      %p1379 = scmp.lt.s32.totalorder %s19, 1
      %s1380 = scalar_select %p1379, %s19, 1
      %s1381 = scalar_lea.vmem %s7, %s1380
      // Predicated region
      $region41: #{decoder_block.4} parent=39 // pred_check
        %p1382 = pneg %p147
      $region42: #{decoder_block.4} parent=39 // pred_check_branch
        %1384 = sbr.rel (%p1382) target = $region44
      $region43: #{decoder_block.4} parent=39 // pred_region
        _
      $region44: #{decoder_block.4} parent=39 // pred_fallthru
        _
      // Predicated region
      $region45: #{decoder_block.4} parent=39 // pred_check
        %p1385 = pneg %p173
      $region46: #{decoder_block.4} parent=39 // pred_check_branch
        %1387 = sbr.rel (%p1385) target = $region48
      $region47: #{decoder_block.4} parent=39 // pred_region
        _
      $region48: #{decoder_block.4} parent=39 // pred_fallthru
        _
      // Predicated region
      $region49: #{decoder_block.4} parent=39 // pred_check
        %p1388 = pneg %p199
      $region50: #{decoder_block.4} parent=39 // pred_check_branch
        %1390 = sbr.rel (%p1388) target = $region52
      $region51: #{decoder_block.4} parent=39 // pred_region
        _
      $region52: #{decoder_block.4} parent=39 // pred_fallthru
        _
    $region40: #{decoder_block.4} parent=5 // pred_fallthru
      _
    %p1391 = scmp.le.s32.totalorder 2, %s14
    // Predicated region
    $region53: #{decoder_block.4} parent=5 // pred_check
      %p1392 = pneg %p1391
    $region54: #{decoder_block.4} parent=5 // pred_check_branch
      %1394 = sbr.rel (%p1392) target = $region56
    $region55: #{decoder_block.4} parent=5 // pred_region
      %s1395 = ssub.s32 %s14, 2
      // Predicated region
      $region57: #{decoder_block.4} parent=55 // pred_check
        %p1396 = pneg %p153
      $region58: #{decoder_block.4} parent=55 // pred_check_branch
        %1398 = sbr.rel (%p1396) target = $region60
      $region59: #{decoder_block.4} parent=55 // pred_region
        %p1399 = scmp.lt.s32.totalorder %s20, 1
        %s1400 = scalar_select %p1399, %s20, 1
        %s1401 = smul.addr %s1400, 2
        %s1402 = smul.addr %s1401, 8
        %s1403 = scalar_lea.vmem %s5, %s1402
      $region60: #{decoder_block.4} parent=55 // pred_fallthru
        _
      // Predicated region
      $region61: #{decoder_block.4} parent=55 // pred_check
        %p1404 = pneg %p179
      $region62: #{decoder_block.4} parent=55 // pred_check_branch
        %1406 = sbr.rel (%p1404) target = $region64
      $region63: #{decoder_block.4} parent=55 // pred_region
        %p1407 = scmp.lt.s32.totalorder %s20, 1
        %s1408 = scalar_select %p1407, %s20, 1
        %s1409 = scalar_lea.vmem %s6, %s1408
      $region64: #{decoder_block.4} parent=55 // pred_fallthru
        _
      // Predicated region
      $region65: #{decoder_block.4} parent=55 // pred_check
        %p1410 = pneg %p205
      $region66: #{decoder_block.4} parent=55 // pred_check_branch
        %1412 = sbr.rel (%p1410) target = $region68
      $region67: #{decoder_block.4} parent=55 // pred_region
        %p1413 = scmp.lt.s32.totalorder %s20, 1
        %s1414 = scalar_select %p1413, %s20, 1
        %s1415 = scalar_lea.vmem %s7, %s1414
      $region68: #{decoder_block.4} parent=55 // pred_fallthru
        _
    $region56: #{decoder_block.4} parent=5 // pred_fallthru
      _
  $region6: #{decoder_block.4} parent=0 // loop_footer
    %s18 = sadd.s32 1, %s14
  $region7: #{decoder_block.4} parent=0 // loop_footer_branch
    %13 = sbr.rel target = $region3
  $region8: #{decoder_block.4} parent=0 // loop_exit
    _

// kernel: decoder_block.5
$region0: #{decoder_block.5}
  #allocation0 [shape = 'u32[]', space=smem, size = 0x4, offset = 0x4, fixed_abs, tag = 'smem constant byte address 0x4 - core index']
  #allocation1 [shape = 'u32[144,128]{1,0:T(1,128)}', space=vmem, size = 0x12000, scoped, tag = 'internal scratch']
  %s0 = inlined_call_operand.vmem [shape: f32[2,16,128], index: 0, kind: input, shape index: {}]
  %s1 = inlined_call_operand.vmem [shape: f32[1,128], index: 1, kind: input, shape index: {}]
  %s2 = inlined_call_operand.vmem [shape: f32[1,128], index: 2, kind: input, shape index: {}]
  %s3 = inlined_call_operand.vmem [shape: f32[2,16,128], index: 3, kind: output, shape index: {}]
  %s4 = sld [smem:[#allocation0]]
  $region45: #{decoder_block.5} parent=0
    _
  %s6 = ssub.s32 1, %s4
  %s7 = scalar_select 0, %s6, %s4
  loop: start=0, step=1, limit=4
  $region2: #{decoder_block.5} parent=0 // loop_pre_header
    _
  $region3: #{decoder_block.5} parent=0 // loop_header
    %s9 = sphi 0, %s13
    %p10 = scmp.ge.s32.totalorder %s9, 4
    %s19 = sphi 0, %s21
    %s22 = sphi 0, %s19
    %s23 = sphi 0, %s22
    %s39 = sphi 0, %s23
    %s43 = sphi 0, %s43
    %s45 = sphi 0, %s43
    %s46 = sphi 0, %s45
    %s60 = sphi 0, %s46
    %s64 = sphi 0, %s64
    %s66 = sphi 0, %s64
    %s67 = sphi 0, %s66
    %s81 = sphi 0, %s67
    %s87 = sphi 0, %s89
    %s90 = sphi 0, %s87
    %s91 = sphi 0, %s90
    %s107 = sphi 0, %s91
  $region4: #{decoder_block.5} parent=0 // loop_header_branch
    %12 = sbr.rel (%p10) target = $region8
  $region5: #{decoder_block.5} parent=0 // loop_body
    %s14 = ssub.s32 %s9, 1
    %s15 = ssub.s32 %s9, 2
    %s16 = sadd.s32 %s9, 1
    %s17 = ssub.s32 %s9, %s16
    %p18 = scmp.eq.s32.totalorder %s17, 0
    %s20 = sadd.s32 %s19, 1
    %s21 = scalar_select %p18, %s19, %s20
    %p24 = pneg %p18
    %p25 = scmp.eq.s32.totalorder %s9, 1
    %p26 = por %p24, %p25
    %p27 = scmp.ne.s32.totalorder %s19, %s22
    %p28 = scmp.eq.s32.totalorder %s9, 0
    %p29 = por %p27, %p28
    %p30 = scmp.ne.s32.totalorder %s19, %s22
    %p31 = scmp.eq.s32.totalorder %s14, 1
    %p32 = por %p30, %p31
    %p33 = scmp.ne.s32.totalorder %s22, %s23
    %p34 = scmp.eq.s32.totalorder %s14, 0
    %p35 = por %p33, %p34
    %p36 = scmp.ne.s32.totalorder %s22, %s23
    %p37 = scmp.eq.s32.totalorder %s15, 1
    %p38 = por %p36, %p37
    %p40 = scmp.ne.s32.totalorder %s23, %s39
    %p41 = scmp.eq.s32.totalorder %s15, 0
    %p42 = por %p40, %p41
    %s44 = sadd.s32 %s43, 1
    %p47 = scmp.eq.s32.totalorder %s9, 1
    %p48 = scmp.ne.s32.totalorder %s43, %s45
    %p49 = scmp.eq.s32.totalorder %s9, 0
    %p50 = por %p48, %p49
    %p51 = scmp.ne.s32.totalorder %s43, %s45
    %p52 = scmp.eq.s32.totalorder %s14, 1
    %p53 = por %p51, %p52
    %p54 = scmp.ne.s32.totalorder %s45, %s46
    %p55 = scmp.eq.s32.totalorder %s14, 0
    %p56 = por %p54, %p55
    %p57 = scmp.ne.s32.totalorder %s45, %s46
    %p58 = scmp.eq.s32.totalorder %s15, 1
    %p59 = por %p57, %p58
    %p61 = scmp.ne.s32.totalorder %s46, %s60
    %p62 = scmp.eq.s32.totalorder %s15, 0
    %p63 = por %p61, %p62
    %s65 = sadd.s32 %s64, 1
    %p68 = scmp.eq.s32.totalorder %s9, 1
    %p69 = scmp.ne.s32.totalorder %s64, %s66
    %p70 = scmp.eq.s32.totalorder %s9, 0
    %p71 = por %p69, %p70
    %p72 = scmp.ne.s32.totalorder %s64, %s66
    %p73 = scmp.eq.s32.totalorder %s14, 1
    %p74 = por %p72, %p73
    %p75 = scmp.ne.s32.totalorder %s66, %s67
    %p76 = scmp.eq.s32.totalorder %s14, 0
    %p77 = por %p75, %p76
    %p78 = scmp.ne.s32.totalorder %s66, %s67
    %p79 = scmp.eq.s32.totalorder %s15, 1
    %p80 = por %p78, %p79
    %p82 = scmp.ne.s32.totalorder %s67, %s81
    %p83 = scmp.eq.s32.totalorder %s15, 0
    %p84 = por %p82, %p83
    %s85 = ssub.s32 %s9, %s16
    %p86 = scmp.eq.s32.totalorder %s85, 0
    %s88 = sadd.s32 %s87, 1
    %s89 = scalar_select %p86, %s87, %s88
    %p92 = pneg %p86
    %p93 = scmp.eq.s32.totalorder %s9, 1
    %p94 = por %p92, %p93
    %p95 = scmp.ne.s32.totalorder %s87, %s90
    %p96 = scmp.eq.s32.totalorder %s9, 0
    %p97 = por %p95, %p96
    %p98 = scmp.ne.s32.totalorder %s87, %s90
    %p99 = scmp.eq.s32.totalorder %s14, 1
    %p100 = por %p98, %p99
    %p101 = scmp.ne.s32.totalorder %s90, %s91
    %p102 = scmp.eq.s32.totalorder %s14, 0
    %p103 = por %p101, %p102
    %p104 = scmp.ne.s32.totalorder %s90, %s91
    %p105 = scmp.eq.s32.totalorder %s15, 1
    %p106 = por %p104, %p105
    %p108 = scmp.ne.s32.totalorder %s91, %s107
    %p109 = scmp.eq.s32.totalorder %s15, 0
    %p110 = por %p108, %p109
    %p111 = scmp.le.s32.totalorder 1, %s9
    %p112 = scmp.lt.s32.totalorder %s9, 3
    %p113 = pnand %p111, %p112
    %p114 = pneg %p113
    // Predicated region
    $region9: #{decoder_block.5} parent=5 // pred_check
      _
    $region10: #{decoder_block.5} parent=5 // pred_check_branch
      %116 = sbr.rel (%p113) target = $region12
    $region11: #{decoder_block.5} parent=5 // pred_region
      %s117 = ssub.s32 %s9, 1
      // Predicated region
      $region13: #{decoder_block.5} parent=11 // pred_check
        %p118 = pneg %p56
      $region14: #{decoder_block.5} parent=11 // pred_check_branch
        %120 = sbr.rel (%p118) target = $region16
      $region15: #{decoder_block.5} parent=11 // pred_region
        _
      $region16: #{decoder_block.5} parent=11 // pred_fallthru
        _
      // Predicated region
      $region17: #{decoder_block.5} parent=11 // pred_check
        %p121 = pneg %p77
      $region18: #{decoder_block.5} parent=11 // pred_check_branch
        %123 = sbr.rel (%p121) target = $region20
      $region19: #{decoder_block.5} parent=11 // pred_region
        _
      $region20: #{decoder_block.5} parent=11 // pred_fallthru
        _
    $region12: #{decoder_block.5} parent=5 // pred_fallthru
      _
    %p124 = scmp.lt.s32.totalorder %s9, 2
    // Predicated region
    $region21: #{decoder_block.5} parent=5 // pred_check
      %p125 = pneg %p124
    $region22: #{decoder_block.5} parent=5 // pred_check_branch
      %127 = sbr.rel (%p125) target = $region24
    $region23: #{decoder_block.5} parent=5 // pred_region
      // Predicated region
      $region25: #{decoder_block.5} parent=23 // pred_check
        %p128 = pneg %p29
      $region26: #{decoder_block.5} parent=23 // pred_check_branch
        %130 = sbr.rel (%p128) target = $region28
      $region27: #{decoder_block.5} parent=23 // pred_region
        %p131 = scmp.lt.s32.totalorder %s9, 1
        %s132 = scalar_select %p131, %s9, 1
        %s133 = smul.addr %s132, 2
        %s134 = smul.addr %s133, 8
        %s135 = scalar_lea.vmem %s0, %s134
      $region28: #{decoder_block.5} parent=23 // pred_fallthru
        _
    $region24: #{decoder_block.5} parent=5 // pred_fallthru
      _
    %p136 = scmp.le.s32.totalorder 1, %s9
    %p137 = scmp.lt.s32.totalorder %s9, 3
    %p138 = pnand %p136, %p137
    %p139 = pneg %p138
    // Predicated region
    $region29: #{decoder_block.5} parent=5 // pred_check
      _
    $region30: #{decoder_block.5} parent=5 // pred_check_branch
      %141 = sbr.rel (%p138) target = $region32
    $region31: #{decoder_block.5} parent=5 // pred_region
      %s142 = ssub.s32 %s9, 1
      %p143 = scmp.lt.s32.totalorder %s14, 1
      %s144 = scalar_select %p143, %s14, 1
      %s145 = smul.addr %s144, 2
      %s146 = smul.addr %s145, 8
      %s147 = scalar_lea.vmem %s0, %s146
      %p148 = pneg %p35
      %p149 = pneg %p32
      %p150 = pneg %p56
      %p151 = pneg %p53
      %p152 = pneg %p77
      %p153 = pneg %p74
      %p154 = pneg %p103
      %p155 = pneg %p100
      %p156 = scmp.lt.s32.totalorder %s14, 1
      %s157 = scalar_select %p156, %s14, 1
      %s158 = smul.addr %s157, 2
      %s159 = smul.addr %s158, 8
      %s160 = scalar_lea.vmem %s3, %s159
      %p161 = scmp.lt.s32.totalorder %s14, 1
      %s162 = scalar_select %p161, %s14, 1
      %s163 = smul.addr %s162, 2
      %s164 = smul.addr %s163, 8
      %s165 = scalar_lea.vmem %s0, %s164
      %p166 = scmp.lt.s32.totalorder %s14, 1
      %s167 = scalar_select %p166, %s14, 1
      %s168 = smul.addr %s167, 2
      %s169 = smul.addr %s168, 8
      %s170 = scalar_lea.vmem %s3, %s169
      %v171 = vld [vmem:[%s165] sm:$0xff]
      %v172 = vld [vmem:[%s165 + $0x8] sm:$0xff]
      %v173 = vld [vmem:[%s1] sm:$0x1]
      %v175 = vlaneseq
      %v176 = vshrl.u32 %v175, 7
      %v177 = vsub.s32 0, %v176
      %v178 = vrot.slane %v173, %v177
      %v180 = vmul.f32 %v171, %v178
      %v181 = vmul.f32 %v172, %v178
      %v182 = vld [vmem:[%s2] sm:$0x1]
      %v184 = vlaneseq
      %v185 = vshrl.u32 %v184, 7
      %v186 = vsub.s32 0, %v185
      %v187 = vrot.slane %v182, %v186
      %v189 = vadd.f32 %v180, %v187
      %v190 = vadd.f32 %v181, %v187
      %v191 = vmax.f32 %v189, 0.0
      %v192 = vmax.f32 %v190, 0.0
      %193 = vst [vmem:[%s170] sm:$0xff] %v191
      %194 = vst [vmem:[%s170 + $0x8] sm:$0xff] %v192
      %p195 = scmp.lt.s32.totalorder %s14, 1
      %s196 = scalar_select %p195, %s14, 1
      %s197 = smul.addr %s196, 2
      %s198 = smul.addr %s197, 8
      %s199 = scalar_lea.vmem %s3, %s198
      // Predicated region
      $region33: #{decoder_block.5} parent=31 // pred_check
        %p200 = pneg %p100
      $region34: #{decoder_block.5} parent=31 // pred_check_branch
        %202 = sbr.rel (%p200) target = $region36
      $region35: #{decoder_block.5} parent=31 // pred_region
        _
      $region36: #{decoder_block.5} parent=31 // pred_fallthru
        _
    $region32: #{decoder_block.5} parent=5 // pred_fallthru
      _
    %p203 = scmp.le.s32.totalorder 2, %s9
    // Predicated region
    $region37: #{decoder_block.5} parent=5 // pred_check
      %p204 = pneg %p203
    $region38: #{decoder_block.5} parent=5 // pred_check_branch
      %206 = sbr.rel (%p204) target = $region40
    $region39: #{decoder_block.5} parent=5 // pred_region
      %s207 = ssub.s32 %s9, 2
      // Predicated region
      $region41: #{decoder_block.5} parent=39 // pred_check
        %p208 = pneg %p106
      $region42: #{decoder_block.5} parent=39 // pred_check_branch
        %210 = sbr.rel (%p208) target = $region44
      $region43: #{decoder_block.5} parent=39 // pred_region
        %p211 = scmp.lt.s32.totalorder %s15, 1
        %s212 = scalar_select %p211, %s15, 1
        %s213 = smul.addr %s212, 2
        %s214 = smul.addr %s213, 8
        %s215 = scalar_lea.vmem %s3, %s214
      $region44: #{decoder_block.5} parent=39 // pred_fallthru
        _
    $region40: #{decoder_block.5} parent=5 // pred_fallthru
      _
  $region6: #{decoder_block.5} parent=0 // loop_footer
    %s13 = sadd.s32 1, %s9
  $region7: #{decoder_block.5} parent=0 // loop_footer_branch
    %8 = sbr.rel target = $region3
  $region8: #{decoder_block.5} parent=0 // loop_exit
    _

</llo_original>
